<compile_context>
chip_gen: v7x
topology: tpu7x:2x2x1
jax: 0.10.0
libtpu: 0.0.40
codegen_flags: <defaults>
</compile_context>

<pallas_src>
import jax
import jax.numpy as jnp
from jax.experimental import pallas as pl
from jax.experimental.pallas import tpu as pltpu

F32 = jnp.float32
VMEM_SPEC = pl.BlockSpec(memory_space=pltpu.MemorySpace.VMEM)


# ----------------------------------------------------------------------------
# Fused Conv2d(k=5, s=1, p=2) + ReLU + MaxPool2d(2) per layer
# ----------------------------------------------------------------------------
def _conv_pool_kernel(cols_ref, w_ref, b_ref, o_ref):
    # cols_ref block: (1, 4*Q, K) im2col rows for the 4 pooling phases of one
    # image (phase-major, Q = Ho*Wo rows per phase).
    y = jnp.dot(cols_ref[0], w_ref[...], preferred_element_type=jnp.float32)
    y = jnp.maximum(y + b_ref[...], 0.0)                      # bias + ReLU
    q = o_ref.shape[1]
    # 2x2 max-pool == elementwise max over the 4 contiguous phase blocks.
    p = jnp.maximum(jnp.maximum(y[0:q], y[q:2 * q]),
                    jnp.maximum(y[2 * q:3 * q], y[3 * q:4 * q]))
    o_ref[0] = p.astype(o_ref.dtype)


def conv_relu_pool(x_nhwc, w_oihw, bias):
    """x_nhwc (B,H,W,Cin) -> (B,H//2,W//2,Cout), fused conv+ReLU+pool."""
    B, H, W, Cin = x_nhwc.shape
    Cout = w_oihw.shape[0]
    Ho, Wo = H // 2, W // 2
    K = Cin * 25

    # --- XLA glue: padded NHWC -> phase-ordered im2col (B, 4*Ho*Wo, K) ------
    xp = jnp.pad(x_nhwc.astype(F32), ((0, 0), (2, 2), (2, 2), (0, 0)))
    patches = [xp[:, kh:kh + H, kw:kw + W, :]
               for kh in range(5) for kw in range(5)]          # each (B,H,W,Cin)
    full = jnp.concatenate(patches, axis=-1)                   # (B,H,W,25*Cin)
    phases = [full[:, di::2, dj::2, :] for di in (0, 1) for dj in (0, 1)]
    cols = jnp.stack(phases, axis=1).reshape(B, 4 * Ho * Wo, K)

    # PyTorch weight (Cout,Cin,5,5) -> (K=25*Cin, Cout), column order matches
    # the (kh,kw)-major / channel-minor im2col concat above.
    wmat = jnp.transpose(w_oihw, (2, 3, 1, 0)).reshape(K, Cout).astype(F32)
    bmat = bias.reshape(1, Cout).astype(F32)

    out = pl.pallas_call(
        _conv_pool_kernel,
        out_shape=jax.ShapeDtypeStruct((B, Ho * Wo, Cout), F32),
        grid=(B,),
        in_specs=[
            pl.BlockSpec((1, 4 * Ho * Wo, K), lambda b: (b, 0, 0)),
            pl.BlockSpec((K, Cout), lambda b: (0, 0)),
            pl.BlockSpec((1, Cout), lambda b: (0, 0)),
        ],
        out_specs=pl.BlockSpec((1, Ho * Wo, Cout), lambda b: (b, 0, 0)),
        compiler_params=pltpu.CompilerParams(
            dimension_semantics=("parallel",)),   # 2 TCs on v7x; no-op v5e/v6e
    )(cols, wmat, bmat)
    return out.reshape(B, Ho, Wo, Cout)


# ----------------------------------------------------------------------------
# Fused head: cnn fc + LSTM + SelfAttention + GCN + fc1/fc2/fc3 (one kernel)
# ----------------------------------------------------------------------------
def _head_kernel(cnn_ref, x2_ref, adj_ref,
                 cfc_w_ref, cfc_b_ref,
                 wih_ref, whh_ref, lstm_b_ref,
                 wq_ref, wk_ref, wv_ref,
                 fq_w_ref, fq_b_ref, fk_w_ref, fk_b_ref,
                 fv_w_ref, fv_b_ref, fo_w_ref, fo_b_ref,
                 gcn_w_ref, gcn_b_ref,
                 f1_w_ref, f1_b_ref, f2_w_ref, f2_b_ref, f3_w_ref, f3_b_ref,
                 o_ref):
    B = adj_ref.shape[0]
    H = 32  # LSTM hidden size == d_k

    # ---- CNN fc: (B,576)@(576,32)+b ----------------------------------------
    x1f = (jnp.dot(cnn_ref[...], cfc_w_ref[...],
                   preferred_element_type=jnp.float32) + cfc_b_ref[...])

    # ---- LSTM(4,32): input projection hoisted, T statically unrolled -------
    xw = (jnp.dot(x2_ref[...], wih_ref[...],
                  preferred_element_type=jnp.float32) + lstm_b_ref[...])  # (T*B,128)
    whh = whh_ref[...]
    T = x2_ref.shape[0] // B
    h = jnp.zeros((B, H), jnp.float32)
    c = jnp.zeros((B, H), jnp.float32)
    for t in range(T):  # static unroll — short fixed trip count
        g = xw[t * B:(t + 1) * B] + jnp.dot(h, whh,
                                            preferred_element_type=jnp.float32)
        i_g = jax.nn.sigmoid(g[:, 0:H])
        f_g = jax.nn.sigmoid(g[:, H:2 * H])
        g_g = jnp.tanh(g[:, 2 * H:3 * H])
        o_g = jax.nn.sigmoid(g[:, 3 * H:4 * H])
        c = f_g * c + i_g * g_g
        h = o_g * jnp.tanh(c)
    x2f = h                                                    # (B, 32)

    # ---- SelfAttention(n_head=1, d_k=32, d_v=16) over the 2 tokens ---------
    def lin(x, w_ref_, b_ref_=None):
        y = jnp.dot(x, w_ref_[...], preferred_element_type=jnp.float32)
        return y if b_ref_ is None else y + b_ref_[...]

    q0 = lin(lin(x1f, wq_ref), fq_w_ref, fq_b_ref)
    q1 = lin(lin(x2f, wq_ref), fq_w_ref, fq_b_ref)
    k0 = lin(lin(x1f, wk_ref), fk_w_ref, fk_b_ref)
    k1 = lin(lin(x2f, wk_ref), fk_w_ref, fk_b_ref)
    v0 = lin(lin(x1f, wv_ref), fv_w_ref, fv_b_ref)             # (B,16)
    v1 = lin(lin(x2f, wv_ref), fv_w_ref, fv_b_ref)

    inv_scale = 1.0 / (32.0 ** 0.5)
    # 2x2 score matrix per batch row as VPU dot-products (no batched MXU bmm).
    s00 = jnp.sum(q0 * k0, axis=1, keepdims=True) * inv_scale  # (B,1)
    s01 = jnp.sum(q0 * k1, axis=1, keepdims=True) * inv_scale
    s10 = jnp.sum(q1 * k0, axis=1, keepdims=True) * inv_scale
    s11 = jnp.sum(q1 * k1, axis=1, keepdims=True) * inv_scale

    def softmax2(a, b):
        m = jnp.maximum(a, b)
        ea = jnp.exp(a - m)
        eb = jnp.exp(b - m)
        inv = 1.0 / (ea + eb)
        return ea * inv, eb * inv

    a00, a01 = softmax2(s00, s01)
    a10, a11 = softmax2(s10, s11)
    out0 = lin(a00 * v0 + a01 * v1, fo_w_ref, fo_b_ref)        # (B,32)
    out1 = lin(a10 * v0 + a11 * v1, fo_w_ref, fo_b_ref)        # (B,32)
    x = jnp.concatenate([out0, out1], axis=1)                  # flatten -> (B,64)

    # ---- GCN ----------------------------------------------------------------
    # TODO(synk): GraphConvolution source not provided; standard Kipf&Welling
    # formulation assumed: out = adj @ (x @ W) + b.
    support = jnp.dot(x, gcn_w_ref[...], preferred_element_type=jnp.float32)
    x = (jnp.dot(adj_ref[...], support, preferred_element_type=jnp.float32)
         + gcn_b_ref[...])                                     # (B,128)

    # ---- MLP head (ReLU after every fc, incl. fc3, per the reference) ------
    x = jnp.maximum(lin(x, f1_w_ref, f1_b_ref), 0.0)           # (B,64)
    x = jnp.maximum(lin(x, f2_w_ref, f2_b_ref), 0.0)           # (B,32)
    x = jnp.maximum(lin(x, f3_w_ref, f3_b_ref), 0.0)           # (B,1)
    o_ref[...] = x.astype(o_ref.dtype)


def head_forward(p, cnn_flat, x2_flat, adj):
    B = adj.shape[0]
    args = [
        cnn_flat, x2_flat, adj,
        p["cnn_fc_w"], p["cnn_fc_b"].reshape(1, -1),
        p["lstm_wih"], p["lstm_whh"],
        (p["lstm_bih"] + p["lstm_bhh"]).reshape(1, -1),
        p["wq"], p["wk"], p["wv"],
        p["fcq_w"], p["fcq_b"].reshape(1, -1),
        p["fck_w"], p["fck_b"].reshape(1, -1),
        p["fcv_w"], p["fcv_b"].reshape(1, -1),
        p["fco_w"], p["fco_b"].reshape(1, -1),
        p["gcn_w"], p["gcn_b"].reshape(1, -1),
        p["fc1_w"], p["fc1_b"].reshape(1, -1),
        p["fc2_w"], p["fc2_b"].reshape(1, -1),
        p["fc3_w"], p["fc3_b"].reshape(1, -1),
    ]
    args = [a.astype(F32) for a in args]
    return pl.pallas_call(
        _head_kernel,
        out_shape=jax.ShapeDtypeStruct((B, 1), F32),
        in_specs=[VMEM_SPEC] * len(args),
        out_specs=VMEM_SPEC,
    )(*args)


# ----------------------------------------------------------------------------
# Full forward
# ----------------------------------------------------------------------------
def forward(p, x1, x2, adj):
    B = x1.shape[0]

    # CNN branch, NHWC throughout (single layout transpose at the end).
    h = jnp.transpose(x1, (0, 2, 3, 1))                        # (B,24,24,1)
    h = conv_relu_pool(h, p["conv1_w"], p["conv1_b"])          # (B,12,12,16)
    h = conv_relu_pool(h, p["conv2_w"], p["conv2_b"])          # (B,6,6,32)
    h = conv_relu_pool(h, p["conv3_w"], p["conv3_b"])          # (B,3,3,64)
    cnn_flat = jnp.transpose(h, (0, 3, 1, 2)).reshape(B, -1)   # PyTorch NCHW flatten

    # LSTM input: time-major, flattened to (T*B, 4) for the fused head kernel.
    T = x2.shape[1]
    x2_flat = jnp.transpose(x2, (1, 0, 2)).reshape(T * B, -1)

    return head_forward(p, cnn_flat, x2_flat, adj)             # (B,1)


# ----------------------------------------------------------------------------
# Deterministic parameter init (synthetic, PyTorch-like shapes)
# ----------------------------------------------------------------------------
def init_params(key):
    keys = iter(jax.random.split(key, 40))

    def u(shape, fan):
        bound = 1.0 / (fan ** 0.5)
        return jax.random.uniform(next(keys), shape, F32, -bound, bound)

    p = {}
    # CNN_3layers
    p["conv1_w"] = u((16, 1, 5, 5), 1 * 25);   p["conv1_b"] = u((16,), 1 * 25)
    p["conv2_w"] = u((32, 16, 5, 5), 16 * 25); p["conv2_b"] = u((32,), 16 * 25)
    p["conv3_w"] = u((64, 32, 5, 5), 32 * 25); p["conv3_b"] = u((64,), 32 * 25)
    p["cnn_fc_w"] = u((576, 32), 576);         p["cnn_fc_b"] = u((32,), 576)
    # LSTM(4, 32): weights stored pre-transposed as (in, 4*hidden), gate order i,f,g,o
    p["lstm_wih"] = u((4, 128), 32)
    p["lstm_whh"] = u((32, 128), 32)
    p["lstm_bih"] = u((128,), 32)
    p["lstm_bhh"] = u((128,), 32)
    # SelfAttention / MultiHeadAttention (n_head=1)
    p["wq"] = u((32, 32), 32)
    p["wk"] = u((32, 32), 32)
    p["wv"] = u((32, 16), 16)
    p["fcq_w"] = u((32, 32), 32); p["fcq_b"] = u((32,), 32)
    p["fck_w"] = u((32, 32), 32); p["fck_b"] = u((32,), 32)
    p["fcv_w"] = u((16, 16), 16); p["fcv_b"] = u((16,), 16)
    p["fco_w"] = u((16, 32), 16); p["fco_b"] = u((32,), 16)
    # GCN(64 -> 128)
    p["gcn_w"] = u((64, 128), 64); p["gcn_b"] = u((128,), 64)
    # Head
    p["fc1_w"] = u((128, 64), 128); p["fc1_b"] = u((64,), 128)
    p["fc2_w"] = u((64, 32), 64);   p["fc2_b"] = u((32,), 64)
    p["fc3_w"] = u((32, 1), 32);    p["fc3_b"] = u((1,), 32)
    return p


if __name__ == "__main__":
    key = jax.random.PRNGKey(0)
    k1, k2, k3, kp = jax.random.split(key, 4)

    B, T = 2, 8
    # CNN fc expects 576 = 64*3*3 features -> input spatial 24x24 (three /2 pools).
    x1 = jax.random.normal(k1, (B, 1, 24, 24), F32)
    x2 = jax.random.normal(k2, (B, T, 4), F32)
    adj = jax.random.uniform(k3, (B, B), F32)
    adj = adj / jnp.sum(adj, axis=1, keepdims=True)   # row-normalized adjacency

    params = init_params(kp)
    out = jax.jit(forward)(params, x1, x2, adj)
    out = jax.block_until_ready(out)
    assert out.shape == (B, 1) and out.dtype == F32
    print("KERNEL_OK")
</pallas_src>

<mosaic_0001>
module attributes {stable_mosaic.version = 11 : i64} {
  func.func @_conv_pool_kernel(%arg0: i32, %arg1: memref<1x576x25xf32, #tpu.memory_space<vmem>>, %arg2: memref<25x16xf32, #tpu.memory_space<vmem>>, %arg3: memref<1x16xf32, #tpu.memory_space<vmem>>, %arg4: memref<1x144x16xf32, #tpu.memory_space<vmem>>) attributes {dimension_semantics = [#tpu.dimension_semantics<parallel>], iteration_bounds = array<i64: 2>, scalar_prefetch = 0 : i64, scratch_operands = 0 : i64, tpu.core_type = #tpu.core_type<tc>, window_params = [{transform_indices = @transform_0, window_bounds = array<i64: 1, 576, 25>}, {pipeline_mode = #tpu.pipeline_mode<synchronous>, transform_indices = @transform_1, window_bounds = array<i64: 25, 16>}, {pipeline_mode = #tpu.pipeline_mode<synchronous>, transform_indices = @transform_2, window_bounds = array<i64: 1, 16>}, {transform_indices = @transform_3, window_bounds = array<i64: 1, 144, 16>}]} {
    %c0 = arith.constant 0 : index
    %c0_0 = arith.constant 0 : index
    %c0_1 = arith.constant 0 : index
    %0 = vector.load %arg1[%c0, %c0_0, %c0_1] : memref<1x576x25xf32, #tpu.memory_space<vmem>>, vector<1x576x25xf32>
    %1 = vector.shape_cast %0 : vector<1x576x25xf32> to vector<576x25xf32>
    %c0_2 = arith.constant 0 : index
    %c0_3 = arith.constant 0 : index
    %2 = vector.load %arg2[%c0_2, %c0_3] : memref<25x16xf32, #tpu.memory_space<vmem>>, vector<25x16xf32>
    %cst = arith.constant dense<0.000000e+00> : vector<576x16xf32>
    %3 = tpu.matmul %1, %2, %cst {dimension_numbers = #tpu.dot_dimension_numbers<[1], [0], [0], [1], [0, 0, 1, 1], [], []>} : vector<576x25xf32>, vector<25x16xf32>, vector<576x16xf32> -> vector<576x16xf32>
    %c0_4 = arith.constant 0 : index
    %c0_5 = arith.constant 0 : index
    %4 = vector.load %arg3[%c0_4, %c0_5] : memref<1x16xf32, #tpu.memory_space<vmem>>, vector<1x16xf32>
    %5 = vector.broadcast %4 : vector<1x16xf32> to vector<576x16xf32>
    %6 = arith.addf %3, %5 : vector<576x16xf32>
    %cst_6 = arith.constant 0.000000e+00 : f32
    %7 = vector.broadcast %cst_6 : f32 to vector<576x16xf32>
    %8 = arith.maximumf %6, %7 : vector<576x16xf32>
    %9 = vector.extract_strided_slice %8 {offsets = [0, 0], sizes = [144, 16], strides = [1, 1]} : vector<576x16xf32> to vector<144x16xf32>
    %10 = vector.extract_strided_slice %8 {offsets = [144, 0], sizes = [144, 16], strides = [1, 1]} : vector<576x16xf32> to vector<144x16xf32>
    %11 = arith.maximumf %9, %10 : vector<144x16xf32>
    %12 = vector.extract_strided_slice %8 {offsets = [288, 0], sizes = [144, 16], strides = [1, 1]} : vector<576x16xf32> to vector<144x16xf32>
    %13 = vector.extract_strided_slice %8 {offsets = [432, 0], sizes = [144, 16], strides = [1, 1]} : vector<576x16xf32> to vector<144x16xf32>
    %14 = arith.maximumf %12, %13 : vector<144x16xf32>
    %15 = arith.maximumf %11, %14 : vector<144x16xf32>
    %c0_7 = arith.constant 0 : index
    %c0_8 = arith.constant 0 : index
    %c0_9 = arith.constant 0 : index
    %16 = vector.load %arg4[%c0_7, %c0_8, %c0_9] : memref<1x144x16xf32, #tpu.memory_space<vmem>>, vector<1x144x16xf32>
    %17 = vector.shape_cast %16 : vector<1x144x16xf32> to vector<144x16xf32>
    %18 = vector.shape_cast %15 : vector<144x16xf32> to vector<1x144x16xf32>
    tpu.vector_store %arg4[%c0_7, %c0_8, %c0_9], %18 {strides = array<i32>} : memref<1x144x16xf32, #tpu.memory_space<vmem>>, vector<1x144x16xf32>,
    return
  }
  func.func @transform_0(%arg0: i32) -> (i32, i32, i32) {
    %c0_i32 = arith.constant 0 : i32
    %c0_i32_0 = arith.constant 0 : i32
    %c0_i32_1 = arith.constant 0 : i32
    return %arg0, %c0_i32, %c0_i32_0 : i32, i32, i32
  }
  func.func @transform_1(%arg0: i32) -> (i32, i32) {
    %c0_i32 = arith.constant 0 : i32
    %c0_i32_0 = arith.constant 0 : i32
    %c0_i32_1 = arith.constant 0 : i32
    return %c0_i32, %c0_i32_0 : i32, i32
  }
  func.func @transform_2(%arg0: i32) -> (i32, i32) {
    %c0_i32 = arith.constant 0 : i32
    %c0_i32_0 = arith.constant 0 : i32
    %c0_i32_1 = arith.constant 0 : i32
    return %c0_i32, %c0_i32_0 : i32, i32
  }
  func.func @transform_3(%arg0: i32) -> (i32, i32, i32) {
    %c0_i32 = arith.constant 0 : i32
    %c0_i32_0 = arith.constant 0 : i32
    %c0_i32_1 = arith.constant 0 : i32
    return %arg0, %c0_i32, %c0_i32_0 : i32, i32, i32
  }
}

module attributes {stable_mosaic.version = 11 : i64} {
  func.func @_conv_pool_kernel(%arg0: i32, %arg1: memref<1x144x400xf32, #tpu.memory_space<vmem>>, %arg2: memref<400x32xf32, #tpu.memory_space<vmem>>, %arg3: memref<1x32xf32, #tpu.memory_space<vmem>>, %arg4: memref<1x36x32xf32, #tpu.memory_space<vmem>>) attributes {dimension_semantics = [#tpu.dimension_semantics<parallel>], iteration_bounds = array<i64: 2>, scalar_prefetch = 0 : i64, scratch_operands = 0 : i64, tpu.core_type = #tpu.core_type<tc>, window_params = [{transform_indices = @transform_0, window_bounds = array<i64: 1, 144, 400>}, {pipeline_mode = #tpu.pipeline_mode<synchronous>, transform_indices = @transform_1, window_bounds = array<i64: 400, 32>}, {pipeline_mode = #tpu.pipeline_mode<synchronous>, transform_indices = @transform_2, window_bounds = array<i64: 1, 32>}, {transform_indices = @transform_3, window_bounds = array<i64: 1, 36, 32>}]} {
    %c0 = arith.constant 0 : index
    %c0_0 = arith.constant 0 : index
    %c0_1 = arith.constant 0 : index
    %0 = vector.load %arg1[%c0, %c0_0, %c0_1] : memref<1x144x400xf32, #tpu.memory_space<vmem>>, vector<1x144x400xf32>
    %1 = vector.shape_cast %0 : vector<1x144x400xf32> to vector<144x400xf32>
    %c0_2 = arith.constant 0 : index
    %c0_3 = arith.constant 0 : index
    %2 = vector.load %arg2[%c0_2, %c0_3] : memref<400x32xf32, #tpu.memory_space<vmem>>, vector<400x32xf32>
    %cst = arith.constant dense<0.000000e+00> : vector<144x32xf32>
    %3 = tpu.matmul %1, %2, %cst {dimension_numbers = #tpu.dot_dimension_numbers<[1], [0], [0], [1], [0, 0, 1, 1], [], []>} : vector<144x400xf32>, vector<400x32xf32>, vector<144x32xf32> -> vector<144x32xf32>
    %c0_4 = arith.constant 0 : index
    %c0_5 = arith.constant 0 : index
    %4 = vector.load %arg3[%c0_4, %c0_5] : memref<1x32xf32, #tpu.memory_space<vmem>>, vector<1x32xf32>
    %5 = vector.broadcast %4 : vector<1x32xf32> to vector<144x32xf32>
    %6 = arith.addf %3, %5 : vector<144x32xf32>
    %cst_6 = arith.constant 0.000000e+00 : f32
    %7 = vector.broadcast %cst_6 : f32 to vector<144x32xf32>
    %8 = arith.maximumf %6, %7 : vector<144x32xf32>
    %9 = vector.extract_strided_slice %8 {offsets = [0, 0], sizes = [36, 32], strides = [1, 1]} : vector<144x32xf32> to vector<36x32xf32>
    %10 = vector.extract_strided_slice %8 {offsets = [36, 0], sizes = [36, 32], strides = [1, 1]} : vector<144x32xf32> to vector<36x32xf32>
    %11 = arith.maximumf %9, %10 : vector<36x32xf32>
    %12 = vector.extract_strided_slice %8 {offsets = [72, 0], sizes = [36, 32], strides = [1, 1]} : vector<144x32xf32> to vector<36x32xf32>
    %13 = vector.extract_strided_slice %8 {offsets = [108, 0], sizes = [36, 32], strides = [1, 1]} : vector<144x32xf32> to vector<36x32xf32>
    %14 = arith.maximumf %12, %13 : vector<36x32xf32>
    %15 = arith.maximumf %11, %14 : vector<36x32xf32>
    %c0_7 = arith.constant 0 : index
    %c0_8 = arith.constant 0 : index
    %c0_9 = arith.constant 0 : index
    %16 = vector.load %arg4[%c0_7, %c0_8, %c0_9] : memref<1x36x32xf32, #tpu.memory_space<vmem>>, vector<1x36x32xf32>
    %17 = vector.shape_cast %16 : vector<1x36x32xf32> to vector<36x32xf32>
    %18 = vector.shape_cast %15 : vector<36x32xf32> to vector<1x36x32xf32>
    tpu.vector_store %arg4[%c0_7, %c0_8, %c0_9], %18 {strides = array<i32>} : memref<1x36x32xf32, #tpu.memory_space<vmem>>, vector<1x36x32xf32>,
    return
  }
  func.func @transform_0(%arg0: i32) -> (i32, i32, i32) {
    %c0_i32 = arith.constant 0 : i32
    %c0_i32_0 = arith.constant 0 : i32
    %c0_i32_1 = arith.constant 0 : i32
    return %arg0, %c0_i32, %c0_i32_0 : i32, i32, i32
  }
  func.func @transform_1(%arg0: i32) -> (i32, i32) {
    %c0_i32 = arith.constant 0 : i32
    %c0_i32_0 = arith.constant 0 : i32
    %c0_i32_1 = arith.constant 0 : i32
    return %c0_i32, %c0_i32_0 : i32, i32
  }
  func.func @transform_2(%arg0: i32) -> (i32, i32) {
    %c0_i32 = arith.constant 0 : i32
    %c0_i32_0 = arith.constant 0 : i32
    %c0_i32_1 = arith.constant 0 : i32
    return %c0_i32, %c0_i32_0 : i32, i32
  }
  func.func @transform_3(%arg0: i32) -> (i32, i32, i32) {
    %c0_i32 = arith.constant 0 : i32
    %c0_i32_0 = arith.constant 0 : i32
    %c0_i32_1 = arith.constant 0 : i32
    return %arg0, %c0_i32, %c0_i32_0 : i32, i32, i32
  }
}

module attributes {stable_mosaic.version = 11 : i64} {
  func.func @_conv_pool_kernel(%arg0: i32, %arg1: memref<1x36x800xf32, #tpu.memory_space<vmem>>, %arg2: memref<800x64xf32, #tpu.memory_space<vmem>>, %arg3: memref<1x64xf32, #tpu.memory_space<vmem>>, %arg4: memref<1x9x64xf32, #tpu.memory_space<vmem>>) attributes {dimension_semantics = [#tpu.dimension_semantics<parallel>], iteration_bounds = array<i64: 2>, scalar_prefetch = 0 : i64, scratch_operands = 0 : i64, tpu.core_type = #tpu.core_type<tc>, window_params = [{transform_indices = @transform_0, window_bounds = array<i64: 1, 36, 800>}, {pipeline_mode = #tpu.pipeline_mode<synchronous>, transform_indices = @transform_1, window_bounds = array<i64: 800, 64>}, {pipeline_mode = #tpu.pipeline_mode<synchronous>, transform_indices = @transform_2, window_bounds = array<i64: 1, 64>}, {transform_indices = @transform_3, window_bounds = array<i64: 1, 9, 64>}]} {
    %c0 = arith.constant 0 : index
    %c0_0 = arith.constant 0 : index
    %c0_1 = arith.constant 0 : index
    %0 = vector.load %arg1[%c0, %c0_0, %c0_1] : memref<1x36x800xf32, #tpu.memory_space<vmem>>, vector<1x36x800xf32>
    %1 = vector.shape_cast %0 : vector<1x36x800xf32> to vector<36x800xf32>
    %c0_2 = arith.constant 0 : index
    %c0_3 = arith.constant 0 : index
    %2 = vector.load %arg2[%c0_2, %c0_3] : memref<800x64xf32, #tpu.memory_space<vmem>>, vector<800x64xf32>
    %cst = arith.constant dense<0.000000e+00> : vector<36x64xf32>
    %3 = tpu.matmul %1, %2, %cst {dimension_numbers = #tpu.dot_dimension_numbers<[1], [0], [0], [1], [0, 0, 1, 1], [], []>} : vector<36x800xf32>, vector<800x64xf32>, vector<36x64xf32> -> vector<36x64xf32>
    %c0_4 = arith.constant 0 : index
    %c0_5 = arith.constant 0 : index
    %4 = vector.load %arg3[%c0_4, %c0_5] : memref<1x64xf32, #tpu.memory_space<vmem>>, vector<1x64xf32>
    %5 = vector.broadcast %4 : vector<1x64xf32> to vector<36x64xf32>
    %6 = arith.addf %3, %5 : vector<36x64xf32>
    %cst_6 = arith.constant 0.000000e+00 : f32
    %7 = vector.broadcast %cst_6 : f32 to vector<36x64xf32>
    %8 = arith.maximumf %6, %7 : vector<36x64xf32>
    %9 = vector.extract_strided_slice %8 {offsets = [0, 0], sizes = [9, 64], strides = [1, 1]} : vector<36x64xf32> to vector<9x64xf32>
    %10 = vector.extract_strided_slice %8 {offsets = [9, 0], sizes = [9, 64], strides = [1, 1]} : vector<36x64xf32> to vector<9x64xf32>
    %11 = arith.maximumf %9, %10 : vector<9x64xf32>
    %12 = vector.extract_strided_slice %8 {offsets = [18, 0], sizes = [9, 64], strides = [1, 1]} : vector<36x64xf32> to vector<9x64xf32>
    %13 = vector.extract_strided_slice %8 {offsets = [27, 0], sizes = [9, 64], strides = [1, 1]} : vector<36x64xf32> to vector<9x64xf32>
    %14 = arith.maximumf %12, %13 : vector<9x64xf32>
    %15 = arith.maximumf %11, %14 : vector<9x64xf32>
    %c0_7 = arith.constant 0 : index
    %c0_8 = arith.constant 0 : index
    %c0_9 = arith.constant 0 : index
    %16 = vector.load %arg4[%c0_7, %c0_8, %c0_9] : memref<1x9x64xf32, #tpu.memory_space<vmem>>, vector<1x9x64xf32>
    %17 = vector.shape_cast %16 : vector<1x9x64xf32> to vector<9x64xf32>
    %18 = vector.shape_cast %15 : vector<9x64xf32> to vector<1x9x64xf32>
    tpu.vector_store %arg4[%c0_7, %c0_8, %c0_9], %18 {strides = array<i32>} : memref<1x9x64xf32, #tpu.memory_space<vmem>>, vector<1x9x64xf32>,
    return
  }
  func.func @transform_0(%arg0: i32) -> (i32, i32, i32) {
    %c0_i32 = arith.constant 0 : i32
    %c0_i32_0 = arith.constant 0 : i32
    %c0_i32_1 = arith.constant 0 : i32
    return %arg0, %c0_i32, %c0_i32_0 : i32, i32, i32
  }
  func.func @transform_1(%arg0: i32) -> (i32, i32) {
    %c0_i32 = arith.constant 0 : i32
    %c0_i32_0 = arith.constant 0 : i32
    %c0_i32_1 = arith.constant 0 : i32
    return %c0_i32, %c0_i32_0 : i32, i32
  }
  func.func @transform_2(%arg0: i32) -> (i32, i32) {
    %c0_i32 = arith.constant 0 : i32
    %c0_i32_0 = arith.constant 0 : i32
    %c0_i32_1 = arith.constant 0 : i32
    return %c0_i32, %c0_i32_0 : i32, i32
  }
  func.func @transform_3(%arg0: i32) -> (i32, i32, i32) {
    %c0_i32 = arith.constant 0 : i32
    %c0_i32_0 = arith.constant 0 : i32
    %c0_i32_1 = arith.constant 0 : i32
    return %arg0, %c0_i32, %c0_i32_0 : i32, i32, i32
  }
}

module attributes {stable_mosaic.version = 11 : i64} {
  func.func @_head_kernel(%arg0: memref<2x576xf32, #tpu.memory_space<vmem>>, %arg1: memref<16x4xf32, #tpu.memory_space<vmem>>, %arg2: memref<2x2xf32, #tpu.memory_space<vmem>>, %arg3: memref<576x32xf32, #tpu.memory_space<vmem>>, %arg4: memref<1x32xf32, #tpu.memory_space<vmem>>, %arg5: memref<4x128xf32, #tpu.memory_space<vmem>>, %arg6: memref<32x128xf32, #tpu.memory_space<vmem>>, %arg7: memref<1x128xf32, #tpu.memory_space<vmem>>, %arg8: memref<32x32xf32, #tpu.memory_space<vmem>>, %arg9: memref<32x32xf32, #tpu.memory_space<vmem>>, %arg10: memref<32x16xf32, #tpu.memory_space<vmem>>, %arg11: memref<32x32xf32, #tpu.memory_space<vmem>>, %arg12: memref<1x32xf32, #tpu.memory_space<vmem>>, %arg13: memref<32x32xf32, #tpu.memory_space<vmem>>, %arg14: memref<1x32xf32, #tpu.memory_space<vmem>>, %arg15: memref<16x16xf32, #tpu.memory_space<vmem>>, %arg16: memref<1x16xf32, #tpu.memory_space<vmem>>, %arg17: memref<16x32xf32, #tpu.memory_space<vmem>>, %arg18: memref<1x32xf32, #tpu.memory_space<vmem>>, %arg19: memref<64x128xf32, #tpu.memory_space<vmem>>, %arg20: memref<1x128xf32, #tpu.memory_space<vmem>>, %arg21: memref<128x64xf32, #tpu.memory_space<vmem>>, %arg22: memref<1x64xf32, #tpu.memory_space<vmem>>, %arg23: memref<64x32xf32, #tpu.memory_space<vmem>>, %arg24: memref<1x32xf32, #tpu.memory_space<vmem>>, %arg25: memref<32x1xf32, #tpu.memory_space<vmem>>, %arg26: memref<1x1xf32, #tpu.memory_space<vmem>>, %arg27: memref<2x1xf32, #tpu.memory_space<vmem>>) attributes {dimension_semantics = [], scalar_prefetch = 0 : i64, scratch_operands = 0 : i64, tpu.core_type = #tpu.core_type<tc>} {
    %c0 = arith.constant 0 : index
    %c0_0 = arith.constant 0 : index
    %0 = vector.load %arg0[%c0, %c0_0] : memref<2x576xf32, #tpu.memory_space<vmem>>, vector<2x576xf32>
    %c0_1 = arith.constant 0 : index
    %c0_2 = arith.constant 0 : index
    %1 = vector.load %arg3[%c0_1, %c0_2] : memref<576x32xf32, #tpu.memory_space<vmem>>, vector<576x32xf32>
    %cst = arith.constant dense<0.000000e+00> : vector<2x32xf32>
    %2 = tpu.matmul %0, %1, %cst {dimension_numbers = #tpu.dot_dimension_numbers<[1], [0], [0], [1], [0, 0, 1, 1], [], []>} : vector<2x576xf32>, vector<576x32xf32>, vector<2x32xf32> -> vector<2x32xf32>
    %c0_3 = arith.constant 0 : index
    %c0_4 = arith.constant 0 : index
    %3 = vector.load %arg4[%c0_3, %c0_4] : memref<1x32xf32, #tpu.memory_space<vmem>>, vector<1x32xf32>
    %4 = vector.broadcast %3 : vector<1x32xf32> to vector<2x32xf32>
    %5 = arith.addf %2, %4 : vector<2x32xf32>
    %c0_5 = arith.constant 0 : index
    %c0_6 = arith.constant 0 : index
    %6 = vector.load %arg1[%c0_5, %c0_6] : memref<16x4xf32, #tpu.memory_space<vmem>>, vector<16x4xf32>
    %c0_7 = arith.constant 0 : index
    %c0_8 = arith.constant 0 : index
    %7 = vector.load %arg5[%c0_7, %c0_8] : memref<4x128xf32, #tpu.memory_space<vmem>>, vector<4x128xf32>
    %cst_9 = arith.constant dense<0.000000e+00> : vector<16x128xf32>
    %8 = tpu.matmul %6, %7, %cst_9 {dimension_numbers = #tpu.dot_dimension_numbers<[1], [0], [0], [1], [0, 0, 1, 1], [], []>} : vector<16x4xf32>, vector<4x128xf32>, vector<16x128xf32> -> vector<16x128xf32>
    %c0_10 = arith.constant 0 : index
    %c0_11 = arith.constant 0 : index
    %9 = vector.load %arg7[%c0_10, %c0_11] : memref<1x128xf32, #tpu.memory_space<vmem>>, vector<1x128xf32>
    %10 = vector.broadcast %9 : vector<1x128xf32> to vector<16x128xf32>
    %11 = arith.addf %8, %10 : vector<16x128xf32>
    %c0_12 = arith.constant 0 : index
    %c0_13 = arith.constant 0 : index
    %12 = vector.load %arg6[%c0_12, %c0_13] : memref<32x128xf32, #tpu.memory_space<vmem>>, vector<32x128xf32>
    %cst_14 = arith.constant 0.000000e+00 : f32
    %13 = vector.broadcast %cst_14 : f32 to vector<2x32xf32>
    %cst_15 = arith.constant 0.000000e+00 : f32
    %14 = vector.broadcast %cst_15 : f32 to vector<2x32xf32>
    %15 = vector.extract_strided_slice %11 {offsets = [0, 0], sizes = [2, 128], strides = [1, 1]} : vector<16x128xf32> to vector<2x128xf32>
    %cst_16 = arith.constant dense<0.000000e+00> : vector<2x128xf32>
    %16 = tpu.matmul %13, %12, %cst_16 {dimension_numbers = #tpu.dot_dimension_numbers<[1], [0], [0], [1], [0, 0, 1, 1], [], []>} : vector<2x32xf32>, vector<32x128xf32>, vector<2x128xf32> -> vector<2x128xf32>
    %17 = arith.addf %15, %16 : vector<2x128xf32>
    %18 = vector.extract_strided_slice %17 {offsets = [0, 0], sizes = [2, 32], strides = [1, 1]} : vector<2x128xf32> to vector<2x32xf32>
    %19 = arith.negf %18 : vector<2x32xf32>
    %20 = math.exp %19 : vector<2x32xf32>
    %cst_17 = arith.constant 1.000000e+00 : f32
    %21 = vector.broadcast %cst_17 : f32 to vector<2x32xf32>
    %22 = arith.addf %21, %20 : vector<2x32xf32>
    %23 = arith.divf %21, %22 : vector<2x32xf32>
    %24 = vector.extract_strided_slice %17 {offsets = [0, 32], sizes = [2, 32], strides = [1, 1]} : vector<2x128xf32> to vector<2x32xf32>
    %25 = arith.negf %24 : vector<2x32xf32>
    %26 = math.exp %25 : vector<2x32xf32>
    %cst_18 = arith.constant 1.000000e+00 : f32
    %27 = vector.broadcast %cst_18 : f32 to vector<2x32xf32>
    %28 = arith.addf %27, %26 : vector<2x32xf32>
    %29 = arith.divf %27, %28 : vector<2x32xf32>
    %30 = vector.extract_strided_slice %17 {offsets = [0, 64], sizes = [2, 32], strides = [1, 1]} : vector<2x128xf32> to vector<2x32xf32>
    %31 = math.tanh %30 : vector<2x32xf32>
    %32 = vector.extract_strided_slice %17 {offsets = [0, 96], sizes = [2, 32], strides = [1, 1]} : vector<2x128xf32> to vector<2x32xf32>
    %33 = arith.negf %32 : vector<2x32xf32>
    %34 = math.exp %33 : vector<2x32xf32>
    %cst_19 = arith.constant 1.000000e+00 : f32
    %35 = vector.broadcast %cst_19 : f32 to vector<2x32xf32>
    %36 = arith.addf %35, %34 : vector<2x32xf32>
    %37 = arith.divf %35, %36 : vector<2x32xf32>
    %38 = arith.mulf %29, %14 : vector<2x32xf32>
    %39 = arith.mulf %23, %31 : vector<2x32xf32>
    %40 = arith.addf %38, %39 : vector<2x32xf32>
    %41 = math.tanh %40 : vector<2x32xf32>
    %42 = arith.mulf %37, %41 : vector<2x32xf32>
    %43 = vector.extract_strided_slice %11 {offsets = [2, 0], sizes = [2, 128], strides = [1, 1]} : vector<16x128xf32> to vector<2x128xf32>
    %cst_20 = arith.constant dense<0.000000e+00> : vector<2x128xf32>
    %44 = tpu.matmul %42, %12, %cst_20 {dimension_numbers = #tpu.dot_dimension_numbers<[1], [0], [0], [1], [0, 0, 1, 1], [], []>} : vector<2x32xf32>, vector<32x128xf32>, vector<2x128xf32> -> vector<2x128xf32>
    %45 = arith.addf %43, %44 : vector<2x128xf32>
    %46 = vector.extract_strided_slice %45 {offsets = [0, 0], sizes = [2, 32], strides = [1, 1]} : vector<2x128xf32> to vector<2x32xf32>
    %47 = arith.negf %46 : vector<2x32xf32>
    %48 = math.exp %47 : vector<2x32xf32>
    %cst_21 = arith.constant 1.000000e+00 : f32
    %49 = vector.broadcast %cst_21 : f32 to vector<2x32xf32>
    %50 = arith.addf %49, %48 : vector<2x32xf32>
    %51 = arith.divf %49, %50 : vector<2x32xf32>
    %52 = vector.extract_strided_slice %45 {offsets = [0, 32], sizes = [2, 32], strides = [1, 1]} : vector<2x128xf32> to vector<2x32xf32>
    %53 = arith.negf %52 : vector<2x32xf32>
    %54 = math.exp %53 : vector<2x32xf32>
    %cst_22 = arith.constant 1.000000e+00 : f32
    %55 = vector.broadcast %cst_22 : f32 to vector<2x32xf32>
    %56 = arith.addf %55, %54 : vector<2x32xf32>
    %57 = arith.divf %55, %56 : vector<2x32xf32>
    %58 = vector.extract_strided_slice %45 {offsets = [0, 64], sizes = [2, 32], strides = [1, 1]} : vector<2x128xf32> to vector<2x32xf32>
    %59 = math.tanh %58 : vector<2x32xf32>
    %60 = vector.extract_strided_slice %45 {offsets = [0, 96], sizes = [2, 32], strides = [1, 1]} : vector<2x128xf32> to vector<2x32xf32>
    %61 = arith.negf %60 : vector<2x32xf32>
    %62 = math.exp %61 : vector<2x32xf32>
    %cst_23 = arith.constant 1.000000e+00 : f32
    %63 = vector.broadcast %cst_23 : f32 to vector<2x32xf32>
    %64 = arith.addf %63, %62 : vector<2x32xf32>
    %65 = arith.divf %63, %64 : vector<2x32xf32>
    %66 = arith.mulf %57, %40 : vector<2x32xf32>
    %67 = arith.mulf %51, %59 : vector<2x32xf32>
    %68 = arith.addf %66, %67 : vector<2x32xf32>
    %69 = math.tanh %68 : vector<2x32xf32>
    %70 = arith.mulf %65, %69 : vector<2x32xf32>
    %71 = vector.extract_strided_slice %11 {offsets = [4, 0], sizes = [2, 128], strides = [1, 1]} : vector<16x128xf32> to vector<2x128xf32>
    %cst_24 = arith.constant dense<0.000000e+00> : vector<2x128xf32>
    %72 = tpu.matmul %70, %12, %cst_24 {dimension_numbers = #tpu.dot_dimension_numbers<[1], [0], [0], [1], [0, 0, 1, 1], [], []>} : vector<2x32xf32>, vector<32x128xf32>, vector<2x128xf32> -> vector<2x128xf32>
    %73 = arith.addf %71, %72 : vector<2x128xf32>
    %74 = vector.extract_strided_slice %73 {offsets = [0, 0], sizes = [2, 32], strides = [1, 1]} : vector<2x128xf32> to vector<2x32xf32>
    %75 = arith.negf %74 : vector<2x32xf32>
    %76 = math.exp %75 : vector<2x32xf32>
    %cst_25 = arith.constant 1.000000e+00 : f32
    %77 = vector.broadcast %cst_25 : f32 to vector<2x32xf32>
    %78 = arith.addf %77, %76 : vector<2x32xf32>
    %79 = arith.divf %77, %78 : vector<2x32xf32>
    %80 = vector.extract_strided_slice %73 {offsets = [0, 32], sizes = [2, 32], strides = [1, 1]} : vector<2x128xf32> to vector<2x32xf32>
    %81 = arith.negf %80 : vector<2x32xf32>
    %82 = math.exp %81 : vector<2x32xf32>
    %cst_26 = arith.constant 1.000000e+00 : f32
    %83 = vector.broadcast %cst_26 : f32 to vector<2x32xf32>
    %84 = arith.addf %83, %82 : vector<2x32xf32>
    %85 = arith.divf %83, %84 : vector<2x32xf32>
    %86 = vector.extract_strided_slice %73 {offsets = [0, 64], sizes = [2, 32], strides = [1, 1]} : vector<2x128xf32> to vector<2x32xf32>
    %87 = math.tanh %86 : vector<2x32xf32>
    %88 = vector.extract_strided_slice %73 {offsets = [0, 96], sizes = [2, 32], strides = [1, 1]} : vector<2x128xf32> to vector<2x32xf32>
    %89 = arith.negf %88 : vector<2x32xf32>
    %90 = math.exp %89 : vector<2x32xf32>
    %cst_27 = arith.constant 1.000000e+00 : f32
    %91 = vector.broadcast %cst_27 : f32 to vector<2x32xf32>
    %92 = arith.addf %91, %90 : vector<2x32xf32>
    %93 = arith.divf %91, %92 : vector<2x32xf32>
    %94 = arith.mulf %85, %68 : vector<2x32xf32>
    %95 = arith.mulf %79, %87 : vector<2x32xf32>
    %96 = arith.addf %94, %95 : vector<2x32xf32>
    %97 = math.tanh %96 : vector<2x32xf32>
    %98 = arith.mulf %93, %97 : vector<2x32xf32>
    %99 = vector.extract_strided_slice %11 {offsets = [6, 0], sizes = [2, 128], strides = [1, 1]} : vector<16x128xf32> to vector<2x128xf32>
    %cst_28 = arith.constant dense<0.000000e+00> : vector<2x128xf32>
    %100 = tpu.matmul %98, %12, %cst_28 {dimension_numbers = #tpu.dot_dimension_numbers<[1], [0], [0], [1], [0, 0, 1, 1], [], []>} : vector<2x32xf32>, vector<32x128xf32>, vector<2x128xf32> -> vector<2x128xf32>
    %101 = arith.addf %99, %100 : vector<2x128xf32>
    %102 = vector.extract_strided_slice %101 {offsets = [0, 0], sizes = [2, 32], strides = [1, 1]} : vector<2x128xf32> to vector<2x32xf32>
    %103 = arith.negf %102 : vector<2x32xf32>
    %104 = math.exp %103 : vector<2x32xf32>
    %cst_29 = arith.constant 1.000000e+00 : f32
    %105 = vector.broadcast %cst_29 : f32 to vector<2x32xf32>
    %106 = arith.addf %105, %104 : vector<2x32xf32>
    %107 = arith.divf %105, %106 : vector<2x32xf32>
    %108 = vector.extract_strided_slice %101 {offsets = [0, 32], sizes = [2, 32], strides = [1, 1]} : vector<2x128xf32> to vector<2x32xf32>
    %109 = arith.negf %108 : vector<2x32xf32>
    %110 = math.exp %109 : vector<2x32xf32>
    %cst_30 = arith.constant 1.000000e+00 : f32
    %111 = vector.broadcast %cst_30 : f32 to vector<2x32xf32>
    %112 = arith.addf %111, %110 : vector<2x32xf32>
    %113 = arith.divf %111, %112 : vector<2x32xf32>
    %114 = vector.extract_strided_slice %101 {offsets = [0, 64], sizes = [2, 32], strides = [1, 1]} : vector<2x128xf32> to vector<2x32xf32>
    %115 = math.tanh %114 : vector<2x32xf32>
    %116 = vector.extract_strided_slice %101 {offsets = [0, 96], sizes = [2, 32], strides = [1, 1]} : vector<2x128xf32> to vector<2x32xf32>
    %117 = arith.negf %116 : vector<2x32xf32>
    %118 = math.exp %117 : vector<2x32xf32>
    %cst_31 = arith.constant 1.000000e+00 : f32
    %119 = vector.broadcast %cst_31 : f32 to vector<2x32xf32>
    %120 = arith.addf %119, %118 : vector<2x32xf32>
    %121 = arith.divf %119, %120 : vector<2x32xf32>
    %122 = arith.mulf %113, %96 : vector<2x32xf32>
    %123 = arith.mulf %107, %115 : vector<2x32xf32>
    %124 = arith.addf %122, %123 : vector<2x32xf32>
    %125 = math.tanh %124 : vector<2x32xf32>
    %126 = arith.mulf %121, %125 : vector<2x32xf32>
    %127 = vector.extract_strided_slice %11 {offsets = [8, 0], sizes = [2, 128], strides = [1, 1]} : vector<16x128xf32> to vector<2x128xf32>
    %cst_32 = arith.constant dense<0.000000e+00> : vector<2x128xf32>
    %128 = tpu.matmul %126, %12, %cst_32 {dimension_numbers = #tpu.dot_dimension_numbers<[1], [0], [0], [1], [0, 0, 1, 1], [], []>} : vector<2x32xf32>, vector<32x128xf32>, vector<2x128xf32> -> vector<2x128xf32>
    %129 = arith.addf %127, %128 : vector<2x128xf32>
    %130 = vector.extract_strided_slice %129 {offsets = [0, 0], sizes = [2, 32], strides = [1, 1]} : vector<2x128xf32> to vector<2x32xf32>
    %131 = arith.negf %130 : vector<2x32xf32>
    %132 = math.exp %131 : vector<2x32xf32>
    %cst_33 = arith.constant 1.000000e+00 : f32
    %133 = vector.broadcast %cst_33 : f32 to vector<2x32xf32>
    %134 = arith.addf %133, %132 : vector<2x32xf32>
    %135 = arith.divf %133, %134 : vector<2x32xf32>
    %136 = vector.extract_strided_slice %129 {offsets = [0, 32], sizes = [2, 32], strides = [1, 1]} : vector<2x128xf32> to vector<2x32xf32>
    %137 = arith.negf %136 : vector<2x32xf32>
    %138 = math.exp %137 : vector<2x32xf32>
    %cst_34 = arith.constant 1.000000e+00 : f32
    %139 = vector.broadcast %cst_34 : f32 to vector<2x32xf32>
    %140 = arith.addf %139, %138 : vector<2x32xf32>
    %141 = arith.divf %139, %140 : vector<2x32xf32>
    %142 = vector.extract_strided_slice %129 {offsets = [0, 64], sizes = [2, 32], strides = [1, 1]} : vector<2x128xf32> to vector<2x32xf32>
    %143 = math.tanh %142 : vector<2x32xf32>
    %144 = vector.extract_strided_slice %129 {offsets = [0, 96], sizes = [2, 32], strides = [1, 1]} : vector<2x128xf32> to vector<2x32xf32>
    %145 = arith.negf %144 : vector<2x32xf32>
    %146 = math.exp %145 : vector<2x32xf32>
    %cst_35 = arith.constant 1.000000e+00 : f32
    %147 = vector.broadcast %cst_35 : f32 to vector<2x32xf32>
    %148 = arith.addf %147, %146 : vector<2x32xf32>
    %149 = arith.divf %147, %148 : vector<2x32xf32>
    %150 = arith.mulf %141, %124 : vector<2x32xf32>
    %151 = arith.mulf %135, %143 : vector<2x32xf32>
    %152 = arith.addf %150, %151 : vector<2x32xf32>
    %153 = math.tanh %152 : vector<2x32xf32>
    %154 = arith.mulf %149, %153 : vector<2x32xf32>
    %155 = vector.extract_strided_slice %11 {offsets = [10, 0], sizes = [2, 128], strides = [1, 1]} : vector<16x128xf32> to vector<2x128xf32>
    %cst_36 = arith.constant dense<0.000000e+00> : vector<2x128xf32>
    %156 = tpu.matmul %154, %12, %cst_36 {dimension_numbers = #tpu.dot_dimension_numbers<[1], [0], [0], [1], [0, 0, 1, 1], [], []>} : vector<2x32xf32>, vector<32x128xf32>, vector<2x128xf32> -> vector<2x128xf32>
    %157 = arith.addf %155, %156 : vector<2x128xf32>
    %158 = vector.extract_strided_slice %157 {offsets = [0, 0], sizes = [2, 32], strides = [1, 1]} : vector<2x128xf32> to vector<2x32xf32>
    %159 = arith.negf %158 : vector<2x32xf32>
    %160 = math.exp %159 : vector<2x32xf32>
    %cst_37 = arith.constant 1.000000e+00 : f32
    %161 = vector.broadcast %cst_37 : f32 to vector<2x32xf32>
    %162 = arith.addf %161, %160 : vector<2x32xf32>
    %163 = arith.divf %161, %162 : vector<2x32xf32>
    %164 = vector.extract_strided_slice %157 {offsets = [0, 32], sizes = [2, 32], strides = [1, 1]} : vector<2x128xf32> to vector<2x32xf32>
    %165 = arith.negf %164 : vector<2x32xf32>
    %166 = math.exp %165 : vector<2x32xf32>
    %cst_38 = arith.constant 1.000000e+00 : f32
    %167 = vector.broadcast %cst_38 : f32 to vector<2x32xf32>
    %168 = arith.addf %167, %166 : vector<2x32xf32>
    %169 = arith.divf %167, %168 : vector<2x32xf32>
    %170 = vector.extract_strided_slice %157 {offsets = [0, 64], sizes = [2, 32], strides = [1, 1]} : vector<2x128xf32> to vector<2x32xf32>
    %171 = math.tanh %170 : vector<2x32xf32>
    %172 = vector.extract_strided_slice %157 {offsets = [0, 96], sizes = [2, 32], strides = [1, 1]} : vector<2x128xf32> to vector<2x32xf32>
    %173 = arith.negf %172 : vector<2x32xf32>
    %174 = math.exp %173 : vector<2x32xf32>
    %cst_39 = arith.constant 1.000000e+00 : f32
    %175 = vector.broadcast %cst_39 : f32 to vector<2x32xf32>
    %176 = arith.addf %175, %174 : vector<2x32xf32>
    %177 = arith.divf %175, %176 : vector<2x32xf32>
    %178 = arith.mulf %169, %152 : vector<2x32xf32>
    %179 = arith.mulf %163, %171 : vector<2x32xf32>
    %180 = arith.addf %178, %179 : vector<2x32xf32>
    %181 = math.tanh %180 : vector<2x32xf32>
    %182 = arith.mulf %177, %181 : vector<2x32xf32>
    %183 = vector.extract_strided_slice %11 {offsets = [12, 0], sizes = [2, 128], strides = [1, 1]} : vector<16x128xf32> to vector<2x128xf32>
    %cst_40 = arith.constant dense<0.000000e+00> : vector<2x128xf32>
    %184 = tpu.matmul %182, %12, %cst_40 {dimension_numbers = #tpu.dot_dimension_numbers<[1], [0], [0], [1], [0, 0, 1, 1], [], []>} : vector<2x32xf32>, vector<32x128xf32>, vector<2x128xf32> -> vector<2x128xf32>
    %185 = arith.addf %183, %184 : vector<2x128xf32>
    %186 = vector.extract_strided_slice %185 {offsets = [0, 0], sizes = [2, 32], strides = [1, 1]} : vector<2x128xf32> to vector<2x32xf32>
    %187 = arith.negf %186 : vector<2x32xf32>
    %188 = math.exp %187 : vector<2x32xf32>
    %cst_41 = arith.constant 1.000000e+00 : f32
    %189 = vector.broadcast %cst_41 : f32 to vector<2x32xf32>
    %190 = arith.addf %189, %188 : vector<2x32xf32>
    %191 = arith.divf %189, %190 : vector<2x32xf32>
    %192 = vector.extract_strided_slice %185 {offsets = [0, 32], sizes = [2, 32], strides = [1, 1]} : vector<2x128xf32> to vector<2x32xf32>
    %193 = arith.negf %192 : vector<2x32xf32>
    %194 = math.exp %193 : vector<2x32xf32>
    %cst_42 = arith.constant 1.000000e+00 : f32
    %195 = vector.broadcast %cst_42 : f32 to vector<2x32xf32>
    %196 = arith.addf %195, %194 : vector<2x32xf32>
    %197 = arith.divf %195, %196 : vector<2x32xf32>
    %198 = vector.extract_strided_slice %185 {offsets = [0, 64], sizes = [2, 32], strides = [1, 1]} : vector<2x128xf32> to vector<2x32xf32>
    %199 = math.tanh %198 : vector<2x32xf32>
    %200 = vector.extract_strided_slice %185 {offsets = [0, 96], sizes = [2, 32], strides = [1, 1]} : vector<2x128xf32> to vector<2x32xf32>
    %201 = arith.negf %200 : vector<2x32xf32>
    %202 = math.exp %201 : vector<2x32xf32>
    %cst_43 = arith.constant 1.000000e+00 : f32
    %203 = vector.broadcast %cst_43 : f32 to vector<2x32xf32>
    %204 = arith.addf %203, %202 : vector<2x32xf32>
    %205 = arith.divf %203, %204 : vector<2x32xf32>
    %206 = arith.mulf %197, %180 : vector<2x32xf32>
    %207 = arith.mulf %191, %199 : vector<2x32xf32>
    %208 = arith.addf %206, %207 : vector<2x32xf32>
    %209 = math.tanh %208 : vector<2x32xf32>
    %210 = arith.mulf %205, %209 : vector<2x32xf32>
    %211 = vector.extract_strided_slice %11 {offsets = [14, 0], sizes = [2, 128], strides = [1, 1]} : vector<16x128xf32> to vector<2x128xf32>
    %cst_44 = arith.constant dense<0.000000e+00> : vector<2x128xf32>
    %212 = tpu.matmul %210, %12, %cst_44 {dimension_numbers = #tpu.dot_dimension_numbers<[1], [0], [0], [1], [0, 0, 1, 1], [], []>} : vector<2x32xf32>, vector<32x128xf32>, vector<2x128xf32> -> vector<2x128xf32>
    %213 = arith.addf %211, %212 : vector<2x128xf32>
    %214 = vector.extract_strided_slice %213 {offsets = [0, 0], sizes = [2, 32], strides = [1, 1]} : vector<2x128xf32> to vector<2x32xf32>
    %215 = arith.negf %214 : vector<2x32xf32>
    %216 = math.exp %215 : vector<2x32xf32>
    %cst_45 = arith.constant 1.000000e+00 : f32
    %217 = vector.broadcast %cst_45 : f32 to vector<2x32xf32>
    %218 = arith.addf %217, %216 : vector<2x32xf32>
    %219 = arith.divf %217, %218 : vector<2x32xf32>
    %220 = vector.extract_strided_slice %213 {offsets = [0, 32], sizes = [2, 32], strides = [1, 1]} : vector<2x128xf32> to vector<2x32xf32>
    %221 = arith.negf %220 : vector<2x32xf32>
    %222 = math.exp %221 : vector<2x32xf32>
    %cst_46 = arith.constant 1.000000e+00 : f32
    %223 = vector.broadcast %cst_46 : f32 to vector<2x32xf32>
    %224 = arith.addf %223, %222 : vector<2x32xf32>
    %225 = arith.divf %223, %224 : vector<2x32xf32>
    %226 = vector.extract_strided_slice %213 {offsets = [0, 64], sizes = [2, 32], strides = [1, 1]} : vector<2x128xf32> to vector<2x32xf32>
    %227 = math.tanh %226 : vector<2x32xf32>
    %228 = vector.extract_strided_slice %213 {offsets = [0, 96], sizes = [2, 32], strides = [1, 1]} : vector<2x128xf32> to vector<2x32xf32>
    %229 = arith.negf %228 : vector<2x32xf32>
    %230 = math.exp %229 : vector<2x32xf32>
    %cst_47 = arith.constant 1.000000e+00 : f32
    %231 = vector.broadcast %cst_47 : f32 to vector<2x32xf32>
    %232 = arith.addf %231, %230 : vector<2x32xf32>
    %233 = arith.divf %231, %232 : vector<2x32xf32>
    %234 = arith.mulf %225, %208 : vector<2x32xf32>
    %235 = arith.mulf %219, %227 : vector<2x32xf32>
    %236 = arith.addf %234, %235 : vector<2x32xf32>
    %237 = math.tanh %236 : vector<2x32xf32>
    %238 = arith.mulf %233, %237 : vector<2x32xf32>
    %c0_48 = arith.constant 0 : index
    %c0_49 = arith.constant 0 : index
    %239 = vector.load %arg8[%c0_48, %c0_49] : memref<32x32xf32, #tpu.memory_space<vmem>>, vector<32x32xf32>
    %cst_50 = arith.constant dense<0.000000e+00> : vector<2x32xf32>
    %240 = tpu.matmul %5, %239, %cst_50 {dimension_numbers = #tpu.dot_dimension_numbers<[1], [0], [0], [1], [0, 0, 1, 1], [], []>} : vector<2x32xf32>, vector<32x32xf32>, vector<2x32xf32> -> vector<2x32xf32>
    %c0_51 = arith.constant 0 : index
    %c0_52 = arith.constant 0 : index
    %241 = vector.load %arg11[%c0_51, %c0_52] : memref<32x32xf32, #tpu.memory_space<vmem>>, vector<32x32xf32>
    %cst_53 = arith.constant dense<0.000000e+00> : vector<2x32xf32>
    %242 = tpu.matmul %240, %241, %cst_53 {dimension_numbers = #tpu.dot_dimension_numbers<[1], [0], [0], [1], [0, 0, 1, 1], [], []>} : vector<2x32xf32>, vector<32x32xf32>, vector<2x32xf32> -> vector<2x32xf32>
    %c0_54 = arith.constant 0 : index
    %c0_55 = arith.constant 0 : index
    %243 = vector.load %arg12[%c0_54, %c0_55] : memref<1x32xf32, #tpu.memory_space<vmem>>, vector<1x32xf32>
    %244 = vector.broadcast %243 : vector<1x32xf32> to vector<2x32xf32>
    %245 = arith.addf %242, %244 : vector<2x32xf32>
    %c0_56 = arith.constant 0 : index
    %c0_57 = arith.constant 0 : index
    %246 = vector.load %arg8[%c0_56, %c0_57] : memref<32x32xf32, #tpu.memory_space<vmem>>, vector<32x32xf32>
    %cst_58 = arith.constant dense<0.000000e+00> : vector<2x32xf32>
    %247 = tpu.matmul %238, %246, %cst_58 {dimension_numbers = #tpu.dot_dimension_numbers<[1], [0], [0], [1], [0, 0, 1, 1], [], []>} : vector<2x32xf32>, vector<32x32xf32>, vector<2x32xf32> -> vector<2x32xf32>
    %c0_59 = arith.constant 0 : index
    %c0_60 = arith.constant 0 : index
    %248 = vector.load %arg11[%c0_59, %c0_60] : memref<32x32xf32, #tpu.memory_space<vmem>>, vector<32x32xf32>
    %cst_61 = arith.constant dense<0.000000e+00> : vector<2x32xf32>
    %249 = tpu.matmul %247, %248, %cst_61 {dimension_numbers = #tpu.dot_dimension_numbers<[1], [0], [0], [1], [0, 0, 1, 1], [], []>} : vector<2x32xf32>, vector<32x32xf32>, vector<2x32xf32> -> vector<2x32xf32>
    %c0_62 = arith.constant 0 : index
    %c0_63 = arith.constant 0 : index
    %250 = vector.load %arg12[%c0_62, %c0_63] : memref<1x32xf32, #tpu.memory_space<vmem>>, vector<1x32xf32>
    %251 = vector.broadcast %250 : vector<1x32xf32> to vector<2x32xf32>
    %252 = arith.addf %249, %251 : vector<2x32xf32>
    %c0_64 = arith.constant 0 : index
    %c0_65 = arith.constant 0 : index
    %253 = vector.load %arg9[%c0_64, %c0_65] : memref<32x32xf32, #tpu.memory_space<vmem>>, vector<32x32xf32>
    %cst_66 = arith.constant dense<0.000000e+00> : vector<2x32xf32>
    %254 = tpu.matmul %5, %253, %cst_66 {dimension_numbers = #tpu.dot_dimension_numbers<[1], [0], [0], [1], [0, 0, 1, 1], [], []>} : vector<2x32xf32>, vector<32x32xf32>, vector<2x32xf32> -> vector<2x32xf32>
    %c0_67 = arith.constant 0 : index
    %c0_68 = arith.constant 0 : index
    %255 = vector.load %arg13[%c0_67, %c0_68] : memref<32x32xf32, #tpu.memory_space<vmem>>, vector<32x32xf32>
    %cst_69 = arith.constant dense<0.000000e+00> : vector<2x32xf32>
    %256 = tpu.matmul %254, %255, %cst_69 {dimension_numbers = #tpu.dot_dimension_numbers<[1], [0], [0], [1], [0, 0, 1, 1], [], []>} : vector<2x32xf32>, vector<32x32xf32>, vector<2x32xf32> -> vector<2x32xf32>
    %c0_70 = arith.constant 0 : index
    %c0_71 = arith.constant 0 : index
    %257 = vector.load %arg14[%c0_70, %c0_71] : memref<1x32xf32, #tpu.memory_space<vmem>>, vector<1x32xf32>
    %258 = vector.broadcast %257 : vector<1x32xf32> to vector<2x32xf32>
    %259 = arith.addf %256, %258 : vector<2x32xf32>
    %c0_72 = arith.constant 0 : index
    %c0_73 = arith.constant 0 : index
    %260 = vector.load %arg9[%c0_72, %c0_73] : memref<32x32xf32, #tpu.memory_space<vmem>>, vector<32x32xf32>
    %cst_74 = arith.constant dense<0.000000e+00> : vector<2x32xf32>
    %261 = tpu.matmul %238, %260, %cst_74 {dimension_numbers = #tpu.dot_dimension_numbers<[1], [0], [0], [1], [0, 0, 1, 1], [], []>} : vector<2x32xf32>, vector<32x32xf32>, vector<2x32xf32> -> vector<2x32xf32>
    %c0_75 = arith.constant 0 : index
    %c0_76 = arith.constant 0 : index
    %262 = vector.load %arg13[%c0_75, %c0_76] : memref<32x32xf32, #tpu.memory_space<vmem>>, vector<32x32xf32>
    %cst_77 = arith.constant dense<0.000000e+00> : vector<2x32xf32>
    %263 = tpu.matmul %261, %262, %cst_77 {dimension_numbers = #tpu.dot_dimension_numbers<[1], [0], [0], [1], [0, 0, 1, 1], [], []>} : vector<2x32xf32>, vector<32x32xf32>, vector<2x32xf32> -> vector<2x32xf32>
    %c0_78 = arith.constant 0 : index
    %c0_79 = arith.constant 0 : index
    %264 = vector.load %arg14[%c0_78, %c0_79] : memref<1x32xf32, #tpu.memory_space<vmem>>, vector<1x32xf32>
    %265 = vector.broadcast %264 : vector<1x32xf32> to vector<2x32xf32>
    %266 = arith.addf %263, %265 : vector<2x32xf32>
    %c0_80 = arith.constant 0 : index
    %c0_81 = arith.constant 0 : index
    %267 = vector.load %arg10[%c0_80, %c0_81] : memref<32x16xf32, #tpu.memory_space<vmem>>, vector<32x16xf32>
    %cst_82 = arith.constant dense<0.000000e+00> : vector<2x16xf32>
    %268 = tpu.matmul %5, %267, %cst_82 {dimension_numbers = #tpu.dot_dimension_numbers<[1], [0], [0], [1], [0, 0, 1, 1], [], []>} : vector<2x32xf32>, vector<32x16xf32>, vector<2x16xf32> -> vector<2x16xf32>
    %c0_83 = arith.constant 0 : index
    %c0_84 = arith.constant 0 : index
    %269 = vector.load %arg15[%c0_83, %c0_84] : memref<16x16xf32, #tpu.memory_space<vmem>>, vector<16x16xf32>
    %cst_85 = arith.constant dense<0.000000e+00> : vector<2x16xf32>
    %270 = tpu.matmul %268, %269, %cst_85 {dimension_numbers = #tpu.dot_dimension_numbers<[1], [0], [0], [1], [0, 0, 1, 1], [], []>} : vector<2x16xf32>, vector<16x16xf32>, vector<2x16xf32> -> vector<2x16xf32>
    %c0_86 = arith.constant 0 : index
    %c0_87 = arith.constant 0 : index
    %271 = vector.load %arg16[%c0_86, %c0_87] : memref<1x16xf32, #tpu.memory_space<vmem>>, vector<1x16xf32>
    %272 = vector.broadcast %271 : vector<1x16xf32> to vector<2x16xf32>
    %273 = arith.addf %270, %272 : vector<2x16xf32>
    %c0_88 = arith.constant 0 : index
    %c0_89 = arith.constant 0 : index
    %274 = vector.load %arg10[%c0_88, %c0_89] : memref<32x16xf32, #tpu.memory_space<vmem>>, vector<32x16xf32>
    %cst_90 = arith.constant dense<0.000000e+00> : vector<2x16xf32>
    %275 = tpu.matmul %238, %274, %cst_90 {dimension_numbers = #tpu.dot_dimension_numbers<[1], [0], [0], [1], [0, 0, 1, 1], [], []>} : vector<2x32xf32>, vector<32x16xf32>, vector<2x16xf32> -> vector<2x16xf32>
    %c0_91 = arith.constant 0 : index
    %c0_92 = arith.constant 0 : index
    %276 = vector.load %arg15[%c0_91, %c0_92] : memref<16x16xf32, #tpu.memory_space<vmem>>, vector<16x16xf32>
    %cst_93 = arith.constant dense<0.000000e+00> : vector<2x16xf32>
    %277 = tpu.matmul %275, %276, %cst_93 {dimension_numbers = #tpu.dot_dimension_numbers<[1], [0], [0], [1], [0, 0, 1, 1], [], []>} : vector<2x16xf32>, vector<16x16xf32>, vector<2x16xf32> -> vector<2x16xf32>
    %c0_94 = arith.constant 0 : index
    %c0_95 = arith.constant 0 : index
    %278 = vector.load %arg16[%c0_94, %c0_95] : memref<1x16xf32, #tpu.memory_space<vmem>>, vector<1x16xf32>
    %279 = vector.broadcast %278 : vector<1x16xf32> to vector<2x16xf32>
    %280 = arith.addf %277, %279 : vector<2x16xf32>
    %281 = arith.mulf %245, %259 : vector<2x32xf32>
    %cst_96 = arith.constant dense<0.000000e+00> : vector<2xf32>
    %282 = vector.multi_reduction <add>, %281, %cst_96 [1] : vector<2x32xf32> to vector<2xf32>
    %283 = vector.shape_cast %282 : vector<2xf32> to vector<2x1xf32>
    %cst_97 = arith.constant 0.176776692 : f32
    %284 = vector.broadcast %cst_97 : f32 to vector<2x1xf32>
    %285 = arith.mulf %283, %284 : vector<2x1xf32>
    %286 = arith.mulf %245, %266 : vector<2x32xf32>
    %cst_98 = arith.constant dense<0.000000e+00> : vector<2xf32>
    %287 = vector.multi_reduction <add>, %286, %cst_98 [1] : vector<2x32xf32> to vector<2xf32>
    %288 = vector.shape_cast %287 : vector<2xf32> to vector<2x1xf32>
    %cst_99 = arith.constant 0.176776692 : f32
    %289 = vector.broadcast %cst_99 : f32 to vector<2x1xf32>
    %290 = arith.mulf %288, %289 : vector<2x1xf32>
    %291 = arith.mulf %252, %259 : vector<2x32xf32>
    %cst_100 = arith.constant dense<0.000000e+00> : vector<2xf32>
    %292 = vector.multi_reduction <add>, %291, %cst_100 [1] : vector<2x32xf32> to vector<2xf32>
    %293 = vector.shape_cast %292 : vector<2xf32> to vector<2x1xf32>
    %cst_101 = arith.constant 0.176776692 : f32
    %294 = vector.broadcast %cst_101 : f32 to vector<2x1xf32>
    %295 = arith.mulf %293, %294 : vector<2x1xf32>
    %296 = arith.mulf %252, %266 : vector<2x32xf32>
    %cst_102 = arith.constant dense<0.000000e+00> : vector<2xf32>
    %297 = vector.multi_reduction <add>, %296, %cst_102 [1] : vector<2x32xf32> to vector<2xf32>
    %298 = vector.shape_cast %297 : vector<2xf32> to vector<2x1xf32>
    %cst_103 = arith.constant 0.176776692 : f32
    %299 = vector.broadcast %cst_103 : f32 to vector<2x1xf32>
    %300 = arith.mulf %298, %299 : vector<2x1xf32>
    %301 = arith.maximumf %285, %290 : vector<2x1xf32>
    %302 = arith.subf %285, %301 : vector<2x1xf32>
    %303 = math.exp %302 : vector<2x1xf32>
    %304 = arith.subf %290, %301 : vector<2x1xf32>
    %305 = math.exp %304 : vector<2x1xf32>
    %306 = arith.addf %303, %305 : vector<2x1xf32>
    %cst_104 = arith.constant 1.000000e+00 : f32
    %307 = vector.broadcast %cst_104 : f32 to vector<2x1xf32>
    %308 = arith.divf %307, %306 : vector<2x1xf32>
    %309 = arith.mulf %303, %308 : vector<2x1xf32>
    %310 = arith.mulf %305, %308 : vector<2x1xf32>
    %311 = arith.maximumf %295, %300 : vector<2x1xf32>
    %312 = arith.subf %295, %311 : vector<2x1xf32>
    %313 = math.exp %312 : vector<2x1xf32>
    %314 = arith.subf %300, %311 : vector<2x1xf32>
    %315 = math.exp %314 : vector<2x1xf32>
    %316 = arith.addf %313, %315 : vector<2x1xf32>
    %cst_105 = arith.constant 1.000000e+00 : f32
    %317 = vector.broadcast %cst_105 : f32 to vector<2x1xf32>
    %318 = arith.divf %317, %316 : vector<2x1xf32>
    %319 = arith.mulf %313, %318 : vector<2x1xf32>
    %320 = arith.mulf %315, %318 : vector<2x1xf32>
    %321 = vector.broadcast %309 : vector<2x1xf32> to vector<2x16xf32>
    %322 = arith.mulf %321, %273 : vector<2x16xf32>
    %323 = vector.broadcast %310 : vector<2x1xf32> to vector<2x16xf32>
    %324 = arith.mulf %323, %280 : vector<2x16xf32>
    %325 = arith.addf %322, %324 : vector<2x16xf32>
    %c0_106 = arith.constant 0 : index
    %c0_107 = arith.constant 0 : index
    %326 = vector.load %arg17[%c0_106, %c0_107] : memref<16x32xf32, #tpu.memory_space<vmem>>, vector<16x32xf32>
    %cst_108 = arith.constant dense<0.000000e+00> : vector<2x32xf32>
    %327 = tpu.matmul %325, %326, %cst_108 {dimension_numbers = #tpu.dot_dimension_numbers<[1], [0], [0], [1], [0, 0, 1, 1], [], []>} : vector<2x16xf32>, vector<16x32xf32>, vector<2x32xf32> -> vector<2x32xf32>
    %c0_109 = arith.constant 0 : index
    %c0_110 = arith.constant 0 : index
    %328 = vector.load %arg18[%c0_109, %c0_110] : memref<1x32xf32, #tpu.memory_space<vmem>>, vector<1x32xf32>
    %329 = vector.broadcast %328 : vector<1x32xf32> to vector<2x32xf32>
    %330 = arith.addf %327, %329 : vector<2x32xf32>
    %331 = vector.broadcast %319 : vector<2x1xf32> to vector<2x16xf32>
    %332 = arith.mulf %331, %273 : vector<2x16xf32>
    %333 = vector.broadcast %320 : vector<2x1xf32> to vector<2x16xf32>
    %334 = arith.mulf %333, %280 : vector<2x16xf32>
    %335 = arith.addf %332, %334 : vector<2x16xf32>
    %c0_111 = arith.constant 0 : index
    %c0_112 = arith.constant 0 : index
    %336 = vector.load %arg17[%c0_111, %c0_112] : memref<16x32xf32, #tpu.memory_space<vmem>>, vector<16x32xf32>
    %cst_113 = arith.constant dense<0.000000e+00> : vector<2x32xf32>
    %337 = tpu.matmul %335, %336, %cst_113 {dimension_numbers = #tpu.dot_dimension_numbers<[1], [0], [0], [1], [0, 0, 1, 1], [], []>} : vector<2x16xf32>, vector<16x32xf32>, vector<2x32xf32> -> vector<2x32xf32>
    %c0_114 = arith.constant 0 : index
    %c0_115 = arith.constant 0 : index
    %338 = vector.load %arg18[%c0_114, %c0_115] : memref<1x32xf32, #tpu.memory_space<vmem>>, vector<1x32xf32>
    %339 = vector.broadcast %338 : vector<1x32xf32> to vector<2x32xf32>
    %340 = arith.addf %337, %339 : vector<2x32xf32>
    %341 = tpu.concatenate %330, %340 in 1 : vector<2x32xf32>, vector<2x32xf32> -> vector<2x64xf32>
    %c0_116 = arith.constant 0 : index
    %c0_117 = arith.constant 0 : index
    %342 = vector.load %arg19[%c0_116, %c0_117] : memref<64x128xf32, #tpu.memory_space<vmem>>, vector<64x128xf32>
    %cst_118 = arith.constant dense<0.000000e+00> : vector<2x128xf32>
    %343 = tpu.matmul %341, %342, %cst_118 {dimension_numbers = #tpu.dot_dimension_numbers<[1], [0], [0], [1], [0, 0, 1, 1], [], []>} : vector<2x64xf32>, vector<64x128xf32>, vector<2x128xf32> -> vector<2x128xf32>
    %c0_119 = arith.constant 0 : index
    %c0_120 = arith.constant 0 : index
    %344 = vector.load %arg2[%c0_119, %c0_120] : memref<2x2xf32, #tpu.memory_space<vmem>>, vector<2x2xf32>
    %cst_121 = arith.constant dense<0.000000e+00> : vector<2x128xf32>
    %345 = tpu.matmul %344, %343, %cst_121 {dimension_numbers = #tpu.dot_dimension_numbers<[1], [0], [0], [1], [0, 0, 1, 1], [], []>} : vector<2x2xf32>, vector<2x128xf32>, vector<2x128xf32> -> vector<2x128xf32>
    %c0_122 = arith.constant 0 : index
    %c0_123 = arith.constant 0 : index
    %346 = vector.load %arg20[%c0_122, %c0_123] : memref<1x128xf32, #tpu.memory_space<vmem>>, vector<1x128xf32>
    %347 = vector.broadcast %346 : vector<1x128xf32> to vector<2x128xf32>
    %348 = arith.addf %345, %347 : vector<2x128xf32>
    %c0_124 = arith.constant 0 : index
    %c0_125 = arith.constant 0 : index
    %349 = vector.load %arg21[%c0_124, %c0_125] : memref<128x64xf32, #tpu.memory_space<vmem>>, vector<128x64xf32>
    %cst_126 = arith.constant dense<0.000000e+00> : vector<2x64xf32>
    %350 = tpu.matmul %348, %349, %cst_126 {dimension_numbers = #tpu.dot_dimension_numbers<[1], [0], [0], [1], [0, 0, 1, 1], [], []>} : vector<2x128xf32>, vector<128x64xf32>, vector<2x64xf32> -> vector<2x64xf32>
    %c0_127 = arith.constant 0 : index
    %c0_128 = arith.constant 0 : index
    %351 = vector.load %arg22[%c0_127, %c0_128] : memref<1x64xf32, #tpu.memory_space<vmem>>, vector<1x64xf32>
    %352 = vector.broadcast %351 : vector<1x64xf32> to vector<2x64xf32>
    %353 = arith.addf %350, %352 : vector<2x64xf32>
    %cst_129 = arith.constant 0.000000e+00 : f32
    %354 = vector.broadcast %cst_129 : f32 to vector<2x64xf32>
    %355 = arith.maximumf %353, %354 : vector<2x64xf32>
    %c0_130 = arith.constant 0 : index
    %c0_131 = arith.constant 0 : index
    %356 = vector.load %arg23[%c0_130, %c0_131] : memref<64x32xf32, #tpu.memory_space<vmem>>, vector<64x32xf32>
    %cst_132 = arith.constant dense<0.000000e+00> : vector<2x32xf32>
    %357 = tpu.matmul %355, %356, %cst_132 {dimension_numbers = #tpu.dot_dimension_numbers<[1], [0], [0], [1], [0, 0, 1, 1], [], []>} : vector<2x64xf32>, vector<64x32xf32>, vector<2x32xf32> -> vector<2x32xf32>
    %c0_133 = arith.constant 0 : index
    %c0_134 = arith.constant 0 : index
    %358 = vector.load %arg24[%c0_133, %c0_134] : memref<1x32xf32, #tpu.memory_space<vmem>>, vector<1x32xf32>
    %359 = vector.broadcast %358 : vector<1x32xf32> to vector<2x32xf32>
    %360 = arith.addf %357, %359 : vector<2x32xf32>
    %cst_135 = arith.constant 0.000000e+00 : f32
    %361 = vector.broadcast %cst_135 : f32 to vector<2x32xf32>
    %362 = arith.maximumf %360, %361 : vector<2x32xf32>
    %c0_136 = arith.constant 0 : index
    %c0_137 = arith.constant 0 : index
    %363 = vector.load %arg25[%c0_136, %c0_137] : memref<32x1xf32, #tpu.memory_space<vmem>>, vector<32x1xf32>
    %cst_138 = arith.constant dense<0.000000e+00> : vector<2x1xf32>
    %364 = tpu.matmul %362, %363, %cst_138 {dimension_numbers = #tpu.dot_dimension_numbers<[1], [0], [0], [1], [0, 0, 1, 1], [], []>} : vector<2x32xf32>, vector<32x1xf32>, vector<2x1xf32> -> vector<2x1xf32>
    %c0_139 = arith.constant 0 : index
    %c0_140 = arith.constant 0 : index
    %365 = vector.load %arg26[%c0_139, %c0_140] : memref<1x1xf32, #tpu.memory_space<vmem>>, vector<1x1xf32>
    %366 = vector.broadcast %365 : vector<1x1xf32> to vector<2x1xf32>
    %367 = arith.addf %364, %366 : vector<2x1xf32>
    %cst_141 = arith.constant 0.000000e+00 : f32
    %368 = vector.broadcast %cst_141 : f32 to vector<2x1xf32>
    %369 = arith.maximumf %367, %368 : vector<2x1xf32>
    %c0_142 = arith.constant 0 : index
    %c0_143 = arith.constant 0 : index
    %370 = vector.load %arg27[%c0_142, %c0_143] : memref<2x1xf32, #tpu.memory_space<vmem>>, vector<2x1xf32>
    tpu.vector_store %arg27[%c0_142, %c0_143], %369 {strides = array<i32>} : memref<2x1xf32, #tpu.memory_space<vmem>>, vector<2x1xf32>,
    return
  }
}

</mosaic_0001>

<llo_original>
// kernel: forward.4
$region0: #{forward.4}
  #allocation0 [shape = 'u32[]', space=smem, size = 0x4, offset = 0x4, fixed_abs, tag = 'smem constant byte address 0x4 - core index']
  #allocation1 [shape = 'u32[144,128]{1,0:T(1,128)}', space=vmem, size = 0x12000, scoped, tag = 'internal scratch']
  %s0 = inlined_call_operand.vmem [shape: f32[2,576,25], index: 0, kind: input, shape index: {}]
  %s1 = inlined_call_operand.vmem [shape: f32[25,16], index: 1, kind: input, shape index: {}]
  %s2 = inlined_call_operand.vmem [shape: f32[1,16], index: 2, kind: input, shape index: {}]
  %s3 = inlined_call_operand.vmem [shape: f32[2,144,16], index: 3, kind: output, shape index: {}]
  %s4 = sld [smem:[#allocation0]]
  $region45: #{forward.4} parent=0
    _
  %s6 = ssub.s32 1, %s4
  %s7 = scalar_select 0, %s6, %s4
  loop: start=0, step=1, limit=4
  $region2: #{forward.4} parent=0 // loop_pre_header
    _
  $region3: #{forward.4} parent=0 // loop_header
    %s9 = sphi 0, %s13
    %p10 = scmp.ge.s32.totalorder %s9, 4
    %s19 = sphi 0, %s21
    %s22 = sphi 0, %s19
    %s23 = sphi 0, %s22
    %s39 = sphi 0, %s23
    %s43 = sphi 0, %s43
    %s45 = sphi 0, %s43
    %s46 = sphi 0, %s45
    %s60 = sphi 0, %s46
    %s64 = sphi 0, %s64
    %s66 = sphi 0, %s64
    %s67 = sphi 0, %s66
    %s81 = sphi 0, %s67
    %s87 = sphi 0, %s89
    %s90 = sphi 0, %s87
    %s91 = sphi 0, %s90
    %s107 = sphi 0, %s91
  $region4: #{forward.4} parent=0 // loop_header_branch
    %12 = sbr.rel (%p10) target = $region8
  $region5: #{forward.4} parent=0 // loop_body
    %s14 = ssub.s32 %s9, 1
    %s15 = ssub.s32 %s9, 2
    %s16 = sadd.s32 %s9, 1
    %s17 = ssub.s32 %s9, %s16
    %p18 = scmp.eq.s32.totalorder %s17, 0
    %s20 = sadd.s32 %s19, 1
    %s21 = scalar_select %p18, %s19, %s20
    %p24 = pneg %p18
    %p25 = scmp.eq.s32.totalorder %s9, 1
    %p26 = por %p24, %p25
    %p27 = scmp.ne.s32.totalorder %s19, %s22
    %p28 = scmp.eq.s32.totalorder %s9, 0
    %p29 = por %p27, %p28
    %p30 = scmp.ne.s32.totalorder %s19, %s22
    %p31 = scmp.eq.s32.totalorder %s14, 1
    %p32 = por %p30, %p31
    %p33 = scmp.ne.s32.totalorder %s22, %s23
    %p34 = scmp.eq.s32.totalorder %s14, 0
    %p35 = por %p33, %p34
    %p36 = scmp.ne.s32.totalorder %s22, %s23
    %p37 = scmp.eq.s32.totalorder %s15, 1
    %p38 = por %p36, %p37
    %p40 = scmp.ne.s32.totalorder %s23, %s39
    %p41 = scmp.eq.s32.totalorder %s15, 0
    %p42 = por %p40, %p41
    %s44 = sadd.s32 %s43, 1
    %p47 = scmp.eq.s32.totalorder %s9, 1
    %p48 = scmp.ne.s32.totalorder %s43, %s45
    %p49 = scmp.eq.s32.totalorder %s9, 0
    %p50 = por %p48, %p49
    %p51 = scmp.ne.s32.totalorder %s43, %s45
    %p52 = scmp.eq.s32.totalorder %s14, 1
    %p53 = por %p51, %p52
    %p54 = scmp.ne.s32.totalorder %s45, %s46
    %p55 = scmp.eq.s32.totalorder %s14, 0
    %p56 = por %p54, %p55
    %p57 = scmp.ne.s32.totalorder %s45, %s46
    %p58 = scmp.eq.s32.totalorder %s15, 1
    %p59 = por %p57, %p58
    %p61 = scmp.ne.s32.totalorder %s46, %s60
    %p62 = scmp.eq.s32.totalorder %s15, 0
    %p63 = por %p61, %p62
    %s65 = sadd.s32 %s64, 1
    %p68 = scmp.eq.s32.totalorder %s9, 1
    %p69 = scmp.ne.s32.totalorder %s64, %s66
    %p70 = scmp.eq.s32.totalorder %s9, 0
    %p71 = por %p69, %p70
    %p72 = scmp.ne.s32.totalorder %s64, %s66
    %p73 = scmp.eq.s32.totalorder %s14, 1
    %p74 = por %p72, %p73
    %p75 = scmp.ne.s32.totalorder %s66, %s67
    %p76 = scmp.eq.s32.totalorder %s14, 0
    %p77 = por %p75, %p76
    %p78 = scmp.ne.s32.totalorder %s66, %s67
    %p79 = scmp.eq.s32.totalorder %s15, 1
    %p80 = por %p78, %p79
    %p82 = scmp.ne.s32.totalorder %s67, %s81
    %p83 = scmp.eq.s32.totalorder %s15, 0
    %p84 = por %p82, %p83
    %s85 = ssub.s32 %s9, %s16
    %p86 = scmp.eq.s32.totalorder %s85, 0
    %s88 = sadd.s32 %s87, 1
    %s89 = scalar_select %p86, %s87, %s88
    %p92 = pneg %p86
    %p93 = scmp.eq.s32.totalorder %s9, 1
    %p94 = por %p92, %p93
    %p95 = scmp.ne.s32.totalorder %s87, %s90
    %p96 = scmp.eq.s32.totalorder %s9, 0
    %p97 = por %p95, %p96
    %p98 = scmp.ne.s32.totalorder %s87, %s90
    %p99 = scmp.eq.s32.totalorder %s14, 1
    %p100 = por %p98, %p99
    %p101 = scmp.ne.s32.totalorder %s90, %s91
    %p102 = scmp.eq.s32.totalorder %s14, 0
    %p103 = por %p101, %p102
    %p104 = scmp.ne.s32.totalorder %s90, %s91
    %p105 = scmp.eq.s32.totalorder %s15, 1
    %p106 = por %p104, %p105
    %p108 = scmp.ne.s32.totalorder %s91, %s107
    %p109 = scmp.eq.s32.totalorder %s15, 0
    %p110 = por %p108, %p109
    %p111 = scmp.le.s32.totalorder 1, %s9
    %p112 = scmp.lt.s32.totalorder %s9, 3
    %p113 = pnand %p111, %p112
    %p114 = pneg %p113
    // Predicated region
    $region9: #{forward.4} parent=5 // pred_check
      _
    $region10: #{forward.4} parent=5 // pred_check_branch
      %116 = sbr.rel (%p113) target = $region12
    $region11: #{forward.4} parent=5 // pred_region
      %s117 = ssub.s32 %s9, 1
      // Predicated region
      $region13: #{forward.4} parent=11 // pred_check
        %p118 = pneg %p56
      $region14: #{forward.4} parent=11 // pred_check_branch
        %120 = sbr.rel (%p118) target = $region16
      $region15: #{forward.4} parent=11 // pred_region
        _
      $region16: #{forward.4} parent=11 // pred_fallthru
        _
      // Predicated region
      $region17: #{forward.4} parent=11 // pred_check
        %p121 = pneg %p77
      $region18: #{forward.4} parent=11 // pred_check_branch
        %123 = sbr.rel (%p121) target = $region20
      $region19: #{forward.4} parent=11 // pred_region
        _
      $region20: #{forward.4} parent=11 // pred_fallthru
        _
    $region12: #{forward.4} parent=5 // pred_fallthru
      _
    %p124 = scmp.lt.s32.totalorder %s9, 2
    // Predicated region
    $region21: #{forward.4} parent=5 // pred_check
      %p125 = pneg %p124
    $region22: #{forward.4} parent=5 // pred_check_branch
      %127 = sbr.rel (%p125) target = $region24
    $region23: #{forward.4} parent=5 // pred_region
      // Predicated region
      $region25: #{forward.4} parent=23 // pred_check
        %p128 = pneg %p29
      $region26: #{forward.4} parent=23 // pred_check_branch
        %130 = sbr.rel (%p128) target = $region28
      $region27: #{forward.4} parent=23 // pred_region
        %p131 = scmp.lt.s32.totalorder %s9, 1
        %s132 = scalar_select %p131, %s9, 1
        %s133 = smul.addr %s132, 72
        %s134 = smul.addr %s133, 8
        %s135 = scalar_lea.vmem %s0, %s134
      $region28: #{forward.4} parent=23 // pred_fallthru
        _
    $region24: #{forward.4} parent=5 // pred_fallthru
      _
    %p136 = scmp.le.s32.totalorder 1, %s9
    %p137 = scmp.lt.s32.totalorder %s9, 3
    %p138 = pnand %p136, %p137
    %p139 = pneg %p138
    // Predicated region
    $region29: #{forward.4} parent=5 // pred_check
      _
    $region30: #{forward.4} parent=5 // pred_check_branch
      %141 = sbr.rel (%p138) target = $region32
    $region31: #{forward.4} parent=5 // pred_region
      %s142 = ssub.s32 %s9, 1
      %p143 = scmp.lt.s32.totalorder %s14, 1
      %s144 = scalar_select %p143, %s14, 1
      %s145 = smul.addr %s144, 72
      %s146 = smul.addr %s145, 8
      %s147 = scalar_lea.vmem %s0, %s146
      %p148 = pneg %p35
      %p149 = pneg %p32
      %p150 = pneg %p56
      %p151 = pneg %p53
      %p152 = pneg %p77
      %p153 = pneg %p74
      %p154 = pneg %p103
      %p155 = pneg %p100
      %p156 = scmp.lt.s32.totalorder %s14, 1
      %s157 = scalar_select %p156, %s14, 1
      %s158 = smul.addr %s157, 18
      %s159 = smul.addr %s158, 8
      %s160 = scalar_lea.vmem %s3, %s159
      %p161 = scmp.lt.s32.totalorder %s14, 1
      %s162 = scalar_select %p161, %s14, 1
      %s163 = smul.addr %s162, 72
      %s164 = smul.addr %s163, 8
      %s165 = scalar_lea.vmem %s0, %s164
      %p166 = scmp.lt.s32.totalorder %s14, 1
      %s167 = scalar_select %p166, %s14, 1
      %s168 = smul.addr %s167, 18
      %s169 = smul.addr %s168, 8
      %s170 = scalar_lea.vmem %s3, %s169
      %v171 = vld [vmem:[%s165] sm:$0xff]
      %v172 = vld [vmem:[%s165 + $0x8] sm:$0xff]
      %v173 = vld [vmem:[%s165 + $0x10] sm:$0xff]
      %v174 = vld [vmem:[%s165 + $0x18] sm:$0xff]
      %v175 = vld [vmem:[%s165 + $0x20] sm:$0xff]
      %v176 = vld [vmem:[%s165 + $0x28] sm:$0xff]
      %v177 = vld [vmem:[%s165 + $0x30] sm:$0xff]
      %v178 = vld [vmem:[%s165 + $0x38] sm:$0xff]
      %v179 = vld [vmem:[%s165 + $0x40] sm:$0xff]
      %v180 = vld [vmem:[%s165 + $0x48] sm:$0xff]
      %v181 = vld [vmem:[%s165 + $0x50] sm:$0xff]
      %v182 = vld [vmem:[%s165 + $0x58] sm:$0xff]
      %v183 = vld [vmem:[%s165 + $0x60] sm:$0xff]
      %v184 = vld [vmem:[%s165 + $0x68] sm:$0xff]
      %v185 = vld [vmem:[%s165 + $0x70] sm:$0xff]
      %v186 = vld [vmem:[%s165 + $0x78] sm:$0xff]
      %v187 = vld [vmem:[%s165 + $0x80] sm:$0xff]
      %v188 = vld [vmem:[%s165 + $0x88] sm:$0xff]
      %v189 = vld [vmem:[%s165 + $0x90] sm:$0xff]
      %v190 = vld [vmem:[%s165 + $0x98] sm:$0xff]
      %v191 = vld [vmem:[%s165 + $0xa0] sm:$0xff]
      %v192 = vld [vmem:[%s165 + $0xa8] sm:$0xff]
      %v193 = vld [vmem:[%s165 + $0xb0] sm:$0xff]
      %v194 = vld [vmem:[%s165 + $0xb8] sm:$0xff]
      %v195 = vld [vmem:[%s165 + $0xc0] sm:$0xff]
      %v196 = vld [vmem:[%s165 + $0xc8] sm:$0xff]
      %v197 = vld [vmem:[%s165 + $0xd0] sm:$0xff]
      %v198 = vld [vmem:[%s165 + $0xd8] sm:$0xff]
      %v199 = vld [vmem:[%s165 + $0xe0] sm:$0xff]
      %v200 = vld [vmem:[%s165 + $0xe8] sm:$0xff]
      %v201 = vld [vmem:[%s165 + $0xf0] sm:$0xff]
      %v202 = vld [vmem:[%s165 + $0xf8] sm:$0xff]
      %v203 = vld [vmem:[%s165 + $0x100] sm:$0xff]
      %v204 = vld [vmem:[%s165 + $0x108] sm:$0xff]
      %v205 = vld [vmem:[%s165 + $0x110] sm:$0xff]
      %v206 = vld [vmem:[%s165 + $0x118] sm:$0xff]
      %v207 = vld [vmem:[%s165 + $0x120] sm:$0xff]
      %v208 = vld [vmem:[%s165 + $0x128] sm:$0xff]
      %v209 = vld [vmem:[%s165 + $0x130] sm:$0xff]
      %v210 = vld [vmem:[%s165 + $0x138] sm:$0xff]
      %v211 = vld [vmem:[%s165 + $0x140] sm:$0xff]
      %v212 = vld [vmem:[%s165 + $0x148] sm:$0xff]
      %v213 = vld [vmem:[%s165 + $0x150] sm:$0xff]
      %v214 = vld [vmem:[%s165 + $0x158] sm:$0xff]
      %v215 = vld [vmem:[%s165 + $0x160] sm:$0xff]
      %v216 = vld [vmem:[%s165 + $0x168] sm:$0xff]
      %v217 = vld [vmem:[%s165 + $0x170] sm:$0xff]
      %v218 = vld [vmem:[%s165 + $0x178] sm:$0xff]
      %v219 = vld [vmem:[%s165 + $0x180] sm:$0xff]
      %v220 = vld [vmem:[%s165 + $0x188] sm:$0xff]
      %v221 = vld [vmem:[%s165 + $0x190] sm:$0xff]
      %v222 = vld [vmem:[%s165 + $0x198] sm:$0xff]
      %v223 = vld [vmem:[%s165 + $0x1a0] sm:$0xff]
      %v224 = vld [vmem:[%s165 + $0x1a8] sm:$0xff]
      %v225 = vld [vmem:[%s165 + $0x1b0] sm:$0xff]
      %v226 = vld [vmem:[%s165 + $0x1b8] sm:$0xff]
      %v227 = vld [vmem:[%s165 + $0x1c0] sm:$0xff]
      %v228 = vld [vmem:[%s165 + $0x1c8] sm:$0xff]
      %v229 = vld [vmem:[%s165 + $0x1d0] sm:$0xff]
      %v230 = vld [vmem:[%s165 + $0x1d8] sm:$0xff]
      %v231 = vld [vmem:[%s165 + $0x1e0] sm:$0xff]
      %v232 = vld [vmem:[%s165 + $0x1e8] sm:$0xff]
      %v233 = vld [vmem:[%s165 + $0x1f0] sm:$0xff]
      %v234 = vld [vmem:[%s165 + $0x1f8] sm:$0xff]
      %v235 = vld [vmem:[%s165 + $0x200] sm:$0xff]
      %v236 = vld [vmem:[%s165 + $0x208] sm:$0xff]
      %v237 = vld [vmem:[%s165 + $0x210] sm:$0xff]
      %v238 = vld [vmem:[%s165 + $0x218] sm:$0xff]
      %v239 = vld [vmem:[%s165 + $0x220] sm:$0xff]
      %v240 = vld [vmem:[%s165 + $0x228] sm:$0xff]
      %v241 = vld [vmem:[%s165 + $0x230] sm:$0xff]
      %v242 = vld [vmem:[%s165 + $0x238] sm:$0xff]
      %v243 = vld [vmem:[%s1] sm:$0xff]
      %v244 = vld [vmem:[%s1 + $0x8] sm:$0xff]
      %v245 = vld [vmem:[%s1 + $0x10] sm:$0xff]
      %v246 = vld [vmem:[%s1 + $0x18] sm:$0x1]
      %v247 = vld [vmem:[%s2] sm:$0x1]
      %v249 = vlaneseq
      %v250 = vshrl.u32 %v249, 7
      %v251 = vsub.s32 0, %v250
      %v252 = vrot.slane %v247, %v251
      %vm254 = vcmask 203776
      %v256 = vsel %vm254, %v171, 0
      %v259 = vsel %vm254, %v172, 0
      %v262 = vsel %vm254, %v173, 0
      %v265 = vsel %vm254, %v174, 0
      %v268 = vsel %vm254, %v175, 0
      %v271 = vsel %vm254, %v176, 0
      %v274 = vsel %vm254, %v177, 0
      %v277 = vsel %vm254, %v178, 0
      %v280 = vsel %vm254, %v179, 0
      %v283 = vsel %vm254, %v180, 0
      %v286 = vsel %vm254, %v181, 0
      %v289 = vsel %vm254, %v182, 0
      %v292 = vsel %vm254, %v183, 0
      %v295 = vsel %vm254, %v184, 0
      %v298 = vsel %vm254, %v185, 0
      %v301 = vsel %vm254, %v186, 0
      %v304 = vsel %vm254, %v187, 0
      %v307 = vsel %vm254, %v188, 0
      %v310 = vsel %vm254, %v189, 0
      %v313 = vsel %vm254, %v190, 0
      %v316 = vsel %vm254, %v191, 0
      %v319 = vsel %vm254, %v192, 0
      %v322 = vsel %vm254, %v193, 0
      %v325 = vsel %vm254, %v194, 0
      %v328 = vsel %vm254, %v195, 0
      %v331 = vsel %vm254, %v196, 0
      %v334 = vsel %vm254, %v197, 0
      %v337 = vsel %vm254, %v198, 0
      %v340 = vsel %vm254, %v199, 0
      %v343 = vsel %vm254, %v200, 0
      %v346 = vsel %vm254, %v201, 0
      %v349 = vsel %vm254, %v202, 0
      %v352 = vsel %vm254, %v203, 0
      %v355 = vsel %vm254, %v204, 0
      %v358 = vsel %vm254, %v205, 0
      %v361 = vsel %vm254, %v206, 0
      %v364 = vsel %vm254, %v207, 0
      %v367 = vsel %vm254, %v208, 0
      %v370 = vsel %vm254, %v209, 0
      %v373 = vsel %vm254, %v210, 0
      %v376 = vsel %vm254, %v211, 0
      %v379 = vsel %vm254, %v212, 0
      %v382 = vsel %vm254, %v213, 0
      %v385 = vsel %vm254, %v214, 0
      %v388 = vsel %vm254, %v215, 0
      %v391 = vsel %vm254, %v216, 0
      %v394 = vsel %vm254, %v217, 0
      %v397 = vsel %vm254, %v218, 0
      %v400 = vsel %vm254, %v219, 0
      %v403 = vsel %vm254, %v220, 0
      %v406 = vsel %vm254, %v221, 0
      %v409 = vsel %vm254, %v222, 0
      %v412 = vsel %vm254, %v223, 0
      %v415 = vsel %vm254, %v224, 0
      %v418 = vsel %vm254, %v225, 0
      %v421 = vsel %vm254, %v226, 0
      %v424 = vsel %vm254, %v227, 0
      %v427 = vsel %vm254, %v228, 0
      %v430 = vsel %vm254, %v229, 0
      %v433 = vsel %vm254, %v230, 0
      %v436 = vsel %vm254, %v231, 0
      %v439 = vsel %vm254, %v232, 0
      %v442 = vsel %vm254, %v233, 0
      %v445 = vsel %vm254, %v234, 0
      %v448 = vsel %vm254, %v235, 0
      %v451 = vsel %vm254, %v236, 0
      %v454 = vsel %vm254, %v237, 0
      %v457 = vsel %vm254, %v238, 0
      %v460 = vsel %vm254, %v239, 0
      %v463 = vsel %vm254, %v240, 0
      %v466 = vsel %vm254, %v241, 0
      %v469 = vsel %vm254, %v242, 0
      %vm471 = vcmask 1040384
      %v473 = vsel %vm471, %v246, 0
      %475 = vmatprep.subr.mxu0 0.0
      %476 = vmatpush1.msra.mxu0 %v243
      %477 = vmatprep.subr.mxu0 0.0
      %478 = vmatpush1.msra.mxu0 %v244
      %479 = vmatprep.subr.mxu0 0.0
      %480 = vmatpush1.msra.mxu0 %v245
      %481 = vmatprep.subr.mxu0 0.0
      %482 = vmatpush1.msra.mxu0 %v473
      %483 = vmatprep.subr.mxu0 0.0
      %484 = vmatpush1.msra.mxu0 0.0
      %485 = vmatprep.subr.mxu0 0.0
      %486 = vmatpush1.msra.mxu0 0.0
      %487 = vmatprep.subr.mxu0 0.0
      %488 = vmatpush1.msra.mxu0 0.0
      %489 = vmatprep.subr.mxu0 0.0
      %490 = vmatpush1.msra.mxu0 0.0
      %491 = vmatprep.subr.mxu0 0.0
      %492 = vmatpush1.msra.mxu0 0.0
      %493 = vmatprep.subr.mxu0 0.0
      %494 = vmatpush1.msra.mxu0 0.0
      %495 = vmatprep.subr.mxu0 0.0
      %496 = vmatpush1.msra.mxu0 0.0
      %497 = vmatprep.subr.mxu0 0.0
      %498 = vmatpush1.msra.mxu0 0.0
      %499 = vmatprep.subr.mxu0 0.0
      %500 = vmatpush1.msra.mxu0 0.0
      %501 = vmatprep.subr.mxu0 0.0
      %502 = vmatpush1.msra.mxu0 0.0
      %503 = vmatprep.subr.mxu0 0.0
      %504 = vmatpush1.msra.mxu0 0.0
      %505 = vmatprep.subr.mxu0 0.0
      %506 = vmatpush1.msra.mxu0 0.0
      %507 = vmatprep.subr.mxu0 0.0
      %508 = vmatpush1.msra.mxu0 0.0
      %509 = vmatprep.subr.mxu0 0.0
      %510 = vmatpush1.msra.mxu0 0.0
      %511 = vmatprep.subr.mxu0 0.0
      %512 = vmatpush1.msra.mxu0 0.0
      %513 = vmatprep.subr.mxu0 0.0
      %514 = vmatpush1.msra.mxu0 0.0
      %515 = vmatprep.subr.mxu0 0.0
      %516 = vmatpush1.msra.mxu0 0.0
      %517 = vmatprep.subr.mxu0 0.0
      %518 = vmatpush1.msra.mxu0 0.0
      %519 = vmatprep.subr.mxu0 0.0
      %520 = vmatpush1.msra.mxu0 0.0
      %521 = vmatprep.subr.mxu0 0.0
      %522 = vmatpush1.msra.mxu0 0.0
      %523 = vmatprep.subr.mxu0 0.0
      %524 = vmatpush1.msra.mxu0 0.0
      %525 = vmatprep.subr.mxu0 0.0
      %526 = vmatpush1.msra.mxu0 0.0
      %527 = vmatprep.subr.mxu0 0.0
      %528 = vmatpush1.msra.mxu0 0.0
      %529 = vmatprep.subr.mxu0 0.0
      %530 = vmatpush1.msra.mxu0 0.0
      %531 = vmatprep.subr.mxu0 0.0
      %532 = vmatpush1.msra.mxu0 0.0
      %533 = vmatprep.subr.mxu0 0.0
      %534 = vmatpush1.msra.mxu0 0.0
      %535 = vmatprep.subr.mxu0 0.0
      %536 = vmatpush1.msra.mxu0 0.0
      %537 = vmatprep.subr.mxu0 0.0
      %538 = vmatpush1.msra.mxu0 0.0
      %539 = vmatprep.mubr.f32.mxu0 0.0
      %540 = vmatmul.mubr.f32.gmra.mrb[0].mxu0 %v256
      %v541 = vpop.f32.mrb[0].mxu0
      %v542 = vadd.f32 %v252, %v541
      %v543 = vpop.f32.mrb[0].mxu0
      %544 = vmatprep.mubr.f32.mxu0 0.0
      %545 = vmatmul.mubr.f32.gmra.mrb[0].mxu0 %v259
      %v546 = vpop.f32.mrb[0].mxu0
      %v547 = vadd.f32 %v252, %v546
      %v548 = vpop.f32.mrb[0].mxu0
      %549 = vmatprep.mubr.f32.mxu0 0.0
      %550 = vmatmul.mubr.f32.gmra.mrb[0].mxu0 %v262
      %v551 = vpop.f32.mrb[0].mxu0
      %v552 = vadd.f32 %v252, %v551
      %v553 = vpop.f32.mrb[0].mxu0
      %554 = vmatprep.mubr.f32.mxu0 0.0
      %555 = vmatmul.mubr.f32.gmra.mrb[0].mxu0 %v265
      %v556 = vpop.f32.mrb[0].mxu0
      %v557 = vadd.f32 %v252, %v556
      %v558 = vpop.f32.mrb[0].mxu0
      %559 = vmatprep.mubr.f32.mxu0 0.0
      %560 = vmatmul.mubr.f32.gmra.mrb[0].mxu0 %v268
      %v561 = vpop.f32.mrb[0].mxu0
      %v562 = vadd.f32 %v252, %v561
      %v563 = vpop.f32.mrb[0].mxu0
      %564 = vmatprep.mubr.f32.mxu0 0.0
      %565 = vmatmul.mubr.f32.gmra.mrb[0].mxu0 %v271
      %v566 = vpop.f32.mrb[0].mxu0
      %v567 = vadd.f32 %v252, %v566
      %v568 = vpop.f32.mrb[0].mxu0
      %569 = vmatprep.mubr.f32.mxu0 0.0
      %570 = vmatmul.mubr.f32.gmra.mrb[0].mxu0 %v274
      %v571 = vpop.f32.mrb[0].mxu0
      %v572 = vadd.f32 %v252, %v571
      %v573 = vpop.f32.mrb[0].mxu0
      %574 = vmatprep.mubr.f32.mxu0 0.0
      %575 = vmatmul.mubr.f32.gmra.mrb[0].mxu0 %v277
      %v576 = vpop.f32.mrb[0].mxu0
      %v577 = vadd.f32 %v252, %v576
      %v578 = vpop.f32.mrb[0].mxu0
      %579 = vmatprep.mubr.f32.mxu0 0.0
      %580 = vmatmul.mubr.f32.gmra.mrb[0].mxu0 %v280
      %v581 = vpop.f32.mrb[0].mxu0
      %v582 = vadd.f32 %v252, %v581
      %v583 = vpop.f32.mrb[0].mxu0
      %584 = vmatprep.mubr.f32.mxu0 0.0
      %585 = vmatmul.mubr.f32.gmra.mrb[0].mxu0 %v283
      %v586 = vpop.f32.mrb[0].mxu0
      %v587 = vadd.f32 %v252, %v586
      %v588 = vpop.f32.mrb[0].mxu0
      %589 = vmatprep.mubr.f32.mxu0 0.0
      %590 = vmatmul.mubr.f32.gmra.mrb[0].mxu0 %v286
      %v591 = vpop.f32.mrb[0].mxu0
      %v592 = vadd.f32 %v252, %v591
      %v593 = vpop.f32.mrb[0].mxu0
      %594 = vmatprep.mubr.f32.mxu0 0.0
      %595 = vmatmul.mubr.f32.gmra.mrb[0].mxu0 %v289
      %v596 = vpop.f32.mrb[0].mxu0
      %v597 = vadd.f32 %v252, %v596
      %v598 = vpop.f32.mrb[0].mxu0
      %599 = vmatprep.mubr.f32.mxu0 0.0
      %600 = vmatmul.mubr.f32.gmra.mrb[0].mxu0 %v292
      %v601 = vpop.f32.mrb[0].mxu0
      %v602 = vadd.f32 %v252, %v601
      %v603 = vpop.f32.mrb[0].mxu0
      %604 = vmatprep.mubr.f32.mxu0 0.0
      %605 = vmatmul.mubr.f32.gmra.mrb[0].mxu0 %v295
      %v606 = vpop.f32.mrb[0].mxu0
      %v607 = vadd.f32 %v252, %v606
      %v608 = vpop.f32.mrb[0].mxu0
      %609 = vmatprep.mubr.f32.mxu0 0.0
      %610 = vmatmul.mubr.f32.gmra.mrb[0].mxu0 %v298
      %v611 = vpop.f32.mrb[0].mxu0
      %v612 = vadd.f32 %v252, %v611
      %v613 = vpop.f32.mrb[0].mxu0
      %614 = vmatprep.mubr.f32.mxu0 0.0
      %615 = vmatmul.mubr.f32.gmra.mrb[0].mxu0 %v301
      %v616 = vpop.f32.mrb[0].mxu0
      %v617 = vadd.f32 %v252, %v616
      %v618 = vpop.f32.mrb[0].mxu0
      %619 = vmatprep.mubr.f32.mxu0 0.0
      %620 = vmatmul.mubr.f32.gmra.mrb[0].mxu0 %v304
      %v621 = vpop.f32.mrb[0].mxu0
      %v622 = vadd.f32 %v252, %v621
      %v623 = vpop.f32.mrb[0].mxu0
      %624 = vmatprep.mubr.f32.mxu0 0.0
      %625 = vmatmul.mubr.f32.gmra.mrb[0].mxu0 %v307
      %v626 = vpop.f32.mrb[0].mxu0
      %v627 = vadd.f32 %v252, %v626
      %v628 = vpop.f32.mrb[0].mxu0
      %629 = vmatprep.mubr.f32.mxu0 0.0
      %630 = vmatmul.mubr.f32.gmra.mrb[0].mxu0 %v310
      %v631 = vpop.f32.mrb[0].mxu0
      %v632 = vadd.f32 %v252, %v631
      %v633 = vpop.f32.mrb[0].mxu0
      %634 = vmatprep.mubr.f32.mxu0 0.0
      %635 = vmatmul.mubr.f32.gmra.mrb[0].mxu0 %v313
      %v636 = vpop.f32.mrb[0].mxu0
      %v637 = vadd.f32 %v252, %v636
      %v638 = vpop.f32.mrb[0].mxu0
      %639 = vmatprep.mubr.f32.mxu0 0.0
      %640 = vmatmul.mubr.f32.gmra.mrb[0].mxu0 %v316
      %v641 = vpop.f32.mrb[0].mxu0
      %v642 = vadd.f32 %v252, %v641
      %v643 = vpop.f32.mrb[0].mxu0
      %644 = vmatprep.mubr.f32.mxu0 0.0
      %645 = vmatmul.mubr.f32.gmra.mrb[0].mxu0 %v319
      %v646 = vpop.f32.mrb[0].mxu0
      %v647 = vadd.f32 %v252, %v646
      %v648 = vpop.f32.mrb[0].mxu0
      %649 = vmatprep.mubr.f32.mxu0 0.0
      %650 = vmatmul.mubr.f32.gmra.mrb[0].mxu0 %v322
      %v651 = vpop.f32.mrb[0].mxu0
      %v652 = vadd.f32 %v252, %v651
      %v653 = vpop.f32.mrb[0].mxu0
      %654 = vmatprep.mubr.f32.mxu0 0.0
      %655 = vmatmul.mubr.f32.gmra.mrb[0].mxu0 %v325
      %v656 = vpop.f32.mrb[0].mxu0
      %v657 = vadd.f32 %v252, %v656
      %v658 = vpop.f32.mrb[0].mxu0
      %659 = vmatprep.mubr.f32.mxu0 0.0
      %660 = vmatmul.mubr.f32.gmra.mrb[0].mxu0 %v328
      %v661 = vpop.f32.mrb[0].mxu0
      %v662 = vadd.f32 %v252, %v661
      %v663 = vpop.f32.mrb[0].mxu0
      %664 = vmatprep.mubr.f32.mxu0 0.0
      %665 = vmatmul.mubr.f32.gmra.mrb[0].mxu0 %v331
      %v666 = vpop.f32.mrb[0].mxu0
      %v667 = vadd.f32 %v252, %v666
      %v668 = vpop.f32.mrb[0].mxu0
      %669 = vmatprep.mubr.f32.mxu0 0.0
      %670 = vmatmul.mubr.f32.gmra.mrb[0].mxu0 %v334
      %v671 = vpop.f32.mrb[0].mxu0
      %v672 = vadd.f32 %v252, %v671
      %v673 = vpop.f32.mrb[0].mxu0
      %674 = vmatprep.mubr.f32.mxu0 0.0
      %675 = vmatmul.mubr.f32.gmra.mrb[0].mxu0 %v337
      %v676 = vpop.f32.mrb[0].mxu0
      %v677 = vadd.f32 %v252, %v676
      %v678 = vpop.f32.mrb[0].mxu0
      %679 = vmatprep.mubr.f32.mxu0 0.0
      %680 = vmatmul.mubr.f32.gmra.mrb[0].mxu0 %v340
      %v681 = vpop.f32.mrb[0].mxu0
      %v682 = vadd.f32 %v252, %v681
      %v683 = vpop.f32.mrb[0].mxu0
      %684 = vmatprep.mubr.f32.mxu0 0.0
      %685 = vmatmul.mubr.f32.gmra.mrb[0].mxu0 %v343
      %v686 = vpop.f32.mrb[0].mxu0
      %v687 = vadd.f32 %v252, %v686
      %v688 = vpop.f32.mrb[0].mxu0
      %689 = vmatprep.mubr.f32.mxu0 0.0
      %690 = vmatmul.mubr.f32.gmra.mrb[0].mxu0 %v346
      %v691 = vpop.f32.mrb[0].mxu0
      %v692 = vadd.f32 %v252, %v691
      %v693 = vpop.f32.mrb[0].mxu0
      %694 = vmatprep.mubr.f32.mxu0 0.0
      %695 = vmatmul.mubr.f32.gmra.mrb[0].mxu0 %v349
      %v696 = vpop.f32.mrb[0].mxu0
      %v697 = vadd.f32 %v252, %v696
      %v698 = vpop.f32.mrb[0].mxu0
      %699 = vmatprep.mubr.f32.mxu0 0.0
      %700 = vmatmul.mubr.f32.gmra.mrb[0].mxu0 %v352
      %v701 = vpop.f32.mrb[0].mxu0
      %v702 = vadd.f32 %v252, %v701
      %v703 = vpop.f32.mrb[0].mxu0
      %704 = vmatprep.mubr.f32.mxu0 0.0
      %705 = vmatmul.mubr.f32.gmra.mrb[0].mxu0 %v355
      %v706 = vpop.f32.mrb[0].mxu0
      %v707 = vadd.f32 %v252, %v706
      %v708 = vpop.f32.mrb[0].mxu0
      %709 = vmatprep.mubr.f32.mxu0 0.0
      %710 = vmatmul.mubr.f32.gmra.mrb[0].mxu0 %v358
      %v711 = vpop.f32.mrb[0].mxu0
      %v712 = vadd.f32 %v252, %v711
      %v713 = vpop.f32.mrb[0].mxu0
      %714 = vmatprep.mubr.f32.mxu0 0.0
      %715 = vmatmul.mubr.f32.gmra.mrb[0].mxu0 %v361
      %v716 = vpop.f32.mrb[0].mxu0
      %v717 = vadd.f32 %v252, %v716
      %v718 = vpop.f32.mrb[0].mxu0
      %719 = vmatprep.mubr.f32.mxu0 0.0
      %720 = vmatmul.mubr.f32.gmra.mrb[0].mxu0 %v364
      %v721 = vpop.f32.mrb[0].mxu0
      %v722 = vadd.f32 %v252, %v721
      %v723 = vpop.f32.mrb[0].mxu0
      %724 = vmatprep.mubr.f32.mxu0 0.0
      %725 = vmatmul.mubr.f32.gmra.mrb[0].mxu0 %v367
      %v726 = vpop.f32.mrb[0].mxu0
      %v727 = vadd.f32 %v252, %v726
      %v728 = vpop.f32.mrb[0].mxu0
      %729 = vmatprep.mubr.f32.mxu0 0.0
      %730 = vmatmul.mubr.f32.gmra.mrb[0].mxu0 %v370
      %v731 = vpop.f32.mrb[0].mxu0
      %v732 = vadd.f32 %v252, %v731
      %v733 = vpop.f32.mrb[0].mxu0
      %734 = vmatprep.mubr.f32.mxu0 0.0
      %735 = vmatmul.mubr.f32.gmra.mrb[0].mxu0 %v373
      %v736 = vpop.f32.mrb[0].mxu0
      %v737 = vadd.f32 %v252, %v736
      %v738 = vpop.f32.mrb[0].mxu0
      %739 = vmatprep.mubr.f32.mxu0 0.0
      %740 = vmatmul.mubr.f32.gmra.mrb[0].mxu0 %v376
      %v741 = vpop.f32.mrb[0].mxu0
      %v742 = vadd.f32 %v252, %v741
      %v743 = vpop.f32.mrb[0].mxu0
      %744 = vmatprep.mubr.f32.mxu0 0.0
      %745 = vmatmul.mubr.f32.gmra.mrb[0].mxu0 %v379
      %v746 = vpop.f32.mrb[0].mxu0
      %v747 = vadd.f32 %v252, %v746
      %v748 = vpop.f32.mrb[0].mxu0
      %749 = vmatprep.mubr.f32.mxu0 0.0
      %750 = vmatmul.mubr.f32.gmra.mrb[0].mxu0 %v382
      %v751 = vpop.f32.mrb[0].mxu0
      %v752 = vadd.f32 %v252, %v751
      %v753 = vpop.f32.mrb[0].mxu0
      %754 = vmatprep.mubr.f32.mxu0 0.0
      %755 = vmatmul.mubr.f32.gmra.mrb[0].mxu0 %v385
      %v756 = vpop.f32.mrb[0].mxu0
      %v757 = vadd.f32 %v252, %v756
      %v758 = vpop.f32.mrb[0].mxu0
      %759 = vmatprep.mubr.f32.mxu0 0.0
      %760 = vmatmul.mubr.f32.gmra.mrb[0].mxu0 %v388
      %v761 = vpop.f32.mrb[0].mxu0
      %v762 = vadd.f32 %v252, %v761
      %v763 = vpop.f32.mrb[0].mxu0
      %764 = vmatprep.mubr.f32.mxu0 0.0
      %765 = vmatmul.mubr.f32.gmra.mrb[0].mxu0 %v391
      %v766 = vpop.f32.mrb[0].mxu0
      %v767 = vadd.f32 %v252, %v766
      %v768 = vpop.f32.mrb[0].mxu0
      %769 = vmatprep.mubr.f32.mxu0 0.0
      %770 = vmatmul.mubr.f32.gmra.mrb[0].mxu0 %v394
      %v771 = vpop.f32.mrb[0].mxu0
      %v772 = vadd.f32 %v252, %v771
      %v773 = vpop.f32.mrb[0].mxu0
      %774 = vmatprep.mubr.f32.mxu0 0.0
      %775 = vmatmul.mubr.f32.gmra.mrb[0].mxu0 %v397
      %v776 = vpop.f32.mrb[0].mxu0
      %v777 = vadd.f32 %v252, %v776
      %v778 = vpop.f32.mrb[0].mxu0
      %779 = vmatprep.mubr.f32.mxu0 0.0
      %780 = vmatmul.mubr.f32.gmra.mrb[0].mxu0 %v400
      %v781 = vpop.f32.mrb[0].mxu0
      %v782 = vadd.f32 %v252, %v781
      %v783 = vpop.f32.mrb[0].mxu0
      %784 = vmatprep.mubr.f32.mxu0 0.0
      %785 = vmatmul.mubr.f32.gmra.mrb[0].mxu0 %v403
      %v786 = vpop.f32.mrb[0].mxu0
      %v787 = vadd.f32 %v252, %v786
      %v788 = vpop.f32.mrb[0].mxu0
      %789 = vmatprep.mubr.f32.mxu0 0.0
      %790 = vmatmul.mubr.f32.gmra.mrb[0].mxu0 %v406
      %v791 = vpop.f32.mrb[0].mxu0
      %v792 = vadd.f32 %v252, %v791
      %v793 = vpop.f32.mrb[0].mxu0
      %794 = vmatprep.mubr.f32.mxu0 0.0
      %795 = vmatmul.mubr.f32.gmra.mrb[0].mxu0 %v409
      %v796 = vpop.f32.mrb[0].mxu0
      %v797 = vadd.f32 %v252, %v796
      %v798 = vpop.f32.mrb[0].mxu0
      %799 = vmatprep.mubr.f32.mxu0 0.0
      %800 = vmatmul.mubr.f32.gmra.mrb[0].mxu0 %v412
      %v801 = vpop.f32.mrb[0].mxu0
      %v802 = vadd.f32 %v252, %v801
      %v803 = vpop.f32.mrb[0].mxu0
      %804 = vmatprep.mubr.f32.mxu0 0.0
      %805 = vmatmul.mubr.f32.gmra.mrb[0].mxu0 %v415
      %v806 = vpop.f32.mrb[0].mxu0
      %v807 = vadd.f32 %v252, %v806
      %v808 = vpop.f32.mrb[0].mxu0
      %809 = vmatprep.mubr.f32.mxu0 0.0
      %810 = vmatmul.mubr.f32.gmra.mrb[0].mxu0 %v418
      %v811 = vpop.f32.mrb[0].mxu0
      %v812 = vadd.f32 %v252, %v811
      %v813 = vpop.f32.mrb[0].mxu0
      %814 = vmatprep.mubr.f32.mxu0 0.0
      %815 = vmatmul.mubr.f32.gmra.mrb[0].mxu0 %v421
      %v816 = vpop.f32.mrb[0].mxu0
      %v817 = vadd.f32 %v252, %v816
      %v818 = vpop.f32.mrb[0].mxu0
      %819 = vmatprep.mubr.f32.mxu0 0.0
      %820 = vmatmul.mubr.f32.gmra.mrb[0].mxu0 %v424
      %v821 = vpop.f32.mrb[0].mxu0
      %v822 = vadd.f32 %v252, %v821
      %v823 = vpop.f32.mrb[0].mxu0
      %824 = vmatprep.mubr.f32.mxu0 0.0
      %825 = vmatmul.mubr.f32.gmra.mrb[0].mxu0 %v427
      %v826 = vpop.f32.mrb[0].mxu0
      %v827 = vadd.f32 %v252, %v826
      %v828 = vpop.f32.mrb[0].mxu0
      %829 = vmatprep.mubr.f32.mxu0 0.0
      %830 = vmatmul.mubr.f32.gmra.mrb[0].mxu0 %v430
      %v831 = vpop.f32.mrb[0].mxu0
      %v832 = vadd.f32 %v252, %v831
      %v833 = vpop.f32.mrb[0].mxu0
      %834 = vmatprep.mubr.f32.mxu0 0.0
      %835 = vmatmul.mubr.f32.gmra.mrb[0].mxu0 %v433
      %v836 = vpop.f32.mrb[0].mxu0
      %v837 = vadd.f32 %v252, %v836
      %v838 = vpop.f32.mrb[0].mxu0
      %839 = vmatprep.mubr.f32.mxu0 0.0
      %840 = vmatmul.mubr.f32.gmra.mrb[0].mxu0 %v436
      %v841 = vpop.f32.mrb[0].mxu0
      %v842 = vadd.f32 %v252, %v841
      %v843 = vpop.f32.mrb[0].mxu0
      %844 = vmatprep.mubr.f32.mxu0 0.0
      %845 = vmatmul.mubr.f32.gmra.mrb[0].mxu0 %v439
      %v846 = vpop.f32.mrb[0].mxu0
      %v847 = vadd.f32 %v252, %v846
      %v848 = vpop.f32.mrb[0].mxu0
      %849 = vmatprep.mubr.f32.mxu0 0.0
      %850 = vmatmul.mubr.f32.gmra.mrb[0].mxu0 %v442
      %v851 = vpop.f32.mrb[0].mxu0
      %v852 = vadd.f32 %v252, %v851
      %v853 = vpop.f32.mrb[0].mxu0
      %854 = vmatprep.mubr.f32.mxu0 0.0
      %855 = vmatmul.mubr.f32.gmra.mrb[0].mxu0 %v445
      %v856 = vpop.f32.mrb[0].mxu0
      %v857 = vadd.f32 %v252, %v856
      %v858 = vpop.f32.mrb[0].mxu0
      %859 = vmatprep.mubr.f32.mxu0 0.0
      %860 = vmatmul.mubr.f32.gmra.mrb[0].mxu0 %v448
      %v861 = vpop.f32.mrb[0].mxu0
      %v862 = vadd.f32 %v252, %v861
      %v863 = vpop.f32.mrb[0].mxu0
      %864 = vmatprep.mubr.f32.mxu0 0.0
      %865 = vmatmul.mubr.f32.gmra.mrb[0].mxu0 %v451
      %v866 = vpop.f32.mrb[0].mxu0
      %v867 = vadd.f32 %v252, %v866
      %v868 = vpop.f32.mrb[0].mxu0
      %869 = vmatprep.mubr.f32.mxu0 0.0
      %870 = vmatmul.mubr.f32.gmra.mrb[0].mxu0 %v454
      %v871 = vpop.f32.mrb[0].mxu0
      %v872 = vadd.f32 %v252, %v871
      %v873 = vpop.f32.mrb[0].mxu0
      %874 = vmatprep.mubr.f32.mxu0 0.0
      %875 = vmatmul.mubr.f32.gmra.mrb[0].mxu0 %v457
      %v876 = vpop.f32.mrb[0].mxu0
      %v877 = vadd.f32 %v252, %v876
      %v878 = vpop.f32.mrb[0].mxu0
      %879 = vmatprep.mubr.f32.mxu0 0.0
      %880 = vmatmul.mubr.f32.gmra.mrb[0].mxu0 %v460
      %v881 = vpop.f32.mrb[0].mxu0
      %v882 = vadd.f32 %v252, %v881
      %v883 = vpop.f32.mrb[0].mxu0
      %884 = vmatprep.mubr.f32.mxu0 0.0
      %885 = vmatmul.mubr.f32.gmra.mrb[0].mxu0 %v463
      %v886 = vpop.f32.mrb[0].mxu0
      %v887 = vadd.f32 %v252, %v886
      %v888 = vpop.f32.mrb[0].mxu0
      %889 = vmatprep.mubr.f32.mxu0 0.0
      %890 = vmatmul.mubr.f32.gmra.mrb[0].mxu0 %v466
      %v891 = vpop.f32.mrb[0].mxu0
      %v892 = vadd.f32 %v252, %v891
      %v893 = vpop.f32.mrb[0].mxu0
      %894 = vmatprep.mubr.f32.mxu0 0.0
      %895 = vmatmul.mubr.f32.gmra.mrb[0].mxu0 %v469
      %v896 = vpop.f32.mrb[0].mxu0
      %v897 = vadd.f32 %v252, %v896
      %v898 = vpop.f32.mrb[0].mxu0
      %899 = vdwg.mxu0
      %v900 = vmax.f32 %v542, 0.0
      %v901 = vmax.f32 %v547, 0.0
      %v902 = vmax.f32 %v552, 0.0
      %v903 = vmax.f32 %v557, 0.0
      %v904 = vmax.f32 %v562, 0.0
      %v905 = vmax.f32 %v567, 0.0
      %v906 = vmax.f32 %v572, 0.0
      %v907 = vmax.f32 %v577, 0.0
      %v908 = vmax.f32 %v582, 0.0
      %v909 = vmax.f32 %v587, 0.0
      %v910 = vmax.f32 %v592, 0.0
      %v911 = vmax.f32 %v597, 0.0
      %v912 = vmax.f32 %v602, 0.0
      %v913 = vmax.f32 %v607, 0.0
      %v914 = vmax.f32 %v612, 0.0
      %v915 = vmax.f32 %v617, 0.0
      %v916 = vmax.f32 %v622, 0.0
      %v917 = vmax.f32 %v627, 0.0
      %v918 = vmax.f32 %v632, 0.0
      %v919 = vmax.f32 %v637, 0.0
      %v920 = vmax.f32 %v642, 0.0
      %v921 = vmax.f32 %v647, 0.0
      %v922 = vmax.f32 %v652, 0.0
      %v923 = vmax.f32 %v657, 0.0
      %v924 = vmax.f32 %v662, 0.0
      %v925 = vmax.f32 %v667, 0.0
      %v926 = vmax.f32 %v672, 0.0
      %v927 = vmax.f32 %v677, 0.0
      %v928 = vmax.f32 %v682, 0.0
      %v929 = vmax.f32 %v687, 0.0
      %v930 = vmax.f32 %v692, 0.0
      %v931 = vmax.f32 %v697, 0.0
      %v932 = vmax.f32 %v702, 0.0
      %v933 = vmax.f32 %v707, 0.0
      %v934 = vmax.f32 %v712, 0.0
      %v935 = vmax.f32 %v717, 0.0
      %v936 = vmax.f32 %v722, 0.0
      %v937 = vmax.f32 %v727, 0.0
      %v938 = vmax.f32 %v732, 0.0
      %v939 = vmax.f32 %v737, 0.0
      %v940 = vmax.f32 %v742, 0.0
      %v941 = vmax.f32 %v747, 0.0
      %v942 = vmax.f32 %v752, 0.0
      %v943 = vmax.f32 %v757, 0.0
      %v944 = vmax.f32 %v762, 0.0
      %v945 = vmax.f32 %v767, 0.0
      %v946 = vmax.f32 %v772, 0.0
      %v947 = vmax.f32 %v777, 0.0
      %v948 = vmax.f32 %v782, 0.0
      %v949 = vmax.f32 %v787, 0.0
      %v950 = vmax.f32 %v792, 0.0
      %v951 = vmax.f32 %v797, 0.0
      %v952 = vmax.f32 %v802, 0.0
      %v953 = vmax.f32 %v807, 0.0
      %v954 = vmax.f32 %v812, 0.0
      %v955 = vmax.f32 %v817, 0.0
      %v956 = vmax.f32 %v822, 0.0
      %v957 = vmax.f32 %v827, 0.0
      %v958 = vmax.f32 %v832, 0.0
      %v959 = vmax.f32 %v837, 0.0
      %v960 = vmax.f32 %v842, 0.0
      %v961 = vmax.f32 %v847, 0.0
      %v962 = vmax.f32 %v852, 0.0
      %v963 = vmax.f32 %v857, 0.0
      %v964 = vmax.f32 %v862, 0.0
      %v965 = vmax.f32 %v867, 0.0
      %v966 = vmax.f32 %v872, 0.0
      %v967 = vmax.f32 %v877, 0.0
      %v968 = vmax.f32 %v882, 0.0
      %v969 = vmax.f32 %v887, 0.0
      %v970 = vmax.f32 %v892, 0.0
      %v971 = vmax.f32 %v897, 0.0
      %v972 = vmax.f32 %v900, %v918
      %v973 = vmax.f32 %v901, %v919
      %v974 = vmax.f32 %v902, %v920
      %v975 = vmax.f32 %v903, %v921
      %v976 = vmax.f32 %v904, %v922
      %v977 = vmax.f32 %v905, %v923
      %v978 = vmax.f32 %v906, %v924
      %v979 = vmax.f32 %v907, %v925
      %v980 = vmax.f32 %v908, %v926
      %v981 = vmax.f32 %v909, %v927
      %v982 = vmax.f32 %v910, %v928
      %v983 = vmax.f32 %v911, %v929
      %v984 = vmax.f32 %v912, %v930
      %v985 = vmax.f32 %v913, %v931
      %v986 = vmax.f32 %v914, %v932
      %v987 = vmax.f32 %v915, %v933
      %v988 = vmax.f32 %v916, %v934
      %v989 = vmax.f32 %v917, %v935
      %v990 = vmax.f32 %v936, %v954
      %v991 = vmax.f32 %v937, %v955
      %v992 = vmax.f32 %v938, %v956
      %v993 = vmax.f32 %v939, %v957
      %v994 = vmax.f32 %v940, %v958
      %v995 = vmax.f32 %v941, %v959
      %v996 = vmax.f32 %v942, %v960
      %v997 = vmax.f32 %v943, %v961
      %v998 = vmax.f32 %v944, %v962
      %v999 = vmax.f32 %v945, %v963
      %v1000 = vmax.f32 %v946, %v964
      %v1001 = vmax.f32 %v947, %v965
      %v1002 = vmax.f32 %v948, %v966
      %v1003 = vmax.f32 %v949, %v967
      %v1004 = vmax.f32 %v950, %v968
      %v1005 = vmax.f32 %v951, %v969
      %v1006 = vmax.f32 %v952, %v970
      %v1007 = vmax.f32 %v953, %v971
      %v1008 = vmax.f32 %v972, %v990
      %v1009 = vmax.f32 %v973, %v991
      %v1010 = vmax.f32 %v974, %v992
      %v1011 = vmax.f32 %v975, %v993
      %v1012 = vmax.f32 %v976, %v994
      %v1013 = vmax.f32 %v977, %v995
      %v1014 = vmax.f32 %v978, %v996
      %v1015 = vmax.f32 %v979, %v997
      %v1016 = vmax.f32 %v980, %v998
      %v1017 = vmax.f32 %v981, %v999
      %v1018 = vmax.f32 %v982, %v1000
      %v1019 = vmax.f32 %v983, %v1001
      %v1020 = vmax.f32 %v984, %v1002
      %v1021 = vmax.f32 %v985, %v1003
      %v1022 = vmax.f32 %v986, %v1004
      %v1023 = vmax.f32 %v987, %v1005
      %v1024 = vmax.f32 %v988, %v1006
      %v1025 = vmax.f32 %v989, %v1007
      %vm1026 = vcmask 130048
      %1027 = vst.msk [vmem:[%s170] sm:$0xff] %vm1026, %v1008
      %1028 = vst.msk [vmem:[%s170 + $0x8] sm:$0xff] %vm1026, %v1009
      %1029 = vst.msk [vmem:[%s170 + $0x10] sm:$0xff] %vm1026, %v1010
      %1030 = vst.msk [vmem:[%s170 + $0x18] sm:$0xff] %vm1026, %v1011
      %1031 = vst.msk [vmem:[%s170 + $0x20] sm:$0xff] %vm1026, %v1012
      %1032 = vst.msk [vmem:[%s170 + $0x28] sm:$0xff] %vm1026, %v1013
      %1033 = vst.msk [vmem:[%s170 + $0x30] sm:$0xff] %vm1026, %v1014
      %1034 = vst.msk [vmem:[%s170 + $0x38] sm:$0xff] %vm1026, %v1015
      %1035 = vst.msk [vmem:[%s170 + $0x40] sm:$0xff] %vm1026, %v1016
      %1036 = vst.msk [vmem:[%s170 + $0x48] sm:$0xff] %vm1026, %v1017
      %1037 = vst.msk [vmem:[%s170 + $0x50] sm:$0xff] %vm1026, %v1018
      %1038 = vst.msk [vmem:[%s170 + $0x58] sm:$0xff] %vm1026, %v1019
      %1039 = vst.msk [vmem:[%s170 + $0x60] sm:$0xff] %vm1026, %v1020
      %1040 = vst.msk [vmem:[%s170 + $0x68] sm:$0xff] %vm1026, %v1021
      %1041 = vst.msk [vmem:[%s170 + $0x70] sm:$0xff] %vm1026, %v1022
      %1042 = vst.msk [vmem:[%s170 + $0x78] sm:$0xff] %vm1026, %v1023
      %1043 = vst.msk [vmem:[%s170 + $0x80] sm:$0xff] %vm1026, %v1024
      %1044 = vst.msk [vmem:[%s170 + $0x88] sm:$0xff] %vm1026, %v1025
      %p1045 = scmp.lt.s32.totalorder %s14, 1
      %s1046 = scalar_select %p1045, %s14, 1
      %s1047 = smul.addr %s1046, 18
      %s1048 = smul.addr %s1047, 8
      %s1049 = scalar_lea.vmem %s3, %s1048
      // Predicated region
      $region33: #{forward.4} parent=31 // pred_check
        %p1050 = pneg %p100
      $region34: #{forward.4} parent=31 // pred_check_branch
        %1052 = sbr.rel (%p1050) target = $region36
      $region35: #{forward.4} parent=31 // pred_region
        _
      $region36: #{forward.4} parent=31 // pred_fallthru
        _
    $region32: #{forward.4} parent=5 // pred_fallthru
      _
    %p1053 = scmp.le.s32.totalorder 2, %s9
    // Predicated region
    $region37: #{forward.4} parent=5 // pred_check
      %p1054 = pneg %p1053
    $region38: #{forward.4} parent=5 // pred_check_branch
      %1056 = sbr.rel (%p1054) target = $region40
    $region39: #{forward.4} parent=5 // pred_region
      %s1057 = ssub.s32 %s9, 2
      // Predicated region
      $region41: #{forward.4} parent=39 // pred_check
        %p1058 = pneg %p106
      $region42: #{forward.4} parent=39 // pred_check_branch
        %1060 = sbr.rel (%p1058) target = $region44
      $region43: #{forward.4} parent=39 // pred_region
        %p1061 = scmp.lt.s32.totalorder %s15, 1
        %s1062 = scalar_select %p1061, %s15, 1
        %s1063 = smul.addr %s1062, 18
        %s1064 = smul.addr %s1063, 8
        %s1065 = scalar_lea.vmem %s3, %s1064
      $region44: #{forward.4} parent=39 // pred_fallthru
        _
    $region40: #{forward.4} parent=5 // pred_fallthru
      _
  $region6: #{forward.4} parent=0 // loop_footer
    %s13 = sadd.s32 1, %s9
  $region7: #{forward.4} parent=0 // loop_footer_branch
    %8 = sbr.rel target = $region3
  $region8: #{forward.4} parent=0 // loop_exit
    _

// kernel: forward.5
$region0: #{forward.5}
  #allocation0 [shape = 'u32[]', space=smem, size = 0x4, offset = 0x4, fixed_abs, tag = 'smem constant byte address 0x4 - core index']
  #allocation1 [shape = 'u32[144,128]{1,0:T(1,128)}', space=vmem, size = 0x12000, scoped, tag = 'internal scratch']
  %s0 = inlined_call_operand.vmem [shape: f32[2,144,400], index: 0, kind: input, shape index: {}]
  %s1 = inlined_call_operand.vmem [shape: f32[400,32], index: 1, kind: input, shape index: {}]
  %s2 = inlined_call_operand.vmem [shape: f32[1,32], index: 2, kind: input, shape index: {}]
  %s3 = inlined_call_operand.vmem [shape: f32[2,36,32], index: 3, kind: output, shape index: {}]
  %s4 = sld [smem:[#allocation0]]
  $region45: #{forward.5} parent=0
    _
  %s6 = ssub.s32 1, %s4
  %s7 = scalar_select 0, %s6, %s4
  loop: start=0, step=1, limit=4
  $region2: #{forward.5} parent=0 // loop_pre_header
    _
  $region3: #{forward.5} parent=0 // loop_header
    %s9 = sphi 0, %s13
    %p10 = scmp.ge.s32.totalorder %s9, 4
    %s19 = sphi 0, %s21
    %s22 = sphi 0, %s19
    %s23 = sphi 0, %s22
    %s39 = sphi 0, %s23
    %s43 = sphi 0, %s43
    %s45 = sphi 0, %s43
    %s46 = sphi 0, %s45
    %s60 = sphi 0, %s46
    %s64 = sphi 0, %s64
    %s66 = sphi 0, %s64
    %s67 = sphi 0, %s66
    %s81 = sphi 0, %s67
    %s87 = sphi 0, %s89
    %s90 = sphi 0, %s87
    %s91 = sphi 0, %s90
    %s107 = sphi 0, %s91
  $region4: #{forward.5} parent=0 // loop_header_branch
    %12 = sbr.rel (%p10) target = $region8
  $region5: #{forward.5} parent=0 // loop_body
    %s14 = ssub.s32 %s9, 1
    %s15 = ssub.s32 %s9, 2
    %s16 = sadd.s32 %s9, 1
    %s17 = ssub.s32 %s9, %s16
    %p18 = scmp.eq.s32.totalorder %s17, 0
    %s20 = sadd.s32 %s19, 1
    %s21 = scalar_select %p18, %s19, %s20
    %p24 = pneg %p18
    %p25 = scmp.eq.s32.totalorder %s9, 1
    %p26 = por %p24, %p25
    %p27 = scmp.ne.s32.totalorder %s19, %s22
    %p28 = scmp.eq.s32.totalorder %s9, 0
    %p29 = por %p27, %p28
    %p30 = scmp.ne.s32.totalorder %s19, %s22
    %p31 = scmp.eq.s32.totalorder %s14, 1
    %p32 = por %p30, %p31
    %p33 = scmp.ne.s32.totalorder %s22, %s23
    %p34 = scmp.eq.s32.totalorder %s14, 0
    %p35 = por %p33, %p34
    %p36 = scmp.ne.s32.totalorder %s22, %s23
    %p37 = scmp.eq.s32.totalorder %s15, 1
    %p38 = por %p36, %p37
    %p40 = scmp.ne.s32.totalorder %s23, %s39
    %p41 = scmp.eq.s32.totalorder %s15, 0
    %p42 = por %p40, %p41
    %s44 = sadd.s32 %s43, 1
    %p47 = scmp.eq.s32.totalorder %s9, 1
    %p48 = scmp.ne.s32.totalorder %s43, %s45
    %p49 = scmp.eq.s32.totalorder %s9, 0
    %p50 = por %p48, %p49
    %p51 = scmp.ne.s32.totalorder %s43, %s45
    %p52 = scmp.eq.s32.totalorder %s14, 1
    %p53 = por %p51, %p52
    %p54 = scmp.ne.s32.totalorder %s45, %s46
    %p55 = scmp.eq.s32.totalorder %s14, 0
    %p56 = por %p54, %p55
    %p57 = scmp.ne.s32.totalorder %s45, %s46
    %p58 = scmp.eq.s32.totalorder %s15, 1
    %p59 = por %p57, %p58
    %p61 = scmp.ne.s32.totalorder %s46, %s60
    %p62 = scmp.eq.s32.totalorder %s15, 0
    %p63 = por %p61, %p62
    %s65 = sadd.s32 %s64, 1
    %p68 = scmp.eq.s32.totalorder %s9, 1
    %p69 = scmp.ne.s32.totalorder %s64, %s66
    %p70 = scmp.eq.s32.totalorder %s9, 0
    %p71 = por %p69, %p70
    %p72 = scmp.ne.s32.totalorder %s64, %s66
    %p73 = scmp.eq.s32.totalorder %s14, 1
    %p74 = por %p72, %p73
    %p75 = scmp.ne.s32.totalorder %s66, %s67
    %p76 = scmp.eq.s32.totalorder %s14, 0
    %p77 = por %p75, %p76
    %p78 = scmp.ne.s32.totalorder %s66, %s67
    %p79 = scmp.eq.s32.totalorder %s15, 1
    %p80 = por %p78, %p79
    %p82 = scmp.ne.s32.totalorder %s67, %s81
    %p83 = scmp.eq.s32.totalorder %s15, 0
    %p84 = por %p82, %p83
    %s85 = ssub.s32 %s9, %s16
    %p86 = scmp.eq.s32.totalorder %s85, 0
    %s88 = sadd.s32 %s87, 1
    %s89 = scalar_select %p86, %s87, %s88
    %p92 = pneg %p86
    %p93 = scmp.eq.s32.totalorder %s9, 1
    %p94 = por %p92, %p93
    %p95 = scmp.ne.s32.totalorder %s87, %s90
    %p96 = scmp.eq.s32.totalorder %s9, 0
    %p97 = por %p95, %p96
    %p98 = scmp.ne.s32.totalorder %s87, %s90
    %p99 = scmp.eq.s32.totalorder %s14, 1
    %p100 = por %p98, %p99
    %p101 = scmp.ne.s32.totalorder %s90, %s91
    %p102 = scmp.eq.s32.totalorder %s14, 0
    %p103 = por %p101, %p102
    %p104 = scmp.ne.s32.totalorder %s90, %s91
    %p105 = scmp.eq.s32.totalorder %s15, 1
    %p106 = por %p104, %p105
    %p108 = scmp.ne.s32.totalorder %s91, %s107
    %p109 = scmp.eq.s32.totalorder %s15, 0
    %p110 = por %p108, %p109
    %p111 = scmp.le.s32.totalorder 1, %s9
    %p112 = scmp.lt.s32.totalorder %s9, 3
    %p113 = pnand %p111, %p112
    %p114 = pneg %p113
    // Predicated region
    $region9: #{forward.5} parent=5 // pred_check
      _
    $region10: #{forward.5} parent=5 // pred_check_branch
      %116 = sbr.rel (%p113) target = $region12
    $region11: #{forward.5} parent=5 // pred_region
      %s117 = ssub.s32 %s9, 1
      // Predicated region
      $region13: #{forward.5} parent=11 // pred_check
        %p118 = pneg %p56
      $region14: #{forward.5} parent=11 // pred_check_branch
        %120 = sbr.rel (%p118) target = $region16
      $region15: #{forward.5} parent=11 // pred_region
        _
      $region16: #{forward.5} parent=11 // pred_fallthru
        _
      // Predicated region
      $region17: #{forward.5} parent=11 // pred_check
        %p121 = pneg %p77
      $region18: #{forward.5} parent=11 // pred_check_branch
        %123 = sbr.rel (%p121) target = $region20
      $region19: #{forward.5} parent=11 // pred_region
        _
      $region20: #{forward.5} parent=11 // pred_fallthru
        _
    $region12: #{forward.5} parent=5 // pred_fallthru
      _
    %p124 = scmp.lt.s32.totalorder %s9, 2
    // Predicated region
    $region21: #{forward.5} parent=5 // pred_check
      %p125 = pneg %p124
    $region22: #{forward.5} parent=5 // pred_check_branch
      %127 = sbr.rel (%p125) target = $region24
    $region23: #{forward.5} parent=5 // pred_region
      // Predicated region
      $region25: #{forward.5} parent=23 // pred_check
        %p128 = pneg %p29
      $region26: #{forward.5} parent=23 // pred_check_branch
        %130 = sbr.rel (%p128) target = $region28
      $region27: #{forward.5} parent=23 // pred_region
        %p131 = scmp.lt.s32.totalorder %s9, 1
        %s132 = scalar_select %p131, %s9, 1
        %s133 = smul.addr %s132, 72
        %s134 = smul.addr %s133, 8
        %s135 = scalar_lea.vmem %s0, %s134
      $region28: #{forward.5} parent=23 // pred_fallthru
        _
    $region24: #{forward.5} parent=5 // pred_fallthru
      _
    %p136 = scmp.le.s32.totalorder 1, %s9
    %p137 = scmp.lt.s32.totalorder %s9, 3
    %p138 = pnand %p136, %p137
    %p139 = pneg %p138
    // Predicated region
    $region29: #{forward.5} parent=5 // pred_check
      _
    $region30: #{forward.5} parent=5 // pred_check_branch
      %141 = sbr.rel (%p138) target = $region32
    $region31: #{forward.5} parent=5 // pred_region
      %s142 = ssub.s32 %s9, 1
      %p143 = scmp.lt.s32.totalorder %s14, 1
      %s144 = scalar_select %p143, %s14, 1
      %s145 = smul.addr %s144, 72
      %s146 = smul.addr %s145, 8
      %s147 = scalar_lea.vmem %s0, %s146
      %p148 = pneg %p35
      %p149 = pneg %p32
      %p150 = pneg %p56
      %p151 = pneg %p53
      %p152 = pneg %p77
      %p153 = pneg %p74
      %p154 = pneg %p103
      %p155 = pneg %p100
      %p156 = scmp.lt.s32.totalorder %s14, 1
      %s157 = scalar_select %p156, %s14, 1
      %s158 = smul.addr %s157, 5
      %s159 = smul.addr %s158, 8
      %s160 = scalar_lea.vmem %s3, %s159
      %p161 = scmp.lt.s32.totalorder %s14, 1
      %s162 = scalar_select %p161, %s14, 1
      %s163 = smul.addr %s162, 72
      %s164 = smul.addr %s163, 8
      %s165 = scalar_lea.vmem %s0, %s164
      %p166 = scmp.lt.s32.totalorder %s14, 1
      %s167 = scalar_select %p166, %s14, 1
      %s168 = smul.addr %s167, 5
      %s169 = smul.addr %s168, 8
      %s170 = scalar_lea.vmem %s3, %s169
      %v171 = vld [vmem:[%s165] sm:$0xff]
      %v172 = vld [vmem:[%s165 + $0x8] sm:$0xff]
      %v173 = vld [vmem:[%s165 + $0x10] sm:$0xff]
      %v174 = vld [vmem:[%s165 + $0x18] sm:$0xff]
      %v175 = vld [vmem:[%s165 + $0x20] sm:$0xff]
      %v176 = vld [vmem:[%s165 + $0x28] sm:$0xff]
      %v177 = vld [vmem:[%s165 + $0x30] sm:$0xff]
      %v178 = vld [vmem:[%s165 + $0x38] sm:$0xff]
      %v179 = vld [vmem:[%s165 + $0x40] sm:$0xff]
      %v180 = vld [vmem:[%s165 + $0x48] sm:$0xff]
      %v181 = vld [vmem:[%s165 + $0x50] sm:$0xff]
      %v182 = vld [vmem:[%s165 + $0x58] sm:$0xff]
      %v183 = vld [vmem:[%s165 + $0x60] sm:$0xff]
      %v184 = vld [vmem:[%s165 + $0x68] sm:$0xff]
      %v185 = vld [vmem:[%s165 + $0x70] sm:$0xff]
      %v186 = vld [vmem:[%s165 + $0x78] sm:$0xff]
      %v187 = vld [vmem:[%s165 + $0x80] sm:$0xff]
      %v188 = vld [vmem:[%s165 + $0x88] sm:$0xff]
      %v189 = vld [vmem:[%s165 + $0x90] sm:$0xff]
      %v190 = vld [vmem:[%s165 + $0x98] sm:$0xff]
      %v191 = vld [vmem:[%s165 + $0xa0] sm:$0xff]
      %v192 = vld [vmem:[%s165 + $0xa8] sm:$0xff]
      %v193 = vld [vmem:[%s165 + $0xb0] sm:$0xff]
      %v194 = vld [vmem:[%s165 + $0xb8] sm:$0xff]
      %v195 = vld [vmem:[%s165 + $0xc0] sm:$0xff]
      %v196 = vld [vmem:[%s165 + $0xc8] sm:$0xff]
      %v197 = vld [vmem:[%s165 + $0xd0] sm:$0xff]
      %v198 = vld [vmem:[%s165 + $0xd8] sm:$0xff]
      %v199 = vld [vmem:[%s165 + $0xe0] sm:$0xff]
      %v200 = vld [vmem:[%s165 + $0xe8] sm:$0xff]
      %v201 = vld [vmem:[%s165 + $0xf0] sm:$0xff]
      %v202 = vld [vmem:[%s165 + $0xf8] sm:$0xff]
      %v203 = vld [vmem:[%s165 + $0x100] sm:$0xff]
      %v204 = vld [vmem:[%s165 + $0x108] sm:$0xff]
      %v205 = vld [vmem:[%s165 + $0x110] sm:$0xff]
      %v206 = vld [vmem:[%s165 + $0x118] sm:$0xff]
      %v207 = vld [vmem:[%s165 + $0x120] sm:$0xff]
      %v208 = vld [vmem:[%s165 + $0x128] sm:$0xff]
      %v209 = vld [vmem:[%s165 + $0x130] sm:$0xff]
      %v210 = vld [vmem:[%s165 + $0x138] sm:$0xff]
      %v211 = vld [vmem:[%s165 + $0x140] sm:$0xff]
      %v212 = vld [vmem:[%s165 + $0x148] sm:$0xff]
      %v213 = vld [vmem:[%s165 + $0x150] sm:$0xff]
      %v214 = vld [vmem:[%s165 + $0x158] sm:$0xff]
      %v215 = vld [vmem:[%s165 + $0x160] sm:$0xff]
      %v216 = vld [vmem:[%s165 + $0x168] sm:$0xff]
      %v217 = vld [vmem:[%s165 + $0x170] sm:$0xff]
      %v218 = vld [vmem:[%s165 + $0x178] sm:$0xff]
      %v219 = vld [vmem:[%s165 + $0x180] sm:$0xff]
      %v220 = vld [vmem:[%s165 + $0x188] sm:$0xff]
      %v221 = vld [vmem:[%s165 + $0x190] sm:$0xff]
      %v222 = vld [vmem:[%s165 + $0x198] sm:$0xff]
      %v223 = vld [vmem:[%s165 + $0x1a0] sm:$0xff]
      %v224 = vld [vmem:[%s165 + $0x1a8] sm:$0xff]
      %v225 = vld [vmem:[%s165 + $0x1b0] sm:$0xff]
      %v226 = vld [vmem:[%s165 + $0x1b8] sm:$0xff]
      %v227 = vld [vmem:[%s165 + $0x1c0] sm:$0xff]
      %v228 = vld [vmem:[%s165 + $0x1c8] sm:$0xff]
      %v229 = vld [vmem:[%s165 + $0x1d0] sm:$0xff]
      %v230 = vld [vmem:[%s165 + $0x1d8] sm:$0xff]
      %v231 = vld [vmem:[%s165 + $0x1e0] sm:$0xff]
      %v232 = vld [vmem:[%s165 + $0x1e8] sm:$0xff]
      %v233 = vld [vmem:[%s165 + $0x1f0] sm:$0xff]
      %v234 = vld [vmem:[%s165 + $0x1f8] sm:$0xff]
      %v235 = vld [vmem:[%s165 + $0x200] sm:$0xff]
      %v236 = vld [vmem:[%s165 + $0x208] sm:$0xff]
      %v237 = vld [vmem:[%s165 + $0x210] sm:$0xff]
      %v238 = vld [vmem:[%s165 + $0x218] sm:$0xff]
      %v239 = vld [vmem:[%s165 + $0x220] sm:$0xff]
      %v240 = vld [vmem:[%s165 + $0x228] sm:$0xff]
      %v241 = vld [vmem:[%s165 + $0x230] sm:$0xff]
      %v242 = vld [vmem:[%s165 + $0x238] sm:$0xff]
      %v243 = vld [vmem:[%s1] sm:$0xff]
      %v244 = vld [vmem:[%s1 + $0x8] sm:$0xff]
      %v245 = vld [vmem:[%s1 + $0x10] sm:$0xff]
      %v246 = vld [vmem:[%s1 + $0x18] sm:$0xff]
      %v247 = vld [vmem:[%s1 + $0x20] sm:$0xff]
      %v248 = vld [vmem:[%s1 + $0x28] sm:$0xff]
      %v249 = vld [vmem:[%s1 + $0x30] sm:$0xff]
      %v250 = vld [vmem:[%s1 + $0x38] sm:$0xff]
      %v251 = vld [vmem:[%s1 + $0x40] sm:$0xff]
      %v252 = vld [vmem:[%s1 + $0x48] sm:$0xff]
      %v253 = vld [vmem:[%s1 + $0x50] sm:$0xff]
      %v254 = vld [vmem:[%s1 + $0x58] sm:$0xff]
      %v255 = vld [vmem:[%s1 + $0x60] sm:$0xff]
      %v256 = vld [vmem:[%s1 + $0x68] sm:$0xff]
      %v257 = vld [vmem:[%s1 + $0x70] sm:$0xff]
      %v258 = vld [vmem:[%s1 + $0x78] sm:$0xff]
      %v259 = vld [vmem:[%s1 + $0x80] sm:$0xff]
      %v260 = vld [vmem:[%s1 + $0x88] sm:$0xff]
      %v261 = vld [vmem:[%s1 + $0x90] sm:$0xff]
      %v262 = vld [vmem:[%s1 + $0x98] sm:$0xff]
      %v263 = vld [vmem:[%s1 + $0xa0] sm:$0xff]
      %v264 = vld [vmem:[%s1 + $0xa8] sm:$0xff]
      %v265 = vld [vmem:[%s1 + $0xb0] sm:$0xff]
      %v266 = vld [vmem:[%s1 + $0xb8] sm:$0xff]
      %v267 = vld [vmem:[%s1 + $0xc0] sm:$0xff]
      %v268 = vld [vmem:[%s1 + $0xc8] sm:$0xff]
      %v269 = vld [vmem:[%s1 + $0xd0] sm:$0xff]
      %v270 = vld [vmem:[%s1 + $0xd8] sm:$0xff]
      %v271 = vld [vmem:[%s1 + $0xe0] sm:$0xff]
      %v272 = vld [vmem:[%s1 + $0xe8] sm:$0xff]
      %v273 = vld [vmem:[%s1 + $0xf0] sm:$0xff]
      %v274 = vld [vmem:[%s1 + $0xf8] sm:$0xff]
      %v275 = vld [vmem:[%s1 + $0x100] sm:$0xff]
      %v276 = vld [vmem:[%s1 + $0x108] sm:$0xff]
      %v277 = vld [vmem:[%s1 + $0x110] sm:$0xff]
      %v278 = vld [vmem:[%s1 + $0x118] sm:$0xff]
      %v279 = vld [vmem:[%s1 + $0x120] sm:$0xff]
      %v280 = vld [vmem:[%s1 + $0x128] sm:$0xff]
      %v281 = vld [vmem:[%s1 + $0x130] sm:$0xff]
      %v282 = vld [vmem:[%s1 + $0x138] sm:$0xff]
      %v283 = vld [vmem:[%s1 + $0x140] sm:$0xff]
      %v284 = vld [vmem:[%s1 + $0x148] sm:$0xff]
      %v285 = vld [vmem:[%s1 + $0x150] sm:$0xff]
      %v286 = vld [vmem:[%s1 + $0x158] sm:$0xff]
      %v287 = vld [vmem:[%s1 + $0x160] sm:$0xff]
      %v288 = vld [vmem:[%s1 + $0x168] sm:$0xff]
      %v289 = vld [vmem:[%s1 + $0x170] sm:$0xff]
      %v290 = vld [vmem:[%s1 + $0x178] sm:$0xff]
      %v291 = vld [vmem:[%s1 + $0x180] sm:$0xff]
      %v292 = vld [vmem:[%s1 + $0x188] sm:$0xff]
      %v293 = vld [vmem:[%s2] sm:$0x1]
      %v295 = vlaneseq
      %v296 = vshrl.u32 %v295, 7
      %v297 = vsub.s32 0, %v296
      %v298 = vrot.slane %v293, %v297
      %vm300 = vcmask 130048
      %v302 = vsel %vm300, %v174, 0
      %v305 = vsel %vm300, %v178, 0
      %v308 = vsel %vm300, %v182, 0
      %v311 = vsel %vm300, %v186, 0
      %v314 = vsel %vm300, %v190, 0
      %v317 = vsel %vm300, %v194, 0
      %v320 = vsel %vm300, %v198, 0
      %v323 = vsel %vm300, %v202, 0
      %v326 = vsel %vm300, %v206, 0
      %v329 = vsel %vm300, %v210, 0
      %v332 = vsel %vm300, %v214, 0
      %v335 = vsel %vm300, %v218, 0
      %v338 = vsel %vm300, %v222, 0
      %v341 = vsel %vm300, %v226, 0
      %v344 = vsel %vm300, %v230, 0
      %v347 = vsel %vm300, %v234, 0
      %v350 = vsel %vm300, %v238, 0
      %v353 = vsel %vm300, %v242, 0
      %355 = vmatprep.subr.mxu0 0.0
      %356 = vmatpush1.msra.mxu0 %v243
      %357 = vmatprep.subr.mxu0 0.0
      %358 = vmatpush1.msra.mxu0 %v244
      %359 = vmatprep.subr.mxu0 0.0
      %360 = vmatpush1.msra.mxu0 %v245
      %361 = vmatprep.subr.mxu0 0.0
      %362 = vmatpush1.msra.mxu0 %v246
      %363 = vmatprep.subr.mxu0 0.0
      %364 = vmatpush1.msra.mxu0 %v247
      %365 = vmatprep.subr.mxu0 0.0
      %366 = vmatpush1.msra.mxu0 %v248
      %367 = vmatprep.subr.mxu0 0.0
      %368 = vmatpush1.msra.mxu0 %v249
      %369 = vmatprep.subr.mxu0 0.0
      %370 = vmatpush1.msra.mxu0 %v250
      %371 = vmatprep.subr.mxu0 0.0
      %372 = vmatpush1.msra.mxu0 %v251
      %373 = vmatprep.subr.mxu0 0.0
      %374 = vmatpush1.msra.mxu0 %v252
      %375 = vmatprep.subr.mxu0 0.0
      %376 = vmatpush1.msra.mxu0 %v253
      %377 = vmatprep.subr.mxu0 0.0
      %378 = vmatpush1.msra.mxu0 %v254
      %379 = vmatprep.subr.mxu0 0.0
      %380 = vmatpush1.msra.mxu0 %v255
      %381 = vmatprep.subr.mxu0 0.0
      %382 = vmatpush1.msra.mxu0 %v256
      %383 = vmatprep.subr.mxu0 0.0
      %384 = vmatpush1.msra.mxu0 %v257
      %385 = vmatprep.subr.mxu0 0.0
      %386 = vmatpush1.msra.mxu0 %v258
      %387 = vmatprep.subr.mxu0 0.0
      %388 = vmatpush1.msra.mxu0 %v259
      %389 = vmatprep.subr.mxu0 0.0
      %390 = vmatpush1.msra.mxu0 %v260
      %391 = vmatprep.subr.mxu0 0.0
      %392 = vmatpush1.msra.mxu0 %v261
      %393 = vmatprep.subr.mxu0 0.0
      %394 = vmatpush1.msra.mxu0 %v262
      %395 = vmatprep.subr.mxu0 0.0
      %396 = vmatpush1.msra.mxu0 %v263
      %397 = vmatprep.subr.mxu0 0.0
      %398 = vmatpush1.msra.mxu0 %v264
      %399 = vmatprep.subr.mxu0 0.0
      %400 = vmatpush1.msra.mxu0 %v265
      %401 = vmatprep.subr.mxu0 0.0
      %402 = vmatpush1.msra.mxu0 %v266
      %403 = vmatprep.subr.mxu0 0.0
      %404 = vmatpush1.msra.mxu0 %v267
      %405 = vmatprep.subr.mxu0 0.0
      %406 = vmatpush1.msra.mxu0 %v268
      %407 = vmatprep.subr.mxu0 0.0
      %408 = vmatpush1.msra.mxu0 %v269
      %409 = vmatprep.subr.mxu0 0.0
      %410 = vmatpush1.msra.mxu0 %v270
      %411 = vmatprep.subr.mxu0 0.0
      %412 = vmatpush1.msra.mxu0 %v271
      %413 = vmatprep.subr.mxu0 0.0
      %414 = vmatpush1.msra.mxu0 %v272
      %415 = vmatprep.subr.mxu0 0.0
      %416 = vmatpush1.msra.mxu0 %v273
      %417 = vmatprep.subr.mxu0 0.0
      %418 = vmatpush1.msra.mxu0 %v274
      %419 = vmatprep.mubr.f32.mxu0 %v172
      %420 = vmatmul.mubr.f32.gmra.mrb[0].mxu0 %v171
      %v421 = vpop.f32.mrb[0].mxu0
      %v422 = vadd.f32 %v298, %v421
      %v423 = vpop.f32.mrb[0].mxu0
      %424 = vmatprep.mubr.f32.mxu0 %v176
      %425 = vmatmul.mubr.f32.gmra.mrb[0].mxu0 %v175
      %v426 = vpop.f32.mrb[0].mxu0
      %v427 = vadd.f32 %v298, %v426
      %v428 = vpop.f32.mrb[0].mxu0
      %429 = vmatprep.mubr.f32.mxu0 %v180
      %430 = vmatmul.mubr.f32.gmra.mrb[0].mxu0 %v179
      %v431 = vpop.f32.mrb[0].mxu0
      %v432 = vadd.f32 %v298, %v431
      %v433 = vpop.f32.mrb[0].mxu0
      %434 = vmatprep.mubr.f32.mxu0 %v184
      %435 = vmatmul.mubr.f32.gmra.mrb[0].mxu0 %v183
      %v436 = vpop.f32.mrb[0].mxu0
      %v437 = vadd.f32 %v298, %v436
      %v438 = vpop.f32.mrb[0].mxu0
      %439 = vmatprep.mubr.f32.mxu0 %v188
      %440 = vmatmul.mubr.f32.gmra.mrb[0].mxu0 %v187
      %v441 = vpop.f32.mrb[0].mxu0
      %v442 = vadd.f32 %v298, %v441
      %v443 = vpop.f32.mrb[0].mxu0
      %444 = vmatprep.mubr.f32.mxu0 %v192
      %445 = vmatmul.mubr.f32.gmra.mrb[0].mxu0 %v191
      %v446 = vpop.f32.mrb[0].mxu0
      %v447 = vadd.f32 %v298, %v446
      %v448 = vpop.f32.mrb[0].mxu0
      %449 = vmatprep.mubr.f32.mxu0 %v196
      %450 = vmatmul.mubr.f32.gmra.mrb[0].mxu0 %v195
      %v451 = vpop.f32.mrb[0].mxu0
      %v452 = vadd.f32 %v298, %v451
      %v453 = vpop.f32.mrb[0].mxu0
      %454 = vmatprep.mubr.f32.mxu0 %v200
      %455 = vmatmul.mubr.f32.gmra.mrb[0].mxu0 %v199
      %v456 = vpop.f32.mrb[0].mxu0
      %v457 = vadd.f32 %v298, %v456
      %v458 = vpop.f32.mrb[0].mxu0
      %459 = vmatprep.mubr.f32.mxu0 %v204
      %460 = vmatmul.mubr.f32.gmra.mrb[0].mxu0 %v203
      %v461 = vpop.f32.mrb[0].mxu0
      %v462 = vadd.f32 %v298, %v461
      %v463 = vpop.f32.mrb[0].mxu0
      %464 = vmatprep.mubr.f32.mxu0 %v208
      %465 = vmatmul.mubr.f32.gmra.mrb[0].mxu0 %v207
      %v466 = vpop.f32.mrb[0].mxu0
      %v467 = vadd.f32 %v298, %v466
      %v468 = vpop.f32.mrb[0].mxu0
      %469 = vmatprep.mubr.f32.mxu0 %v212
      %470 = vmatmul.mubr.f32.gmra.mrb[0].mxu0 %v211
      %v471 = vpop.f32.mrb[0].mxu0
      %v472 = vadd.f32 %v298, %v471
      %v473 = vpop.f32.mrb[0].mxu0
      %474 = vmatprep.mubr.f32.mxu0 %v216
      %475 = vmatmul.mubr.f32.gmra.mrb[0].mxu0 %v215
      %v476 = vpop.f32.mrb[0].mxu0
      %v477 = vadd.f32 %v298, %v476
      %v478 = vpop.f32.mrb[0].mxu0
      %479 = vmatprep.mubr.f32.mxu0 %v220
      %480 = vmatmul.mubr.f32.gmra.mrb[0].mxu0 %v219
      %v481 = vpop.f32.mrb[0].mxu0
      %v482 = vadd.f32 %v298, %v481
      %v483 = vpop.f32.mrb[0].mxu0
      %484 = vmatprep.mubr.f32.mxu0 %v224
      %485 = vmatmul.mubr.f32.gmra.mrb[0].mxu0 %v223
      %v486 = vpop.f32.mrb[0].mxu0
      %v487 = vadd.f32 %v298, %v486
      %v488 = vpop.f32.mrb[0].mxu0
      %489 = vmatprep.mubr.f32.mxu0 %v228
      %490 = vmatmul.mubr.f32.gmra.mrb[0].mxu0 %v227
      %v491 = vpop.f32.mrb[0].mxu0
      %v492 = vadd.f32 %v298, %v491
      %v493 = vpop.f32.mrb[0].mxu0
      %494 = vmatprep.mubr.f32.mxu0 %v232
      %495 = vmatmul.mubr.f32.gmra.mrb[0].mxu0 %v231
      %v496 = vpop.f32.mrb[0].mxu0
      %v497 = vadd.f32 %v298, %v496
      %v498 = vpop.f32.mrb[0].mxu0
      %499 = vmatprep.mubr.f32.mxu0 %v236
      %500 = vmatmul.mubr.f32.gmra.mrb[0].mxu0 %v235
      %v501 = vpop.f32.mrb[0].mxu0
      %v502 = vadd.f32 %v298, %v501
      %v503 = vpop.f32.mrb[0].mxu0
      %504 = vmatprep.mubr.f32.mxu0 %v240
      %505 = vmatmul.mubr.f32.gmra.mrb[0].mxu0 %v239
      %v506 = vpop.f32.mrb[0].mxu0
      %v507 = vadd.f32 %v298, %v506
      %v508 = vpop.f32.mrb[0].mxu0
      %509 = vdwg.mxu0
      %510 = vmatprep.subr.mxu0 0.0
      %511 = vmatpush1.msra.mxu0 %v275
      %512 = vmatprep.subr.mxu0 0.0
      %513 = vmatpush1.msra.mxu0 %v276
      %514 = vmatprep.subr.mxu0 0.0
      %515 = vmatpush1.msra.mxu0 %v277
      %516 = vmatprep.subr.mxu0 0.0
      %517 = vmatpush1.msra.mxu0 %v278
      %518 = vmatprep.subr.mxu0 0.0
      %519 = vmatpush1.msra.mxu0 %v279
      %520 = vmatprep.subr.mxu0 0.0
      %521 = vmatpush1.msra.mxu0 %v280
      %522 = vmatprep.subr.mxu0 0.0
      %523 = vmatpush1.msra.mxu0 %v281
      %524 = vmatprep.subr.mxu0 0.0
      %525 = vmatpush1.msra.mxu0 %v282
      %526 = vmatprep.subr.mxu0 0.0
      %527 = vmatpush1.msra.mxu0 %v283
      %528 = vmatprep.subr.mxu0 0.0
      %529 = vmatpush1.msra.mxu0 %v284
      %530 = vmatprep.subr.mxu0 0.0
      %531 = vmatpush1.msra.mxu0 %v285
      %532 = vmatprep.subr.mxu0 0.0
      %533 = vmatpush1.msra.mxu0 %v286
      %534 = vmatprep.subr.mxu0 0.0
      %535 = vmatpush1.msra.mxu0 %v287
      %536 = vmatprep.subr.mxu0 0.0
      %537 = vmatpush1.msra.mxu0 %v288
      %538 = vmatprep.subr.mxu0 0.0
      %539 = vmatpush1.msra.mxu0 %v289
      %540 = vmatprep.subr.mxu0 0.0
      %541 = vmatpush1.msra.mxu0 %v290
      %542 = vmatprep.subr.mxu0 0.0
      %543 = vmatpush1.msra.mxu0 %v291
      %544 = vmatprep.subr.mxu0 0.0
      %545 = vmatpush1.msra.mxu0 %v292
      %546 = vmatprep.subr.mxu0 0.0
      %547 = vmatpush1.msra.mxu0 0.0
      %548 = vmatprep.subr.mxu0 0.0
      %549 = vmatpush1.msra.mxu0 0.0
      %550 = vmatprep.subr.mxu0 0.0
      %551 = vmatpush1.msra.mxu0 0.0
      %552 = vmatprep.subr.mxu0 0.0
      %553 = vmatpush1.msra.mxu0 0.0
      %554 = vmatprep.subr.mxu0 0.0
      %555 = vmatpush1.msra.mxu0 0.0
      %556 = vmatprep.subr.mxu0 0.0
      %557 = vmatpush1.msra.mxu0 0.0
      %558 = vmatprep.subr.mxu0 0.0
      %559 = vmatpush1.msra.mxu0 0.0
      %560 = vmatprep.subr.mxu0 0.0
      %561 = vmatpush1.msra.mxu0 0.0
      %562 = vmatprep.subr.mxu0 0.0
      %563 = vmatpush1.msra.mxu0 0.0
      %564 = vmatprep.subr.mxu0 0.0
      %565 = vmatpush1.msra.mxu0 0.0
      %566 = vmatprep.subr.mxu0 0.0
      %567 = vmatpush1.msra.mxu0 0.0
      %568 = vmatprep.subr.mxu0 0.0
      %569 = vmatpush1.msra.mxu0 0.0
      %570 = vmatprep.subr.mxu0 0.0
      %571 = vmatpush1.msra.mxu0 0.0
      %572 = vmatprep.subr.mxu0 0.0
      %573 = vmatpush1.msra.mxu0 0.0
      %574 = vmatprep.mubr.f32.mxu0 %v302
      %575 = vmatmul.mubr.f32.gmra.mrb[0].mxu0 %v173
      %v576 = vpop.f32.mrb[0].mxu0
      %v577 = vadd.f32 %v422, %v576
      %v578 = vpop.f32.mrb[0].mxu0
      %579 = vmatprep.mubr.f32.mxu0 %v305
      %580 = vmatmul.mubr.f32.gmra.mrb[0].mxu0 %v177
      %v581 = vpop.f32.mrb[0].mxu0
      %v582 = vadd.f32 %v427, %v581
      %v583 = vpop.f32.mrb[0].mxu0
      %584 = vmatprep.mubr.f32.mxu0 %v308
      %585 = vmatmul.mubr.f32.gmra.mrb[0].mxu0 %v181
      %v586 = vpop.f32.mrb[0].mxu0
      %v587 = vadd.f32 %v432, %v586
      %v588 = vpop.f32.mrb[0].mxu0
      %589 = vmatprep.mubr.f32.mxu0 %v311
      %590 = vmatmul.mubr.f32.gmra.mrb[0].mxu0 %v185
      %v591 = vpop.f32.mrb[0].mxu0
      %v592 = vadd.f32 %v437, %v591
      %v593 = vpop.f32.mrb[0].mxu0
      %594 = vmatprep.mubr.f32.mxu0 %v314
      %595 = vmatmul.mubr.f32.gmra.mrb[0].mxu0 %v189
      %v596 = vpop.f32.mrb[0].mxu0
      %v597 = vadd.f32 %v442, %v596
      %v598 = vpop.f32.mrb[0].mxu0
      %599 = vmatprep.mubr.f32.mxu0 %v317
      %600 = vmatmul.mubr.f32.gmra.mrb[0].mxu0 %v193
      %v601 = vpop.f32.mrb[0].mxu0
      %v602 = vadd.f32 %v447, %v601
      %v603 = vpop.f32.mrb[0].mxu0
      %604 = vmatprep.mubr.f32.mxu0 %v320
      %605 = vmatmul.mubr.f32.gmra.mrb[0].mxu0 %v197
      %v606 = vpop.f32.mrb[0].mxu0
      %v607 = vadd.f32 %v452, %v606
      %v608 = vpop.f32.mrb[0].mxu0
      %609 = vmatprep.mubr.f32.mxu0 %v323
      %610 = vmatmul.mubr.f32.gmra.mrb[0].mxu0 %v201
      %v611 = vpop.f32.mrb[0].mxu0
      %v612 = vadd.f32 %v457, %v611
      %v613 = vpop.f32.mrb[0].mxu0
      %614 = vmatprep.mubr.f32.mxu0 %v326
      %615 = vmatmul.mubr.f32.gmra.mrb[0].mxu0 %v205
      %v616 = vpop.f32.mrb[0].mxu0
      %v617 = vadd.f32 %v462, %v616
      %v618 = vpop.f32.mrb[0].mxu0
      %619 = vmatprep.mubr.f32.mxu0 %v329
      %620 = vmatmul.mubr.f32.gmra.mrb[0].mxu0 %v209
      %v621 = vpop.f32.mrb[0].mxu0
      %v622 = vadd.f32 %v467, %v621
      %v623 = vpop.f32.mrb[0].mxu0
      %624 = vmatprep.mubr.f32.mxu0 %v332
      %625 = vmatmul.mubr.f32.gmra.mrb[0].mxu0 %v213
      %v626 = vpop.f32.mrb[0].mxu0
      %v627 = vadd.f32 %v472, %v626
      %v628 = vpop.f32.mrb[0].mxu0
      %629 = vmatprep.mubr.f32.mxu0 %v335
      %630 = vmatmul.mubr.f32.gmra.mrb[0].mxu0 %v217
      %v631 = vpop.f32.mrb[0].mxu0
      %v632 = vadd.f32 %v477, %v631
      %v633 = vpop.f32.mrb[0].mxu0
      %634 = vmatprep.mubr.f32.mxu0 %v338
      %635 = vmatmul.mubr.f32.gmra.mrb[0].mxu0 %v221
      %v636 = vpop.f32.mrb[0].mxu0
      %v637 = vadd.f32 %v482, %v636
      %v638 = vpop.f32.mrb[0].mxu0
      %639 = vmatprep.mubr.f32.mxu0 %v341
      %640 = vmatmul.mubr.f32.gmra.mrb[0].mxu0 %v225
      %v641 = vpop.f32.mrb[0].mxu0
      %v642 = vadd.f32 %v487, %v641
      %v643 = vpop.f32.mrb[0].mxu0
      %644 = vmatprep.mubr.f32.mxu0 %v344
      %645 = vmatmul.mubr.f32.gmra.mrb[0].mxu0 %v229
      %v646 = vpop.f32.mrb[0].mxu0
      %v647 = vadd.f32 %v492, %v646
      %v648 = vpop.f32.mrb[0].mxu0
      %649 = vmatprep.mubr.f32.mxu0 %v347
      %650 = vmatmul.mubr.f32.gmra.mrb[0].mxu0 %v233
      %v651 = vpop.f32.mrb[0].mxu0
      %v652 = vadd.f32 %v497, %v651
      %v653 = vpop.f32.mrb[0].mxu0
      %654 = vmatprep.mubr.f32.mxu0 %v350
      %655 = vmatmul.mubr.f32.gmra.mrb[0].mxu0 %v237
      %v656 = vpop.f32.mrb[0].mxu0
      %v657 = vadd.f32 %v502, %v656
      %v658 = vpop.f32.mrb[0].mxu0
      %659 = vmatprep.mubr.f32.mxu0 %v353
      %660 = vmatmul.mubr.f32.gmra.mrb[0].mxu0 %v241
      %v661 = vpop.f32.mrb[0].mxu0
      %v662 = vadd.f32 %v507, %v661
      %v663 = vpop.f32.mrb[0].mxu0
      %664 = vdwg.mxu0
      %v665 = vmax.f32 %v577, 0.0
      %v666 = vmax.f32 %v582, 0.0
      %v667 = vmax.f32 %v587, 0.0
      %v668 = vmax.f32 %v592, 0.0
      %v669 = vmax.f32 %v597, 0.0
      %v670 = vmax.f32 %v602, 0.0
      %v671 = vmax.f32 %v607, 0.0
      %v672 = vmax.f32 %v612, 0.0
      %v673 = vmax.f32 %v617, 0.0
      %v674 = vmax.f32 %v622, 0.0
      %v675 = vmax.f32 %v627, 0.0
      %v676 = vmax.f32 %v632, 0.0
      %v677 = vmax.f32 %v637, 0.0
      %v678 = vmax.f32 %v642, 0.0
      %v679 = vmax.f32 %v647, 0.0
      %v680 = vmax.f32 %v652, 0.0
      %v681 = vmax.f32 %v657, 0.0
      %v682 = vmax.f32 %v662, 0.0
      %vm688 = vcmask 1043456
      %v689 = vrot.slane %v669, 4
      %v690 = vrot.slane %v670, 4
      %v691 = vsel %vm688, %v689, %v690
      %v692 = vrot.slane %v671, 4
      %v693 = vsel %vm688, %v690, %v692
      %v694 = vrot.slane %v672, 4
      %v695 = vsel %vm688, %v692, %v694
      %v696 = vrot.slane %v673, 4
      %v697 = vsel %vm688, %v694, %v696
      %v703 = vmax.f32 %v665, %v691
      %v704 = vmax.f32 %v666, %v693
      %v705 = vmax.f32 %v667, %v695
      %v706 = vmax.f32 %v668, %v697
      %v707 = vmax.f32 %v669, %v696
      %v713 = vrot.slane %v678, 4
      %v714 = vrot.slane %v679, 4
      %v715 = vsel %vm688, %v713, %v714
      %v716 = vrot.slane %v680, 4
      %v717 = vsel %vm688, %v714, %v716
      %v718 = vrot.slane %v681, 4
      %v719 = vsel %vm688, %v716, %v718
      %v720 = vrot.slane %v682, 4
      %v721 = vsel %vm688, %v718, %v720
      %v727 = vmax.f32 %v674, %v715
      %v728 = vmax.f32 %v675, %v717
      %v729 = vmax.f32 %v676, %v719
      %v730 = vmax.f32 %v677, %v721
      %v731 = vmax.f32 %v678, %v720
      %v732 = vmax.f32 %v703, %v727
      %v733 = vmax.f32 %v704, %v728
      %v734 = vmax.f32 %v705, %v729
      %v735 = vmax.f32 %v706, %v730
      %v736 = vmax.f32 %v707, %v731
      %vm737 = vcmask 261120
      %738 = vst.msk [vmem:[%s170] sm:$0xff] %vm737, %v732
      %739 = vst.msk [vmem:[%s170 + $0x8] sm:$0xff] %vm737, %v733
      %740 = vst.msk [vmem:[%s170 + $0x10] sm:$0xff] %vm737, %v734
      %741 = vst.msk [vmem:[%s170 + $0x18] sm:$0xff] %vm737, %v735
      %vm742 = vcmask 257024
      %743 = vst.msk [vmem:[%s170 + $0x20] sm:$0xf] %vm742, %v736
      %p744 = scmp.lt.s32.totalorder %s14, 1
      %s745 = scalar_select %p744, %s14, 1
      %s746 = smul.addr %s745, 5
      %s747 = smul.addr %s746, 8
      %s748 = scalar_lea.vmem %s3, %s747
      // Predicated region
      $region33: #{forward.5} parent=31 // pred_check
        %p749 = pneg %p100
      $region34: #{forward.5} parent=31 // pred_check_branch
        %751 = sbr.rel (%p749) target = $region36
      $region35: #{forward.5} parent=31 // pred_region
        _
      $region36: #{forward.5} parent=31 // pred_fallthru
        _
    $region32: #{forward.5} parent=5 // pred_fallthru
      _
    %p752 = scmp.le.s32.totalorder 2, %s9
    // Predicated region
    $region37: #{forward.5} parent=5 // pred_check
      %p753 = pneg %p752
    $region38: #{forward.5} parent=5 // pred_check_branch
      %755 = sbr.rel (%p753) target = $region40
    $region39: #{forward.5} parent=5 // pred_region
      %s756 = ssub.s32 %s9, 2
      // Predicated region
      $region41: #{forward.5} parent=39 // pred_check
        %p757 = pneg %p106
      $region42: #{forward.5} parent=39 // pred_check_branch
        %759 = sbr.rel (%p757) target = $region44
      $region43: #{forward.5} parent=39 // pred_region
        %p760 = scmp.lt.s32.totalorder %s15, 1
        %s761 = scalar_select %p760, %s15, 1
        %s762 = smul.addr %s761, 5
        %s763 = smul.addr %s762, 8
        %s764 = scalar_lea.vmem %s3, %s763
      $region44: #{forward.5} parent=39 // pred_fallthru
        _
    $region40: #{forward.5} parent=5 // pred_fallthru
      _
  $region6: #{forward.5} parent=0 // loop_footer
    %s13 = sadd.s32 1, %s9
  $region7: #{forward.5} parent=0 // loop_footer_branch
    %8 = sbr.rel target = $region3
  $region8: #{forward.5} parent=0 // loop_exit
    _

// kernel: forward.6
$region0: #{forward.6}
  #allocation0 [shape = 'u32[]', space=smem, size = 0x4, offset = 0x4, fixed_abs, tag = 'smem constant byte address 0x4 - core index']
  #allocation1 [shape = 'u32[144,128]{1,0:T(1,128)}', space=vmem, size = 0x12000, scoped, tag = 'internal scratch']
  %s0 = inlined_call_operand.vmem [shape: f32[2,36,800], index: 0, kind: input, shape index: {}]
  %s1 = inlined_call_operand.vmem [shape: f32[800,64], index: 1, kind: input, shape index: {}]
  %s2 = inlined_call_operand.vmem [shape: f32[1,64], index: 2, kind: input, shape index: {}]
  %s3 = inlined_call_operand.vmem [shape: f32[2,9,64], index: 3, kind: output, shape index: {}]
  %s4 = sld [smem:[#allocation0]]
  $region45: #{forward.6} parent=0
    _
  %s6 = ssub.s32 1, %s4
  %s7 = scalar_select 0, %s6, %s4
  loop: start=0, step=1, limit=4
  $region2: #{forward.6} parent=0 // loop_pre_header
    _
  $region3: #{forward.6} parent=0 // loop_header
    %s9 = sphi 0, %s13
    %p10 = scmp.ge.s32.totalorder %s9, 4
    %s19 = sphi 0, %s21
    %s22 = sphi 0, %s19
    %s23 = sphi 0, %s22
    %s39 = sphi 0, %s23
    %s43 = sphi 0, %s43
    %s45 = sphi 0, %s43
    %s46 = sphi 0, %s45
    %s60 = sphi 0, %s46
    %s64 = sphi 0, %s64
    %s66 = sphi 0, %s64
    %s67 = sphi 0, %s66
    %s81 = sphi 0, %s67
    %s87 = sphi 0, %s89
    %s90 = sphi 0, %s87
    %s91 = sphi 0, %s90
    %s107 = sphi 0, %s91
  $region4: #{forward.6} parent=0 // loop_header_branch
    %12 = sbr.rel (%p10) target = $region8
  $region5: #{forward.6} parent=0 // loop_body
    %s14 = ssub.s32 %s9, 1
    %s15 = ssub.s32 %s9, 2
    %s16 = sadd.s32 %s9, 1
    %s17 = ssub.s32 %s9, %s16
    %p18 = scmp.eq.s32.totalorder %s17, 0
    %s20 = sadd.s32 %s19, 1
    %s21 = scalar_select %p18, %s19, %s20
    %p24 = pneg %p18
    %p25 = scmp.eq.s32.totalorder %s9, 1
    %p26 = por %p24, %p25
    %p27 = scmp.ne.s32.totalorder %s19, %s22
    %p28 = scmp.eq.s32.totalorder %s9, 0
    %p29 = por %p27, %p28
    %p30 = scmp.ne.s32.totalorder %s19, %s22
    %p31 = scmp.eq.s32.totalorder %s14, 1
    %p32 = por %p30, %p31
    %p33 = scmp.ne.s32.totalorder %s22, %s23
    %p34 = scmp.eq.s32.totalorder %s14, 0
    %p35 = por %p33, %p34
    %p36 = scmp.ne.s32.totalorder %s22, %s23
    %p37 = scmp.eq.s32.totalorder %s15, 1
    %p38 = por %p36, %p37
    %p40 = scmp.ne.s32.totalorder %s23, %s39
    %p41 = scmp.eq.s32.totalorder %s15, 0
    %p42 = por %p40, %p41
    %s44 = sadd.s32 %s43, 1
    %p47 = scmp.eq.s32.totalorder %s9, 1
    %p48 = scmp.ne.s32.totalorder %s43, %s45
    %p49 = scmp.eq.s32.totalorder %s9, 0
    %p50 = por %p48, %p49
    %p51 = scmp.ne.s32.totalorder %s43, %s45
    %p52 = scmp.eq.s32.totalorder %s14, 1
    %p53 = por %p51, %p52
    %p54 = scmp.ne.s32.totalorder %s45, %s46
    %p55 = scmp.eq.s32.totalorder %s14, 0
    %p56 = por %p54, %p55
    %p57 = scmp.ne.s32.totalorder %s45, %s46
    %p58 = scmp.eq.s32.totalorder %s15, 1
    %p59 = por %p57, %p58
    %p61 = scmp.ne.s32.totalorder %s46, %s60
    %p62 = scmp.eq.s32.totalorder %s15, 0
    %p63 = por %p61, %p62
    %s65 = sadd.s32 %s64, 1
    %p68 = scmp.eq.s32.totalorder %s9, 1
    %p69 = scmp.ne.s32.totalorder %s64, %s66
    %p70 = scmp.eq.s32.totalorder %s9, 0
    %p71 = por %p69, %p70
    %p72 = scmp.ne.s32.totalorder %s64, %s66
    %p73 = scmp.eq.s32.totalorder %s14, 1
    %p74 = por %p72, %p73
    %p75 = scmp.ne.s32.totalorder %s66, %s67
    %p76 = scmp.eq.s32.totalorder %s14, 0
    %p77 = por %p75, %p76
    %p78 = scmp.ne.s32.totalorder %s66, %s67
    %p79 = scmp.eq.s32.totalorder %s15, 1
    %p80 = por %p78, %p79
    %p82 = scmp.ne.s32.totalorder %s67, %s81
    %p83 = scmp.eq.s32.totalorder %s15, 0
    %p84 = por %p82, %p83
    %s85 = ssub.s32 %s9, %s16
    %p86 = scmp.eq.s32.totalorder %s85, 0
    %s88 = sadd.s32 %s87, 1
    %s89 = scalar_select %p86, %s87, %s88
    %p92 = pneg %p86
    %p93 = scmp.eq.s32.totalorder %s9, 1
    %p94 = por %p92, %p93
    %p95 = scmp.ne.s32.totalorder %s87, %s90
    %p96 = scmp.eq.s32.totalorder %s9, 0
    %p97 = por %p95, %p96
    %p98 = scmp.ne.s32.totalorder %s87, %s90
    %p99 = scmp.eq.s32.totalorder %s14, 1
    %p100 = por %p98, %p99
    %p101 = scmp.ne.s32.totalorder %s90, %s91
    %p102 = scmp.eq.s32.totalorder %s14, 0
    %p103 = por %p101, %p102
    %p104 = scmp.ne.s32.totalorder %s90, %s91
    %p105 = scmp.eq.s32.totalorder %s15, 1
    %p106 = por %p104, %p105
    %p108 = scmp.ne.s32.totalorder %s91, %s107
    %p109 = scmp.eq.s32.totalorder %s15, 0
    %p110 = por %p108, %p109
    %p111 = scmp.le.s32.totalorder 1, %s9
    %p112 = scmp.lt.s32.totalorder %s9, 3
    %p113 = pnand %p111, %p112
    %p114 = pneg %p113
    // Predicated region
    $region9: #{forward.6} parent=5 // pred_check
      _
    $region10: #{forward.6} parent=5 // pred_check_branch
      %116 = sbr.rel (%p113) target = $region12
    $region11: #{forward.6} parent=5 // pred_region
      %s117 = ssub.s32 %s9, 1
      // Predicated region
      $region13: #{forward.6} parent=11 // pred_check
        %p118 = pneg %p56
      $region14: #{forward.6} parent=11 // pred_check_branch
        %120 = sbr.rel (%p118) target = $region16
      $region15: #{forward.6} parent=11 // pred_region
        _
      $region16: #{forward.6} parent=11 // pred_fallthru
        _
      // Predicated region
      $region17: #{forward.6} parent=11 // pred_check
        %p121 = pneg %p77
      $region18: #{forward.6} parent=11 // pred_check_branch
        %123 = sbr.rel (%p121) target = $region20
      $region19: #{forward.6} parent=11 // pred_region
        _
      $region20: #{forward.6} parent=11 // pred_fallthru
        _
    $region12: #{forward.6} parent=5 // pred_fallthru
      _
    %p124 = scmp.lt.s32.totalorder %s9, 2
    // Predicated region
    $region21: #{forward.6} parent=5 // pred_check
      %p125 = pneg %p124
    $region22: #{forward.6} parent=5 // pred_check_branch
      %127 = sbr.rel (%p125) target = $region24
    $region23: #{forward.6} parent=5 // pred_region
      // Predicated region
      $region25: #{forward.6} parent=23 // pred_check
        %p128 = pneg %p29
      $region26: #{forward.6} parent=23 // pred_check_branch
        %130 = sbr.rel (%p128) target = $region28
      $region27: #{forward.6} parent=23 // pred_region
        %p131 = scmp.lt.s32.totalorder %s9, 1
        %s132 = scalar_select %p131, %s9, 1
        %s133 = smul.addr %s132, 35
        %s134 = smul.addr %s133, 8
        %s135 = scalar_lea.vmem %s0, %s134
      $region28: #{forward.6} parent=23 // pred_fallthru
        _
    $region24: #{forward.6} parent=5 // pred_fallthru
      _
    %p136 = scmp.le.s32.totalorder 1, %s9
    %p137 = scmp.lt.s32.totalorder %s9, 3
    %p138 = pnand %p136, %p137
    %p139 = pneg %p138
    // Predicated region
    $region29: #{forward.6} parent=5 // pred_check
      _
    $region30: #{forward.6} parent=5 // pred_check_branch
      %141 = sbr.rel (%p138) target = $region32
    $region31: #{forward.6} parent=5 // pred_region
      %s142 = ssub.s32 %s9, 1
      %p143 = scmp.lt.s32.totalorder %s14, 1
      %s144 = scalar_select %p143, %s14, 1
      %s145 = smul.addr %s144, 35
      %s146 = smul.addr %s145, 8
      %s147 = scalar_lea.vmem %s0, %s146
      %p148 = pneg %p35
      %p149 = pneg %p32
      %p150 = pneg %p56
      %p151 = pneg %p53
      %p152 = pneg %p77
      %p153 = pneg %p74
      %p154 = pneg %p103
      %p155 = pneg %p100
      %p156 = scmp.lt.s32.totalorder %s14, 1
      %s157 = scalar_select %p156, %s14, 1
      %s158 = smul.addr %s157, 2
      %s159 = smul.addr %s158, 8
      %s160 = scalar_lea.vmem %s3, %s159
      %p161 = scmp.lt.s32.totalorder %s14, 1
      %s162 = scalar_select %p161, %s14, 1
      %s163 = smul.addr %s162, 35
      %s164 = smul.addr %s163, 8
      %s165 = scalar_lea.vmem %s0, %s164
      %p166 = scmp.lt.s32.totalorder %s14, 1
      %s167 = scalar_select %p166, %s14, 1
      %s168 = smul.addr %s167, 2
      %s169 = smul.addr %s168, 8
      %s170 = scalar_lea.vmem %s3, %s169
      %v171 = vld [vmem:[%s165] sm:$0xff]
      %v172 = vld [vmem:[%s165 + $0x8] sm:$0xff]
      %v173 = vld [vmem:[%s165 + $0x10] sm:$0xff]
      %v174 = vld [vmem:[%s165 + $0x18] sm:$0xff]
      %v175 = vld [vmem:[%s165 + $0x20] sm:$0xff]
      %v176 = vld [vmem:[%s165 + $0x28] sm:$0xff]
      %v177 = vld [vmem:[%s165 + $0x30] sm:$0xff]
      %v178 = vld [vmem:[%s165 + $0x38] sm:$0xff]
      %v179 = vld [vmem:[%s165 + $0x40] sm:$0xff]
      %v180 = vld [vmem:[%s165 + $0x48] sm:$0xff]
      %v181 = vld [vmem:[%s165 + $0x50] sm:$0xff]
      %v182 = vld [vmem:[%s165 + $0x58] sm:$0xff]
      %v183 = vld [vmem:[%s165 + $0x60] sm:$0xff]
      %v184 = vld [vmem:[%s165 + $0x68] sm:$0xff]
      %v185 = vld [vmem:[%s165 + $0x70] sm:$0xff]
      %v186 = vld [vmem:[%s165 + $0x78] sm:$0xff]
      %v187 = vld [vmem:[%s165 + $0x80] sm:$0xff]
      %v188 = vld [vmem:[%s165 + $0x88] sm:$0xff]
      %v189 = vld [vmem:[%s165 + $0x90] sm:$0xff]
      %v190 = vld [vmem:[%s165 + $0x98] sm:$0xff]
      %v191 = vld [vmem:[%s165 + $0xa0] sm:$0xff]
      %v192 = vld [vmem:[%s165 + $0xa8] sm:$0xff]
      %v193 = vld [vmem:[%s165 + $0xb0] sm:$0xff]
      %v194 = vld [vmem:[%s165 + $0xb8] sm:$0xff]
      %v195 = vld [vmem:[%s165 + $0xc0] sm:$0xff]
      %v196 = vld [vmem:[%s165 + $0xc8] sm:$0xff]
      %v197 = vld [vmem:[%s165 + $0xd0] sm:$0xff]
      %v198 = vld [vmem:[%s165 + $0xd8] sm:$0xff]
      %v199 = vld [vmem:[%s165 + $0xe0] sm:$0xf]
      %v200 = vld [vmem:[%s165 + $0xe8] sm:$0xf]
      %v201 = vld [vmem:[%s165 + $0xf0] sm:$0xf]
      %v202 = vld [vmem:[%s165 + $0xf8] sm:$0xf]
      %v203 = vld [vmem:[%s165 + $0x100] sm:$0xf]
      %v204 = vld [vmem:[%s165 + $0x108] sm:$0xf]
      %v205 = vld [vmem:[%s165 + $0x110] sm:$0xf]
      %v206 = vld [vmem:[%s1] sm:$0xff]
      %v207 = vld [vmem:[%s1 + $0x8] sm:$0xff]
      %v208 = vld [vmem:[%s1 + $0x10] sm:$0xff]
      %v209 = vld [vmem:[%s1 + $0x18] sm:$0xff]
      %v210 = vld [vmem:[%s1 + $0x20] sm:$0xff]
      %v211 = vld [vmem:[%s1 + $0x28] sm:$0xff]
      %v212 = vld [vmem:[%s1 + $0x30] sm:$0xff]
      %v213 = vld [vmem:[%s1 + $0x38] sm:$0xff]
      %v214 = vld [vmem:[%s1 + $0x40] sm:$0xff]
      %v215 = vld [vmem:[%s1 + $0x48] sm:$0xff]
      %v216 = vld [vmem:[%s1 + $0x50] sm:$0xff]
      %v217 = vld [vmem:[%s1 + $0x58] sm:$0xff]
      %v218 = vld [vmem:[%s1 + $0x60] sm:$0xff]
      %v219 = vld [vmem:[%s1 + $0x68] sm:$0xff]
      %v220 = vld [vmem:[%s1 + $0x70] sm:$0xff]
      %v221 = vld [vmem:[%s1 + $0x78] sm:$0xff]
      %v222 = vld [vmem:[%s1 + $0x80] sm:$0xff]
      %v223 = vld [vmem:[%s1 + $0x88] sm:$0xff]
      %v224 = vld [vmem:[%s1 + $0x90] sm:$0xff]
      %v225 = vld [vmem:[%s1 + $0x98] sm:$0xff]
      %v226 = vld [vmem:[%s1 + $0xa0] sm:$0xff]
      %v227 = vld [vmem:[%s1 + $0xa8] sm:$0xff]
      %v228 = vld [vmem:[%s1 + $0xb0] sm:$0xff]
      %v229 = vld [vmem:[%s1 + $0xb8] sm:$0xff]
      %v230 = vld [vmem:[%s1 + $0xc0] sm:$0xff]
      %v231 = vld [vmem:[%s1 + $0xc8] sm:$0xff]
      %v232 = vld [vmem:[%s1 + $0xd0] sm:$0xff]
      %v233 = vld [vmem:[%s1 + $0xd8] sm:$0xff]
      %v234 = vld [vmem:[%s1 + $0xe0] sm:$0xff]
      %v235 = vld [vmem:[%s1 + $0xe8] sm:$0xff]
      %v236 = vld [vmem:[%s1 + $0xf0] sm:$0xff]
      %v237 = vld [vmem:[%s1 + $0xf8] sm:$0xff]
      %v238 = vld [vmem:[%s1 + $0x100] sm:$0xff]
      %v239 = vld [vmem:[%s1 + $0x108] sm:$0xff]
      %v240 = vld [vmem:[%s1 + $0x110] sm:$0xff]
      %v241 = vld [vmem:[%s1 + $0x118] sm:$0xff]
      %v242 = vld [vmem:[%s1 + $0x120] sm:$0xff]
      %v243 = vld [vmem:[%s1 + $0x128] sm:$0xff]
      %v244 = vld [vmem:[%s1 + $0x130] sm:$0xff]
      %v245 = vld [vmem:[%s1 + $0x138] sm:$0xff]
      %v246 = vld [vmem:[%s1 + $0x140] sm:$0xff]
      %v247 = vld [vmem:[%s1 + $0x148] sm:$0xff]
      %v248 = vld [vmem:[%s1 + $0x150] sm:$0xff]
      %v249 = vld [vmem:[%s1 + $0x158] sm:$0xff]
      %v250 = vld [vmem:[%s1 + $0x160] sm:$0xff]
      %v251 = vld [vmem:[%s1 + $0x168] sm:$0xff]
      %v252 = vld [vmem:[%s1 + $0x170] sm:$0xff]
      %v253 = vld [vmem:[%s1 + $0x178] sm:$0xff]
      %v254 = vld [vmem:[%s1 + $0x180] sm:$0xff]
      %v255 = vld [vmem:[%s1 + $0x188] sm:$0xff]
      %v256 = vld [vmem:[%s1 + $0x190] sm:$0xff]
      %v257 = vld [vmem:[%s1 + $0x198] sm:$0xff]
      %v258 = vld [vmem:[%s1 + $0x1a0] sm:$0xff]
      %v259 = vld [vmem:[%s1 + $0x1a8] sm:$0xff]
      %v260 = vld [vmem:[%s1 + $0x1b0] sm:$0xff]
      %v261 = vld [vmem:[%s1 + $0x1b8] sm:$0xff]
      %v262 = vld [vmem:[%s1 + $0x1c0] sm:$0xff]
      %v263 = vld [vmem:[%s1 + $0x1c8] sm:$0xff]
      %v264 = vld [vmem:[%s1 + $0x1d0] sm:$0xff]
      %v265 = vld [vmem:[%s1 + $0x1d8] sm:$0xff]
      %v266 = vld [vmem:[%s1 + $0x1e0] sm:$0xff]
      %v267 = vld [vmem:[%s1 + $0x1e8] sm:$0xff]
      %v268 = vld [vmem:[%s1 + $0x1f0] sm:$0xff]
      %v269 = vld [vmem:[%s1 + $0x1f8] sm:$0xff]
      %v270 = vld [vmem:[%s1 + $0x200] sm:$0xff]
      %v271 = vld [vmem:[%s1 + $0x208] sm:$0xff]
      %v272 = vld [vmem:[%s1 + $0x210] sm:$0xff]
      %v273 = vld [vmem:[%s1 + $0x218] sm:$0xff]
      %v274 = vld [vmem:[%s1 + $0x220] sm:$0xff]
      %v275 = vld [vmem:[%s1 + $0x228] sm:$0xff]
      %v276 = vld [vmem:[%s1 + $0x230] sm:$0xff]
      %v277 = vld [vmem:[%s1 + $0x238] sm:$0xff]
      %v278 = vld [vmem:[%s1 + $0x240] sm:$0xff]
      %v279 = vld [vmem:[%s1 + $0x248] sm:$0xff]
      %v280 = vld [vmem:[%s1 + $0x250] sm:$0xff]
      %v281 = vld [vmem:[%s1 + $0x258] sm:$0xff]
      %v282 = vld [vmem:[%s1 + $0x260] sm:$0xff]
      %v283 = vld [vmem:[%s1 + $0x268] sm:$0xff]
      %v284 = vld [vmem:[%s1 + $0x270] sm:$0xff]
      %v285 = vld [vmem:[%s1 + $0x278] sm:$0xff]
      %v286 = vld [vmem:[%s1 + $0x280] sm:$0xff]
      %v287 = vld [vmem:[%s1 + $0x288] sm:$0xff]
      %v288 = vld [vmem:[%s1 + $0x290] sm:$0xff]
      %v289 = vld [vmem:[%s1 + $0x298] sm:$0xff]
      %v290 = vld [vmem:[%s1 + $0x2a0] sm:$0xff]
      %v291 = vld [vmem:[%s1 + $0x2a8] sm:$0xff]
      %v292 = vld [vmem:[%s1 + $0x2b0] sm:$0xff]
      %v293 = vld [vmem:[%s1 + $0x2b8] sm:$0xff]
      %v294 = vld [vmem:[%s1 + $0x2c0] sm:$0xff]
      %v295 = vld [vmem:[%s1 + $0x2c8] sm:$0xff]
      %v296 = vld [vmem:[%s1 + $0x2d0] sm:$0xff]
      %v297 = vld [vmem:[%s1 + $0x2d8] sm:$0xff]
      %v298 = vld [vmem:[%s1 + $0x2e0] sm:$0xff]
      %v299 = vld [vmem:[%s1 + $0x2e8] sm:$0xff]
      %v300 = vld [vmem:[%s1 + $0x2f0] sm:$0xff]
      %v301 = vld [vmem:[%s1 + $0x2f8] sm:$0xff]
      %v302 = vld [vmem:[%s1 + $0x300] sm:$0xff]
      %v303 = vld [vmem:[%s1 + $0x308] sm:$0xff]
      %v304 = vld [vmem:[%s1 + $0x310] sm:$0xff]
      %v305 = vld [vmem:[%s1 + $0x318] sm:$0xff]
      %v306 = vld [vmem:[%s2] sm:$0x1]
      %v308 = vlaneseq
      %v309 = vshrl.u32 %v308, 7
      %v310 = vsub.s32 0, %v309
      %v311 = vrot.slane %v306, %v310
      %vm313 = vcmask 261120
      %v315 = vsel %vm313, %v177, 0
      %v318 = vsel %vm313, %v184, 0
      %v321 = vsel %vm313, %v191, 0
      %v324 = vsel %vm313, %v198, 0
      %v327 = vsel %vm313, %v205, 0
      %329 = vmatprep.subr.mxu0 0.0
      %330 = vmatpush1.msra.mxu0 %v206
      %331 = vmatprep.subr.mxu0 0.0
      %332 = vmatpush1.msra.mxu0 %v207
      %333 = vmatprep.subr.mxu0 0.0
      %334 = vmatpush1.msra.mxu0 %v208
      %335 = vmatprep.subr.mxu0 0.0
      %336 = vmatpush1.msra.mxu0 %v209
      %337 = vmatprep.subr.mxu0 0.0
      %338 = vmatpush1.msra.mxu0 %v210
      %339 = vmatprep.subr.mxu0 0.0
      %340 = vmatpush1.msra.mxu0 %v211
      %341 = vmatprep.subr.mxu0 0.0
      %342 = vmatpush1.msra.mxu0 %v212
      %343 = vmatprep.subr.mxu0 0.0
      %344 = vmatpush1.msra.mxu0 %v213
      %345 = vmatprep.subr.mxu0 0.0
      %346 = vmatpush1.msra.mxu0 %v214
      %347 = vmatprep.subr.mxu0 0.0
      %348 = vmatpush1.msra.mxu0 %v215
      %349 = vmatprep.subr.mxu0 0.0
      %350 = vmatpush1.msra.mxu0 %v216
      %351 = vmatprep.subr.mxu0 0.0
      %352 = vmatpush1.msra.mxu0 %v217
      %353 = vmatprep.subr.mxu0 0.0
      %354 = vmatpush1.msra.mxu0 %v218
      %355 = vmatprep.subr.mxu0 0.0
      %356 = vmatpush1.msra.mxu0 %v219
      %357 = vmatprep.subr.mxu0 0.0
      %358 = vmatpush1.msra.mxu0 %v220
      %359 = vmatprep.subr.mxu0 0.0
      %360 = vmatpush1.msra.mxu0 %v221
      %361 = vmatprep.subr.mxu0 0.0
      %362 = vmatpush1.msra.mxu0 %v222
      %363 = vmatprep.subr.mxu0 0.0
      %364 = vmatpush1.msra.mxu0 %v223
      %365 = vmatprep.subr.mxu0 0.0
      %366 = vmatpush1.msra.mxu0 %v224
      %367 = vmatprep.subr.mxu0 0.0
      %368 = vmatpush1.msra.mxu0 %v225
      %369 = vmatprep.subr.mxu0 0.0
      %370 = vmatpush1.msra.mxu0 %v226
      %371 = vmatprep.subr.mxu0 0.0
      %372 = vmatpush1.msra.mxu0 %v227
      %373 = vmatprep.subr.mxu0 0.0
      %374 = vmatpush1.msra.mxu0 %v228
      %375 = vmatprep.subr.mxu0 0.0
      %376 = vmatpush1.msra.mxu0 %v229
      %377 = vmatprep.subr.mxu0 0.0
      %378 = vmatpush1.msra.mxu0 %v230
      %379 = vmatprep.subr.mxu0 0.0
      %380 = vmatpush1.msra.mxu0 %v231
      %381 = vmatprep.subr.mxu0 0.0
      %382 = vmatpush1.msra.mxu0 %v232
      %383 = vmatprep.subr.mxu0 0.0
      %384 = vmatpush1.msra.mxu0 %v233
      %385 = vmatprep.subr.mxu0 0.0
      %386 = vmatpush1.msra.mxu0 %v234
      %387 = vmatprep.subr.mxu0 0.0
      %388 = vmatpush1.msra.mxu0 %v235
      %389 = vmatprep.subr.mxu0 0.0
      %390 = vmatpush1.msra.mxu0 %v236
      %391 = vmatprep.subr.mxu0 0.0
      %392 = vmatpush1.msra.mxu0 %v237
      %393 = vmatprep.mubr.f32.mxu0 %v172
      %394 = vmatmul.mubr.f32.gmra.mrb[0].mxu0 %v171
      %v395 = vpop.f32.mrb[0].mxu0
      %v396 = vadd.f32 %v311, %v395
      %v397 = vpop.f32.mrb[0].mxu0
      %398 = vmatprep.mubr.f32.mxu0 %v179
      %399 = vmatmul.mubr.f32.gmra.mrb[0].mxu0 %v178
      %v400 = vpop.f32.mrb[0].mxu0
      %v401 = vadd.f32 %v311, %v400
      %v402 = vpop.f32.mrb[0].mxu0
      %403 = vmatprep.mubr.f32.mxu0 %v186
      %404 = vmatmul.mubr.f32.gmra.mrb[0].mxu0 %v185
      %v405 = vpop.f32.mrb[0].mxu0
      %v406 = vadd.f32 %v311, %v405
      %v407 = vpop.f32.mrb[0].mxu0
      %408 = vmatprep.mubr.f32.mxu0 %v193
      %409 = vmatmul.mubr.f32.gmra.mrb[0].mxu0 %v192
      %v410 = vpop.f32.mrb[0].mxu0
      %v411 = vadd.f32 %v311, %v410
      %v412 = vpop.f32.mrb[0].mxu0
      %413 = vmatprep.mubr.f32.mxu0 %v200
      %414 = vmatmul.mubr.f32.gmra.mrb[0].mxu0 %v199
      %v415 = vpop.f32.mrb[0].mxu0
      %v416 = vadd.f32 %v311, %v415
      %v417 = vpop.f32.mrb[0].mxu0
      %418 = vdwg.mxu0
      %419 = vmatprep.subr.mxu0 0.0
      %420 = vmatpush1.msra.mxu0 %v238
      %421 = vmatprep.subr.mxu0 0.0
      %422 = vmatpush1.msra.mxu0 %v239
      %423 = vmatprep.subr.mxu0 0.0
      %424 = vmatpush1.msra.mxu0 %v240
      %425 = vmatprep.subr.mxu0 0.0
      %426 = vmatpush1.msra.mxu0 %v241
      %427 = vmatprep.subr.mxu0 0.0
      %428 = vmatpush1.msra.mxu0 %v242
      %429 = vmatprep.subr.mxu0 0.0
      %430 = vmatpush1.msra.mxu0 %v243
      %431 = vmatprep.subr.mxu0 0.0
      %432 = vmatpush1.msra.mxu0 %v244
      %433 = vmatprep.subr.mxu0 0.0
      %434 = vmatpush1.msra.mxu0 %v245
      %435 = vmatprep.subr.mxu0 0.0
      %436 = vmatpush1.msra.mxu0 %v246
      %437 = vmatprep.subr.mxu0 0.0
      %438 = vmatpush1.msra.mxu0 %v247
      %439 = vmatprep.subr.mxu0 0.0
      %440 = vmatpush1.msra.mxu0 %v248
      %441 = vmatprep.subr.mxu0 0.0
      %442 = vmatpush1.msra.mxu0 %v249
      %443 = vmatprep.subr.mxu0 0.0
      %444 = vmatpush1.msra.mxu0 %v250
      %445 = vmatprep.subr.mxu0 0.0
      %446 = vmatpush1.msra.mxu0 %v251
      %447 = vmatprep.subr.mxu0 0.0
      %448 = vmatpush1.msra.mxu0 %v252
      %449 = vmatprep.subr.mxu0 0.0
      %450 = vmatpush1.msra.mxu0 %v253
      %451 = vmatprep.subr.mxu0 0.0
      %452 = vmatpush1.msra.mxu0 %v254
      %453 = vmatprep.subr.mxu0 0.0
      %454 = vmatpush1.msra.mxu0 %v255
      %455 = vmatprep.subr.mxu0 0.0
      %456 = vmatpush1.msra.mxu0 %v256
      %457 = vmatprep.subr.mxu0 0.0
      %458 = vmatpush1.msra.mxu0 %v257
      %459 = vmatprep.subr.mxu0 0.0
      %460 = vmatpush1.msra.mxu0 %v258
      %461 = vmatprep.subr.mxu0 0.0
      %462 = vmatpush1.msra.mxu0 %v259
      %463 = vmatprep.subr.mxu0 0.0
      %464 = vmatpush1.msra.mxu0 %v260
      %465 = vmatprep.subr.mxu0 0.0
      %466 = vmatpush1.msra.mxu0 %v261
      %467 = vmatprep.subr.mxu0 0.0
      %468 = vmatpush1.msra.mxu0 %v262
      %469 = vmatprep.subr.mxu0 0.0
      %470 = vmatpush1.msra.mxu0 %v263
      %471 = vmatprep.subr.mxu0 0.0
      %472 = vmatpush1.msra.mxu0 %v264
      %473 = vmatprep.subr.mxu0 0.0
      %474 = vmatpush1.msra.mxu0 %v265
      %475 = vmatprep.subr.mxu0 0.0
      %476 = vmatpush1.msra.mxu0 %v266
      %477 = vmatprep.subr.mxu0 0.0
      %478 = vmatpush1.msra.mxu0 %v267
      %479 = vmatprep.subr.mxu0 0.0
      %480 = vmatpush1.msra.mxu0 %v268
      %481 = vmatprep.subr.mxu0 0.0
      %482 = vmatpush1.msra.mxu0 %v269
      %483 = vmatprep.mubr.f32.mxu0 %v174
      %484 = vmatmul.mubr.f32.gmra.mrb[0].mxu0 %v173
      %v485 = vpop.f32.mrb[0].mxu0
      %v486 = vadd.f32 %v396, %v485
      %v487 = vpop.f32.mrb[0].mxu0
      %488 = vmatprep.mubr.f32.mxu0 %v181
      %489 = vmatmul.mubr.f32.gmra.mrb[0].mxu0 %v180
      %v490 = vpop.f32.mrb[0].mxu0
      %v491 = vadd.f32 %v401, %v490
      %v492 = vpop.f32.mrb[0].mxu0
      %493 = vmatprep.mubr.f32.mxu0 %v188
      %494 = vmatmul.mubr.f32.gmra.mrb[0].mxu0 %v187
      %v495 = vpop.f32.mrb[0].mxu0
      %v496 = vadd.f32 %v406, %v495
      %v497 = vpop.f32.mrb[0].mxu0
      %498 = vmatprep.mubr.f32.mxu0 %v195
      %499 = vmatmul.mubr.f32.gmra.mrb[0].mxu0 %v194
      %v500 = vpop.f32.mrb[0].mxu0
      %v501 = vadd.f32 %v411, %v500
      %v502 = vpop.f32.mrb[0].mxu0
      %503 = vmatprep.mubr.f32.mxu0 %v202
      %504 = vmatmul.mubr.f32.gmra.mrb[0].mxu0 %v201
      %v505 = vpop.f32.mrb[0].mxu0
      %v506 = vadd.f32 %v416, %v505
      %v507 = vpop.f32.mrb[0].mxu0
      %508 = vdwg.mxu0
      %509 = vmatprep.subr.mxu0 0.0
      %510 = vmatpush1.msra.mxu0 %v270
      %511 = vmatprep.subr.mxu0 0.0
      %512 = vmatpush1.msra.mxu0 %v271
      %513 = vmatprep.subr.mxu0 0.0
      %514 = vmatpush1.msra.mxu0 %v272
      %515 = vmatprep.subr.mxu0 0.0
      %516 = vmatpush1.msra.mxu0 %v273
      %517 = vmatprep.subr.mxu0 0.0
      %518 = vmatpush1.msra.mxu0 %v274
      %519 = vmatprep.subr.mxu0 0.0
      %520 = vmatpush1.msra.mxu0 %v275
      %521 = vmatprep.subr.mxu0 0.0
      %522 = vmatpush1.msra.mxu0 %v276
      %523 = vmatprep.subr.mxu0 0.0
      %524 = vmatpush1.msra.mxu0 %v277
      %525 = vmatprep.subr.mxu0 0.0
      %526 = vmatpush1.msra.mxu0 %v278
      %527 = vmatprep.subr.mxu0 0.0
      %528 = vmatpush1.msra.mxu0 %v279
      %529 = vmatprep.subr.mxu0 0.0
      %530 = vmatpush1.msra.mxu0 %v280
      %531 = vmatprep.subr.mxu0 0.0
      %532 = vmatpush1.msra.mxu0 %v281
      %533 = vmatprep.subr.mxu0 0.0
      %534 = vmatpush1.msra.mxu0 %v282
      %535 = vmatprep.subr.mxu0 0.0
      %536 = vmatpush1.msra.mxu0 %v283
      %537 = vmatprep.subr.mxu0 0.0
      %538 = vmatpush1.msra.mxu0 %v284
      %539 = vmatprep.subr.mxu0 0.0
      %540 = vmatpush1.msra.mxu0 %v285
      %541 = vmatprep.subr.mxu0 0.0
      %542 = vmatpush1.msra.mxu0 %v286
      %543 = vmatprep.subr.mxu0 0.0
      %544 = vmatpush1.msra.mxu0 %v287
      %545 = vmatprep.subr.mxu0 0.0
      %546 = vmatpush1.msra.mxu0 %v288
      %547 = vmatprep.subr.mxu0 0.0
      %548 = vmatpush1.msra.mxu0 %v289
      %549 = vmatprep.subr.mxu0 0.0
      %550 = vmatpush1.msra.mxu0 %v290
      %551 = vmatprep.subr.mxu0 0.0
      %552 = vmatpush1.msra.mxu0 %v291
      %553 = vmatprep.subr.mxu0 0.0
      %554 = vmatpush1.msra.mxu0 %v292
      %555 = vmatprep.subr.mxu0 0.0
      %556 = vmatpush1.msra.mxu0 %v293
      %557 = vmatprep.subr.mxu0 0.0
      %558 = vmatpush1.msra.mxu0 %v294
      %559 = vmatprep.subr.mxu0 0.0
      %560 = vmatpush1.msra.mxu0 %v295
      %561 = vmatprep.subr.mxu0 0.0
      %562 = vmatpush1.msra.mxu0 %v296
      %563 = vmatprep.subr.mxu0 0.0
      %564 = vmatpush1.msra.mxu0 %v297
      %565 = vmatprep.subr.mxu0 0.0
      %566 = vmatpush1.msra.mxu0 %v298
      %567 = vmatprep.subr.mxu0 0.0
      %568 = vmatpush1.msra.mxu0 %v299
      %569 = vmatprep.subr.mxu0 0.0
      %570 = vmatpush1.msra.mxu0 %v300
      %571 = vmatprep.subr.mxu0 0.0
      %572 = vmatpush1.msra.mxu0 %v301
      %573 = vmatprep.mubr.f32.mxu0 %v176
      %574 = vmatmul.mubr.f32.gmra.mrb[0].mxu0 %v175
      %v575 = vpop.f32.mrb[0].mxu0
      %v576 = vadd.f32 %v486, %v575
      %v577 = vpop.f32.mrb[0].mxu0
      %578 = vmatprep.mubr.f32.mxu0 %v183
      %579 = vmatmul.mubr.f32.gmra.mrb[0].mxu0 %v182
      %v580 = vpop.f32.mrb[0].mxu0
      %v581 = vadd.f32 %v491, %v580
      %v582 = vpop.f32.mrb[0].mxu0
      %583 = vmatprep.mubr.f32.mxu0 %v190
      %584 = vmatmul.mubr.f32.gmra.mrb[0].mxu0 %v189
      %v585 = vpop.f32.mrb[0].mxu0
      %v586 = vadd.f32 %v496, %v585
      %v587 = vpop.f32.mrb[0].mxu0
      %588 = vmatprep.mubr.f32.mxu0 %v197
      %589 = vmatmul.mubr.f32.gmra.mrb[0].mxu0 %v196
      %v590 = vpop.f32.mrb[0].mxu0
      %v591 = vadd.f32 %v501, %v590
      %v592 = vpop.f32.mrb[0].mxu0
      %593 = vmatprep.mubr.f32.mxu0 %v204
      %594 = vmatmul.mubr.f32.gmra.mrb[0].mxu0 %v203
      %v595 = vpop.f32.mrb[0].mxu0
      %v596 = vadd.f32 %v506, %v595
      %v597 = vpop.f32.mrb[0].mxu0
      %598 = vdwg.mxu0
      %599 = vmatprep.subr.mxu0 0.0
      %600 = vmatpush1.msra.mxu0 %v302
      %601 = vmatprep.subr.mxu0 0.0
      %602 = vmatpush1.msra.mxu0 %v303
      %603 = vmatprep.subr.mxu0 0.0
      %604 = vmatpush1.msra.mxu0 %v304
      %605 = vmatprep.subr.mxu0 0.0
      %606 = vmatpush1.msra.mxu0 %v305
      %607 = vmatprep.subr.mxu0 0.0
      %608 = vmatpush1.msra.mxu0 0.0
      %609 = vmatprep.subr.mxu0 0.0
      %610 = vmatpush1.msra.mxu0 0.0
      %611 = vmatprep.subr.mxu0 0.0
      %612 = vmatpush1.msra.mxu0 0.0
      %613 = vmatprep.subr.mxu0 0.0
      %614 = vmatpush1.msra.mxu0 0.0
      %615 = vmatprep.subr.mxu0 0.0
      %616 = vmatpush1.msra.mxu0 0.0
      %617 = vmatprep.subr.mxu0 0.0
      %618 = vmatpush1.msra.mxu0 0.0
      %619 = vmatprep.subr.mxu0 0.0
      %620 = vmatpush1.msra.mxu0 0.0
      %621 = vmatprep.subr.mxu0 0.0
      %622 = vmatpush1.msra.mxu0 0.0
      %623 = vmatprep.subr.mxu0 0.0
      %624 = vmatpush1.msra.mxu0 0.0
      %625 = vmatprep.subr.mxu0 0.0
      %626 = vmatpush1.msra.mxu0 0.0
      %627 = vmatprep.subr.mxu0 0.0
      %628 = vmatpush1.msra.mxu0 0.0
      %629 = vmatprep.subr.mxu0 0.0
      %630 = vmatpush1.msra.mxu0 0.0
      %631 = vmatprep.subr.mxu0 0.0
      %632 = vmatpush1.msra.mxu0 0.0
      %633 = vmatprep.subr.mxu0 0.0
      %634 = vmatpush1.msra.mxu0 0.0
      %635 = vmatprep.subr.mxu0 0.0
      %636 = vmatpush1.msra.mxu0 0.0
      %637 = vmatprep.subr.mxu0 0.0
      %638 = vmatpush1.msra.mxu0 0.0
      %639 = vmatprep.subr.mxu0 0.0
      %640 = vmatpush1.msra.mxu0 0.0
      %641 = vmatprep.subr.mxu0 0.0
      %642 = vmatpush1.msra.mxu0 0.0
      %643 = vmatprep.subr.mxu0 0.0
      %644 = vmatpush1.msra.mxu0 0.0
      %645 = vmatprep.subr.mxu0 0.0
      %646 = vmatpush1.msra.mxu0 0.0
      %647 = vmatprep.subr.mxu0 0.0
      %648 = vmatpush1.msra.mxu0 0.0
      %649 = vmatprep.subr.mxu0 0.0
      %650 = vmatpush1.msra.mxu0 0.0
      %651 = vmatprep.subr.mxu0 0.0
      %652 = vmatpush1.msra.mxu0 0.0
      %653 = vmatprep.subr.mxu0 0.0
      %654 = vmatpush1.msra.mxu0 0.0
      %655 = vmatprep.subr.mxu0 0.0
      %656 = vmatpush1.msra.mxu0 0.0
      %657 = vmatprep.subr.mxu0 0.0
      %658 = vmatpush1.msra.mxu0 0.0
      %659 = vmatprep.subr.mxu0 0.0
      %660 = vmatpush1.msra.mxu0 0.0
      %661 = vmatprep.subr.mxu0 0.0
      %662 = vmatpush1.msra.mxu0 0.0
      %663 = vmatprep.mubr.f32.mxu0 0.0
      %664 = vmatmul.mubr.f32.gmra.mrb[0].mxu0 %v315
      %v665 = vpop.f32.mrb[0].mxu0
      %v666 = vadd.f32 %v576, %v665
      %v667 = vpop.f32.mrb[0].mxu0
      %668 = vmatprep.mubr.f32.mxu0 0.0
      %669 = vmatmul.mubr.f32.gmra.mrb[0].mxu0 %v318
      %v670 = vpop.f32.mrb[0].mxu0
      %v671 = vadd.f32 %v581, %v670
      %v672 = vpop.f32.mrb[0].mxu0
      %673 = vmatprep.mubr.f32.mxu0 0.0
      %674 = vmatmul.mubr.f32.gmra.mrb[0].mxu0 %v321
      %v675 = vpop.f32.mrb[0].mxu0
      %v676 = vadd.f32 %v586, %v675
      %v677 = vpop.f32.mrb[0].mxu0
      %678 = vmatprep.mubr.f32.mxu0 0.0
      %679 = vmatmul.mubr.f32.gmra.mrb[0].mxu0 %v324
      %v680 = vpop.f32.mrb[0].mxu0
      %v681 = vadd.f32 %v591, %v680
      %v682 = vpop.f32.mrb[0].mxu0
      %683 = vmatprep.mubr.f32.mxu0 0.0
      %684 = vmatmul.mubr.f32.gmra.mrb[0].mxu0 %v327
      %v685 = vpop.f32.mrb[0].mxu0
      %v686 = vadd.f32 %v596, %v685
      %v687 = vpop.f32.mrb[0].mxu0
      %688 = vdwg.mxu0
      %v689 = vmax.f32 %v666, 0.0
      %v690 = vmax.f32 %v671, 0.0
      %v691 = vmax.f32 %v676, 0.0
      %v692 = vmax.f32 %v681, 0.0
      %v693 = vmax.f32 %v686, 0.0
      %vm696 = vcmask 1046528
      %v697 = vrot.slane %v690, 1
      %v698 = vrot.slane %v691, 1
      %v699 = vsel %vm696, %v697, %v698
      %v702 = vmax.f32 %v689, %v699
      %v703 = vmax.f32 %v690, %v698
      %v706 = vrot.slane %v692, 1
      %v707 = vrot.slane %v693, 1
      %v708 = vsel %vm696, %v706, %v707
      %v711 = vmax.f32 %v691, %v708
      %v712 = vmax.f32 %v692, %v707
      %vm715 = vcmask 1045504
      %v716 = vrot.slane %v711, 2
      %v717 = vrot.slane %v712, 2
      %v718 = vsel %vm715, %v716, %v717
      %v721 = vmax.f32 %v702, %v718
      %v722 = vmax.f32 %v703, %v717
      %vm723 = vcmask 523264
      %724 = vst.msk [vmem:[%s170] sm:$0xff] %vm723, %v721
      %vm725 = vcmask 516096
      %726 = vst.msk [vmem:[%s170 + $0x8] sm:$0x1] %vm725, %v722
      %p727 = scmp.lt.s32.totalorder %s14, 1
      %s728 = scalar_select %p727, %s14, 1
      %s729 = smul.addr %s728, 2
      %s730 = smul.addr %s729, 8
      %s731 = scalar_lea.vmem %s3, %s730
      // Predicated region
      $region33: #{forward.6} parent=31 // pred_check
        %p732 = pneg %p100
      $region34: #{forward.6} parent=31 // pred_check_branch
        %734 = sbr.rel (%p732) target = $region36
      $region35: #{forward.6} parent=31 // pred_region
        _
      $region36: #{forward.6} parent=31 // pred_fallthru
        _
    $region32: #{forward.6} parent=5 // pred_fallthru
      _
    %p735 = scmp.le.s32.totalorder 2, %s9
    // Predicated region
    $region37: #{forward.6} parent=5 // pred_check
      %p736 = pneg %p735
    $region38: #{forward.6} parent=5 // pred_check_branch
      %738 = sbr.rel (%p736) target = $region40
    $region39: #{forward.6} parent=5 // pred_region
      %s739 = ssub.s32 %s9, 2
      // Predicated region
      $region41: #{forward.6} parent=39 // pred_check
        %p740 = pneg %p106
      $region42: #{forward.6} parent=39 // pred_check_branch
        %742 = sbr.rel (%p740) target = $region44
      $region43: #{forward.6} parent=39 // pred_region
        %p743 = scmp.lt.s32.totalorder %s15, 1
        %s744 = scalar_select %p743, %s15, 1
        %s745 = smul.addr %s744, 2
        %s746 = smul.addr %s745, 8
        %s747 = scalar_lea.vmem %s3, %s746
      $region44: #{forward.6} parent=39 // pred_fallthru
        _
    $region40: #{forward.6} parent=5 // pred_fallthru
      _
  $region6: #{forward.6} parent=0 // loop_footer
    %s13 = sadd.s32 1, %s9
  $region7: #{forward.6} parent=0 // loop_footer_branch
    %8 = sbr.rel target = $region3
  $region8: #{forward.6} parent=0 // loop_exit
    _

// kernel: forward.7
$region0: #{forward.7}
  #allocation0 [shape = 'u32[]', space=smem, size = 0x4, offset = 0x4, fixed_abs, tag = 'smem constant byte address 0x4 - core index']
  #allocation1 [shape = 'u32[144,128]{1,0:T(1,128)}', space=vmem, size = 0x12000, scoped, tag = 'internal scratch']
  #allocation2 [shape = 'f32[1,1]{1,0:T(1,128)S(1)}', space=vmem, size = 0x200, scoped, tag = 'scoped memory for forward.7']
  %s0 = inlined_call_operand.vmem [shape: f32[2,576], index: 0, kind: input, shape index: {}]
  %s1 = inlined_call_operand.vmem [shape: f32[16,4], index: 1, kind: input, shape index: {}]
  %s2 = inlined_call_operand.vmem [shape: f32[2,2], index: 2, kind: input, shape index: {}]
  %s3 = inlined_call_operand.vmem [shape: f32[576,32], index: 3, kind: input, shape index: {}]
  %s4 = inlined_call_operand.vmem [shape: f32[1,32], index: 4, kind: input, shape index: {}]
  %s5 = inlined_call_operand.vmem [shape: f32[4,128], index: 5, kind: input, shape index: {}]
  %s6 = inlined_call_operand.vmem [shape: f32[32,128], index: 6, kind: input, shape index: {}]
  %s7 = inlined_call_operand.vmem [shape: f32[1,128], index: 7, kind: input, shape index: {}]
  %s8 = inlined_call_operand.vmem [shape: f32[32,32], index: 8, kind: input, shape index: {}]
  %s9 = inlined_call_operand.vmem [shape: f32[32,32], index: 9, kind: input, shape index: {}]
  %s10 = inlined_call_operand.vmem [shape: f32[32,16], index: 10, kind: input, shape index: {}]
  %s11 = inlined_call_operand.vmem [shape: f32[32,32], index: 11, kind: input, shape index: {}]
  %s12 = inlined_call_operand.vmem [shape: f32[1,32], index: 12, kind: input, shape index: {}]
  %s13 = inlined_call_operand.vmem [shape: f32[32,32], index: 13, kind: input, shape index: {}]
  %s14 = inlined_call_operand.vmem [shape: f32[1,32], index: 14, kind: input, shape index: {}]
  %s15 = inlined_call_operand.vmem [shape: f32[16,16], index: 15, kind: input, shape index: {}]
  %s16 = inlined_call_operand.vmem [shape: f32[1,16], index: 16, kind: input, shape index: {}]
  %s17 = inlined_call_operand.vmem [shape: f32[16,32], index: 17, kind: input, shape index: {}]
  %s18 = inlined_call_operand.vmem [shape: f32[1,32], index: 18, kind: input, shape index: {}]
  %s19 = inlined_call_operand.vmem [shape: f32[64,128], index: 19, kind: input, shape index: {}]
  %s20 = inlined_call_operand.vmem [shape: f32[1,128], index: 20, kind: input, shape index: {}]
  %s21 = inlined_call_operand.vmem [shape: f32[128,64], index: 21, kind: input, shape index: {}]
  %s22 = inlined_call_operand.vmem [shape: f32[1,64], index: 22, kind: input, shape index: {}]
  %s23 = inlined_call_operand.vmem [shape: f32[64,32], index: 23, kind: input, shape index: {}]
  %s24 = inlined_call_operand.vmem [shape: f32[1,32], index: 24, kind: input, shape index: {}]
  %s25 = inlined_call_operand.vmem [shape: f32[32,1], index: 25, kind: input, shape index: {}]
  %s26 = inlined_call_operand.<no memory space> [shape: f32[1,1], index: 26, kind: input, shape index: {}]
  %s27 = inlined_call_operand.vmem [shape: f32[2,1], index: 27, kind: output, shape index: {}]
  %s28 = sld [smem:[#allocation0]]
  $region118: #{forward.7} parent=0
    _
  %s30 = ssub.s32 1, %s28
  %s31 = scalar_select 0, %s30, %s28
  %v32 = vstv %s26
  %33 = vst [vmem:[#allocation2] sm:$0x1] %v32
  // Predicated region
  $region2: #{forward.7} parent=0 // pred_check
    _
  $region3: #{forward.7} parent=0 // pred_check_branch
    %35 = sbr.rel (0) target = $region5
  $region4: #{forward.7} parent=0 // pred_region
    _
  $region5: #{forward.7} parent=0 // pred_fallthru
    _
  // Predicated region
  $region6: #{forward.7} parent=0 // pred_check
    _
  $region7: #{forward.7} parent=0 // pred_check_branch
    %37 = sbr.rel (0) target = $region9
  $region8: #{forward.7} parent=0 // pred_region
    _
  $region9: #{forward.7} parent=0 // pred_fallthru
    _
  // Predicated region
  $region10: #{forward.7} parent=0 // pred_check
    _
  $region11: #{forward.7} parent=0 // pred_check_branch
    %39 = sbr.rel (0) target = $region13
  $region12: #{forward.7} parent=0 // pred_region
    _
  $region13: #{forward.7} parent=0 // pred_fallthru
    _
  // Predicated region
  $region14: #{forward.7} parent=0 // pred_check
    _
  $region15: #{forward.7} parent=0 // pred_check_branch
    %41 = sbr.rel (0) target = $region17
  $region16: #{forward.7} parent=0 // pred_region
    _
  $region17: #{forward.7} parent=0 // pred_fallthru
    _
  // Predicated region
  $region18: #{forward.7} parent=0 // pred_check
    _
  $region19: #{forward.7} parent=0 // pred_check_branch
    %43 = sbr.rel (0) target = $region21
  $region20: #{forward.7} parent=0 // pred_region
    _
  $region21: #{forward.7} parent=0 // pred_fallthru
    _
  // Predicated region
  $region22: #{forward.7} parent=0 // pred_check
    _
  $region23: #{forward.7} parent=0 // pred_check_branch
    %45 = sbr.rel (0) target = $region25
  $region24: #{forward.7} parent=0 // pred_region
    _
  $region25: #{forward.7} parent=0 // pred_fallthru
    _
  // Predicated region
  $region26: #{forward.7} parent=0 // pred_check
    _
  $region27: #{forward.7} parent=0 // pred_check_branch
    %47 = sbr.rel (0) target = $region29
  $region28: #{forward.7} parent=0 // pred_region
    _
  $region29: #{forward.7} parent=0 // pred_fallthru
    _
  // Predicated region
  $region30: #{forward.7} parent=0 // pred_check
    _
  $region31: #{forward.7} parent=0 // pred_check_branch
    %49 = sbr.rel (0) target = $region33
  $region32: #{forward.7} parent=0 // pred_region
    _
  $region33: #{forward.7} parent=0 // pred_fallthru
    _
  // Predicated region
  $region34: #{forward.7} parent=0 // pred_check
    _
  $region35: #{forward.7} parent=0 // pred_check_branch
    %51 = sbr.rel (0) target = $region37
  $region36: #{forward.7} parent=0 // pred_region
    _
  $region37: #{forward.7} parent=0 // pred_fallthru
    _
  // Predicated region
  $region38: #{forward.7} parent=0 // pred_check
    _
  $region39: #{forward.7} parent=0 // pred_check_branch
    %53 = sbr.rel (0) target = $region41
  $region40: #{forward.7} parent=0 // pred_region
    _
  $region41: #{forward.7} parent=0 // pred_fallthru
    _
  // Predicated region
  $region42: #{forward.7} parent=0 // pred_check
    _
  $region43: #{forward.7} parent=0 // pred_check_branch
    %55 = sbr.rel (0) target = $region45
  $region44: #{forward.7} parent=0 // pred_region
    _
  $region45: #{forward.7} parent=0 // pred_fallthru
    _
  // Predicated region
  $region46: #{forward.7} parent=0 // pred_check
    _
  $region47: #{forward.7} parent=0 // pred_check_branch
    %57 = sbr.rel (0) target = $region49
  $region48: #{forward.7} parent=0 // pred_region
    _
  $region49: #{forward.7} parent=0 // pred_fallthru
    _
  // Predicated region
  $region50: #{forward.7} parent=0 // pred_check
    _
  $region51: #{forward.7} parent=0 // pred_check_branch
    %59 = sbr.rel (0) target = $region53
  $region52: #{forward.7} parent=0 // pred_region
    _
  $region53: #{forward.7} parent=0 // pred_fallthru
    _
  // Predicated region
  $region54: #{forward.7} parent=0 // pred_check
    _
  $region55: #{forward.7} parent=0 // pred_check_branch
    %61 = sbr.rel (0) target = $region57
  $region56: #{forward.7} parent=0 // pred_region
    _
  $region57: #{forward.7} parent=0 // pred_fallthru
    _
  // Predicated region
  $region58: #{forward.7} parent=0 // pred_check
    _
  $region59: #{forward.7} parent=0 // pred_check_branch
    %63 = sbr.rel (0) target = $region61
  $region60: #{forward.7} parent=0 // pred_region
    _
  $region61: #{forward.7} parent=0 // pred_fallthru
    _
  // Predicated region
  $region62: #{forward.7} parent=0 // pred_check
    _
  $region63: #{forward.7} parent=0 // pred_check_branch
    %65 = sbr.rel (0) target = $region65
  $region64: #{forward.7} parent=0 // pred_region
    _
  $region65: #{forward.7} parent=0 // pred_fallthru
    _
  // Predicated region
  $region66: #{forward.7} parent=0 // pred_check
    _
  $region67: #{forward.7} parent=0 // pred_check_branch
    %67 = sbr.rel (0) target = $region69
  $region68: #{forward.7} parent=0 // pred_region
    _
  $region69: #{forward.7} parent=0 // pred_fallthru
    _
  // Predicated region
  $region70: #{forward.7} parent=0 // pred_check
    _
  $region71: #{forward.7} parent=0 // pred_check_branch
    %69 = sbr.rel (0) target = $region73
  $region72: #{forward.7} parent=0 // pred_region
    _
  $region73: #{forward.7} parent=0 // pred_fallthru
    _
  // Predicated region
  $region74: #{forward.7} parent=0 // pred_check
    _
  $region75: #{forward.7} parent=0 // pred_check_branch
    %71 = sbr.rel (0) target = $region77
  $region76: #{forward.7} parent=0 // pred_region
    _
  $region77: #{forward.7} parent=0 // pred_fallthru
    _
  // Predicated region
  $region78: #{forward.7} parent=0 // pred_check
    _
  $region79: #{forward.7} parent=0 // pred_check_branch
    %73 = sbr.rel (0) target = $region81
  $region80: #{forward.7} parent=0 // pred_region
    _
  $region81: #{forward.7} parent=0 // pred_fallthru
    _
  // Predicated region
  $region82: #{forward.7} parent=0 // pred_check
    _
  $region83: #{forward.7} parent=0 // pred_check_branch
    %75 = sbr.rel (0) target = $region85
  $region84: #{forward.7} parent=0 // pred_region
    _
  $region85: #{forward.7} parent=0 // pred_fallthru
    _
  // Predicated region
  $region86: #{forward.7} parent=0 // pred_check
    _
  $region87: #{forward.7} parent=0 // pred_check_branch
    %77 = sbr.rel (0) target = $region89
  $region88: #{forward.7} parent=0 // pred_region
    _
  $region89: #{forward.7} parent=0 // pred_fallthru
    _
  // Predicated region
  $region90: #{forward.7} parent=0 // pred_check
    _
  $region91: #{forward.7} parent=0 // pred_check_branch
    %79 = sbr.rel (0) target = $region93
  $region92: #{forward.7} parent=0 // pred_region
    _
  $region93: #{forward.7} parent=0 // pred_fallthru
    _
  // Predicated region
  $region94: #{forward.7} parent=0 // pred_check
    _
  $region95: #{forward.7} parent=0 // pred_check_branch
    %81 = sbr.rel (0) target = $region97
  $region96: #{forward.7} parent=0 // pred_region
    _
  $region97: #{forward.7} parent=0 // pred_fallthru
    _
  // Predicated region
  $region98: #{forward.7} parent=0 // pred_check
    _
  $region99: #{forward.7} parent=0 // pred_check_branch
    %83 = sbr.rel (0) target = $region101
  $region100: #{forward.7} parent=0 // pred_region
    _
  $region101: #{forward.7} parent=0 // pred_fallthru
    _
  // Predicated region
  $region102: #{forward.7} parent=0 // pred_check
    _
  $region103: #{forward.7} parent=0 // pred_check_branch
    %85 = sbr.rel (0) target = $region105
  $region104: #{forward.7} parent=0 // pred_region
    _
  $region105: #{forward.7} parent=0 // pred_fallthru
    _
  // Predicated region
  $region106: #{forward.7} parent=0 // pred_check
    _
  $region107: #{forward.7} parent=0 // pred_check_branch
    %87 = sbr.rel (0) target = $region109
  $region108: #{forward.7} parent=0 // pred_region
    _
  $region109: #{forward.7} parent=0 // pred_fallthru
    _
  %v88 = vld [vmem:[%s0] sm:$0xff]
  %v89 = vld [vmem:[%s0 + $0x8] sm:$0x3]
  %v90 = vld [vmem:[%s3] sm:$0xff]
  %v91 = vld [vmem:[%s3 + $0x8] sm:$0xff]
  %v92 = vld [vmem:[%s3 + $0x10] sm:$0xff]
  %v93 = vld [vmem:[%s3 + $0x18] sm:$0xff]
  %v94 = vld [vmem:[%s3 + $0x20] sm:$0xff]
  %v95 = vld [vmem:[%s3 + $0x28] sm:$0xff]
  %v96 = vld [vmem:[%s3 + $0x30] sm:$0xff]
  %v97 = vld [vmem:[%s3 + $0x38] sm:$0xff]
  %v98 = vld [vmem:[%s3 + $0x40] sm:$0xff]
  %v99 = vld [vmem:[%s3 + $0x48] sm:$0xff]
  %v100 = vld [vmem:[%s3 + $0x50] sm:$0xff]
  %v101 = vld [vmem:[%s3 + $0x58] sm:$0xff]
  %v102 = vld [vmem:[%s3 + $0x60] sm:$0xff]
  %v103 = vld [vmem:[%s3 + $0x68] sm:$0xff]
  %v104 = vld [vmem:[%s3 + $0x70] sm:$0xff]
  %v105 = vld [vmem:[%s3 + $0x78] sm:$0xff]
  %v106 = vld [vmem:[%s3 + $0x80] sm:$0xff]
  %v107 = vld [vmem:[%s3 + $0x88] sm:$0xff]
  %v108 = vld [vmem:[%s3 + $0x90] sm:$0xff]
  %v109 = vld [vmem:[%s3 + $0x98] sm:$0xff]
  %v110 = vld [vmem:[%s3 + $0xa0] sm:$0xff]
  %v111 = vld [vmem:[%s3 + $0xa8] sm:$0xff]
  %v112 = vld [vmem:[%s3 + $0xb0] sm:$0xff]
  %v113 = vld [vmem:[%s3 + $0xb8] sm:$0xff]
  %v114 = vld [vmem:[%s3 + $0xc0] sm:$0xff]
  %v115 = vld [vmem:[%s3 + $0xc8] sm:$0xff]
  %v116 = vld [vmem:[%s3 + $0xd0] sm:$0xff]
  %v117 = vld [vmem:[%s3 + $0xd8] sm:$0xff]
  %v118 = vld [vmem:[%s3 + $0xe0] sm:$0xff]
  %v119 = vld [vmem:[%s3 + $0xe8] sm:$0xff]
  %v120 = vld [vmem:[%s3 + $0xf0] sm:$0xff]
  %v121 = vld [vmem:[%s3 + $0xf8] sm:$0xff]
  %v122 = vld [vmem:[%s3 + $0x100] sm:$0xff]
  %v123 = vld [vmem:[%s3 + $0x108] sm:$0xff]
  %v124 = vld [vmem:[%s3 + $0x110] sm:$0xff]
  %v125 = vld [vmem:[%s3 + $0x118] sm:$0xff]
  %v126 = vld [vmem:[%s3 + $0x120] sm:$0xff]
  %v127 = vld [vmem:[%s3 + $0x128] sm:$0xff]
  %v128 = vld [vmem:[%s3 + $0x130] sm:$0xff]
  %v129 = vld [vmem:[%s3 + $0x138] sm:$0xff]
  %v130 = vld [vmem:[%s3 + $0x140] sm:$0xff]
  %v131 = vld [vmem:[%s3 + $0x148] sm:$0xff]
  %v132 = vld [vmem:[%s3 + $0x150] sm:$0xff]
  %v133 = vld [vmem:[%s3 + $0x158] sm:$0xff]
  %v134 = vld [vmem:[%s3 + $0x160] sm:$0xff]
  %v135 = vld [vmem:[%s3 + $0x168] sm:$0xff]
  %v136 = vld [vmem:[%s3 + $0x170] sm:$0xff]
  %v137 = vld [vmem:[%s3 + $0x178] sm:$0xff]
  %v138 = vld [vmem:[%s3 + $0x180] sm:$0xff]
  %v139 = vld [vmem:[%s3 + $0x188] sm:$0xff]
  %v140 = vld [vmem:[%s3 + $0x190] sm:$0xff]
  %v141 = vld [vmem:[%s3 + $0x198] sm:$0xff]
  %v142 = vld [vmem:[%s3 + $0x1a0] sm:$0xff]
  %v143 = vld [vmem:[%s3 + $0x1a8] sm:$0xff]
  %v144 = vld [vmem:[%s3 + $0x1b0] sm:$0xff]
  %v145 = vld [vmem:[%s3 + $0x1b8] sm:$0xff]
  %v146 = vld [vmem:[%s3 + $0x1c0] sm:$0xff]
  %v147 = vld [vmem:[%s3 + $0x1c8] sm:$0xff]
  %v148 = vld [vmem:[%s3 + $0x1d0] sm:$0xff]
  %v149 = vld [vmem:[%s3 + $0x1d8] sm:$0xff]
  %v150 = vld [vmem:[%s3 + $0x1e0] sm:$0xff]
  %v151 = vld [vmem:[%s3 + $0x1e8] sm:$0xff]
  %v152 = vld [vmem:[%s3 + $0x1f0] sm:$0xff]
  %v153 = vld [vmem:[%s3 + $0x1f8] sm:$0xff]
  %v154 = vld [vmem:[%s3 + $0x200] sm:$0xff]
  %v155 = vld [vmem:[%s3 + $0x208] sm:$0xff]
  %v156 = vld [vmem:[%s3 + $0x210] sm:$0xff]
  %v157 = vld [vmem:[%s3 + $0x218] sm:$0xff]
  %v158 = vld [vmem:[%s3 + $0x220] sm:$0xff]
  %v159 = vld [vmem:[%s3 + $0x228] sm:$0xff]
  %v160 = vld [vmem:[%s3 + $0x230] sm:$0xff]
  %v161 = vld [vmem:[%s3 + $0x238] sm:$0xff]
  %v162 = vld [vmem:[%s4] sm:$0x1]
  %v164 = vlaneseq
  %v165 = vshrl.u32 %v164, 7
  %v166 = vsub.s32 0, %v165
  %v167 = vrot.slane %v162, %v166
  %v171 = vcombine.high %v88, %v88
  %v173 = vunpack.c.l.s4 1983009808
  %v174 = vunpack.c.0.s8 %v173
  %v175 = vlaneseq
  %v176 = vshrl.u32 %v175, 7
  %v177 = vsub.s32 %v174, %v176
  %v178 = vrot.slane %v88, %v177
  %v180 = vunpack.c.l.s4 1983009808
  %v181 = vunpack.c.0.s8 %v180
  %v182 = vlaneseq
  %v183 = vshrl.u32 %v182, 7
  %v184 = vsub.s32 %v181, %v183
  %v185 = vrot.slane %v171, %v184
  %v186 = vcombine.high %v178, %v178
  %v187 = vcombine.high %v185, %v185
  %v189 = vunpack.c.l.s4 1983009808
  %v190 = vunpack.c.0.s8 %v189
  %v191 = vlaneseq
  %v192 = vshrl.u32 %v191, 7
  %v193 = vsub.s32 %v190, %v192
  %v194 = vrot.slane %v89, %v193
  %vm199 = vcmask 523264
  %v200 = vsel %vm199, %v194, 0
  %202 = vmatprep.subr.mxu0 0.0
  %203 = vmatpush1.msra.mxu0 %v90
  %204 = vmatprep.subr.mxu0 0.0
  %205 = vmatpush1.msra.mxu0 %v91
  %206 = vmatprep.subr.mxu0 0.0
  %207 = vmatpush1.msra.mxu0 %v92
  %208 = vmatprep.subr.mxu0 0.0
  %209 = vmatpush1.msra.mxu0 %v93
  %210 = vmatprep.subr.mxu0 0.0
  %211 = vmatpush1.msra.mxu0 %v94
  %212 = vmatprep.subr.mxu0 0.0
  %213 = vmatpush1.msra.mxu0 %v95
  %214 = vmatprep.subr.mxu0 0.0
  %215 = vmatpush1.msra.mxu0 %v96
  %216 = vmatprep.subr.mxu0 0.0
  %217 = vmatpush1.msra.mxu0 %v97
  %218 = vmatprep.subr.mxu0 0.0
  %219 = vmatpush1.msra.mxu0 %v98
  %220 = vmatprep.subr.mxu0 0.0
  %221 = vmatpush1.msra.mxu0 %v99
  %222 = vmatprep.subr.mxu0 0.0
  %223 = vmatpush1.msra.mxu0 %v100
  %224 = vmatprep.subr.mxu0 0.0
  %225 = vmatpush1.msra.mxu0 %v101
  %226 = vmatprep.subr.mxu0 0.0
  %227 = vmatpush1.msra.mxu0 %v102
  %228 = vmatprep.subr.mxu0 0.0
  %229 = vmatpush1.msra.mxu0 %v103
  %230 = vmatprep.subr.mxu0 0.0
  %231 = vmatpush1.msra.mxu0 %v104
  %232 = vmatprep.subr.mxu0 0.0
  %233 = vmatpush1.msra.mxu0 %v105
  %234 = vmatprep.subr.mxu0 0.0
  %235 = vmatpush1.msra.mxu0 %v106
  %236 = vmatprep.subr.mxu0 0.0
  %237 = vmatpush1.msra.mxu0 %v107
  %238 = vmatprep.subr.mxu0 0.0
  %239 = vmatpush1.msra.mxu0 %v108
  %240 = vmatprep.subr.mxu0 0.0
  %241 = vmatpush1.msra.mxu0 %v109
  %242 = vmatprep.subr.mxu0 0.0
  %243 = vmatpush1.msra.mxu0 %v110
  %244 = vmatprep.subr.mxu0 0.0
  %245 = vmatpush1.msra.mxu0 %v111
  %246 = vmatprep.subr.mxu0 0.0
  %247 = vmatpush1.msra.mxu0 %v112
  %248 = vmatprep.subr.mxu0 0.0
  %249 = vmatpush1.msra.mxu0 %v113
  %250 = vmatprep.subr.mxu0 0.0
  %251 = vmatpush1.msra.mxu0 %v114
  %252 = vmatprep.subr.mxu0 0.0
  %253 = vmatpush1.msra.mxu0 %v115
  %254 = vmatprep.subr.mxu0 0.0
  %255 = vmatpush1.msra.mxu0 %v116
  %256 = vmatprep.subr.mxu0 0.0
  %257 = vmatpush1.msra.mxu0 %v117
  %258 = vmatprep.subr.mxu0 0.0
  %259 = vmatpush1.msra.mxu0 %v118
  %260 = vmatprep.subr.mxu0 0.0
  %261 = vmatpush1.msra.mxu0 %v119
  %262 = vmatprep.subr.mxu0 0.0
  %263 = vmatpush1.msra.mxu0 %v120
  %264 = vmatprep.subr.mxu0 0.0
  %265 = vmatpush1.msra.mxu0 %v121
  %266 = vmatprep.mubr.f32.mxu0 %v186
  %267 = vmatmul.mubr.f32.gmra.mrb[0].mxu0 %v178
  %v268 = vpop.f32.mrb[0].mxu0
  %v269 = vadd.f32 %v167, %v268
  %v270 = vpop.f32.mrb[0].mxu0
  %271 = vdwg.mxu0
  %272 = vmatprep.subr.mxu0 0.0
  %273 = vmatpush1.msra.mxu0 %v122
  %274 = vmatprep.subr.mxu0 0.0
  %275 = vmatpush1.msra.mxu0 %v123
  %276 = vmatprep.subr.mxu0 0.0
  %277 = vmatpush1.msra.mxu0 %v124
  %278 = vmatprep.subr.mxu0 0.0
  %279 = vmatpush1.msra.mxu0 %v125
  %280 = vmatprep.subr.mxu0 0.0
  %281 = vmatpush1.msra.mxu0 %v126
  %282 = vmatprep.subr.mxu0 0.0
  %283 = vmatpush1.msra.mxu0 %v127
  %284 = vmatprep.subr.mxu0 0.0
  %285 = vmatpush1.msra.mxu0 %v128
  %286 = vmatprep.subr.mxu0 0.0
  %287 = vmatpush1.msra.mxu0 %v129
  %288 = vmatprep.subr.mxu0 0.0
  %289 = vmatpush1.msra.mxu0 %v130
  %290 = vmatprep.subr.mxu0 0.0
  %291 = vmatpush1.msra.mxu0 %v131
  %292 = vmatprep.subr.mxu0 0.0
  %293 = vmatpush1.msra.mxu0 %v132
  %294 = vmatprep.subr.mxu0 0.0
  %295 = vmatpush1.msra.mxu0 %v133
  %296 = vmatprep.subr.mxu0 0.0
  %297 = vmatpush1.msra.mxu0 %v134
  %298 = vmatprep.subr.mxu0 0.0
  %299 = vmatpush1.msra.mxu0 %v135
  %300 = vmatprep.subr.mxu0 0.0
  %301 = vmatpush1.msra.mxu0 %v136
  %302 = vmatprep.subr.mxu0 0.0
  %303 = vmatpush1.msra.mxu0 %v137
  %304 = vmatprep.subr.mxu0 0.0
  %305 = vmatpush1.msra.mxu0 %v138
  %306 = vmatprep.subr.mxu0 0.0
  %307 = vmatpush1.msra.mxu0 %v139
  %308 = vmatprep.subr.mxu0 0.0
  %309 = vmatpush1.msra.mxu0 %v140
  %310 = vmatprep.subr.mxu0 0.0
  %311 = vmatpush1.msra.mxu0 %v141
  %312 = vmatprep.subr.mxu0 0.0
  %313 = vmatpush1.msra.mxu0 %v142
  %314 = vmatprep.subr.mxu0 0.0
  %315 = vmatpush1.msra.mxu0 %v143
  %316 = vmatprep.subr.mxu0 0.0
  %317 = vmatpush1.msra.mxu0 %v144
  %318 = vmatprep.subr.mxu0 0.0
  %319 = vmatpush1.msra.mxu0 %v145
  %320 = vmatprep.subr.mxu0 0.0
  %321 = vmatpush1.msra.mxu0 %v146
  %322 = vmatprep.subr.mxu0 0.0
  %323 = vmatpush1.msra.mxu0 %v147
  %324 = vmatprep.subr.mxu0 0.0
  %325 = vmatpush1.msra.mxu0 %v148
  %326 = vmatprep.subr.mxu0 0.0
  %327 = vmatpush1.msra.mxu0 %v149
  %328 = vmatprep.subr.mxu0 0.0
  %329 = vmatpush1.msra.mxu0 %v150
  %330 = vmatprep.subr.mxu0 0.0
  %331 = vmatpush1.msra.mxu0 %v151
  %332 = vmatprep.subr.mxu0 0.0
  %333 = vmatpush1.msra.mxu0 %v152
  %334 = vmatprep.subr.mxu0 0.0
  %335 = vmatpush1.msra.mxu0 %v153
  %336 = vmatprep.mubr.f32.mxu0 %v187
  %337 = vmatmul.mubr.f32.gmra.mrb[0].mxu0 %v185
  %v338 = vpop.f32.mrb[0].mxu0
  %v339 = vadd.f32 %v269, %v338
  %v340 = vpop.f32.mrb[0].mxu0
  %341 = vdwg.mxu0
  %342 = vmatprep.subr.mxu0 0.0
  %343 = vmatpush1.msra.mxu0 %v154
  %344 = vmatprep.subr.mxu0 0.0
  %345 = vmatpush1.msra.mxu0 %v155
  %346 = vmatprep.subr.mxu0 0.0
  %347 = vmatpush1.msra.mxu0 %v156
  %348 = vmatprep.subr.mxu0 0.0
  %349 = vmatpush1.msra.mxu0 %v157
  %350 = vmatprep.subr.mxu0 0.0
  %351 = vmatpush1.msra.mxu0 %v158
  %352 = vmatprep.subr.mxu0 0.0
  %353 = vmatpush1.msra.mxu0 %v159
  %354 = vmatprep.subr.mxu0 0.0
  %355 = vmatpush1.msra.mxu0 %v160
  %356 = vmatprep.subr.mxu0 0.0
  %357 = vmatpush1.msra.mxu0 %v161
  %358 = vmatprep.subr.mxu0 0.0
  %359 = vmatpush1.msra.mxu0 0.0
  %360 = vmatprep.subr.mxu0 0.0
  %361 = vmatpush1.msra.mxu0 0.0
  %362 = vmatprep.subr.mxu0 0.0
  %363 = vmatpush1.msra.mxu0 0.0
  %364 = vmatprep.subr.mxu0 0.0
  %365 = vmatpush1.msra.mxu0 0.0
  %366 = vmatprep.subr.mxu0 0.0
  %367 = vmatpush1.msra.mxu0 0.0
  %368 = vmatprep.subr.mxu0 0.0
  %369 = vmatpush1.msra.mxu0 0.0
  %370 = vmatprep.subr.mxu0 0.0
  %371 = vmatpush1.msra.mxu0 0.0
  %372 = vmatprep.subr.mxu0 0.0
  %373 = vmatpush1.msra.mxu0 0.0
  %374 = vmatprep.subr.mxu0 0.0
  %375 = vmatpush1.msra.mxu0 0.0
  %376 = vmatprep.subr.mxu0 0.0
  %377 = vmatpush1.msra.mxu0 0.0
  %378 = vmatprep.subr.mxu0 0.0
  %379 = vmatpush1.msra.mxu0 0.0
  %380 = vmatprep.subr.mxu0 0.0
  %381 = vmatpush1.msra.mxu0 0.0
  %382 = vmatprep.subr.mxu0 0.0
  %383 = vmatpush1.msra.mxu0 0.0
  %384 = vmatprep.subr.mxu0 0.0
  %385 = vmatpush1.msra.mxu0 0.0
  %386 = vmatprep.subr.mxu0 0.0
  %387 = vmatpush1.msra.mxu0 0.0
  %388 = vmatprep.subr.mxu0 0.0
  %389 = vmatpush1.msra.mxu0 0.0
  %390 = vmatprep.subr.mxu0 0.0
  %391 = vmatpush1.msra.mxu0 0.0
  %392 = vmatprep.subr.mxu0 0.0
  %393 = vmatpush1.msra.mxu0 0.0
  %394 = vmatprep.subr.mxu0 0.0
  %395 = vmatpush1.msra.mxu0 0.0
  %396 = vmatprep.subr.mxu0 0.0
  %397 = vmatpush1.msra.mxu0 0.0
  %398 = vmatprep.subr.mxu0 0.0
  %399 = vmatpush1.msra.mxu0 0.0
  %400 = vmatprep.subr.mxu0 0.0
  %401 = vmatpush1.msra.mxu0 0.0
  %402 = vmatprep.subr.mxu0 0.0
  %403 = vmatpush1.msra.mxu0 0.0
  %404 = vmatprep.subr.mxu0 0.0
  %405 = vmatpush1.msra.mxu0 0.0
  %406 = vmatprep.mubr.f32.mxu0 0.0
  %407 = vmatmul.mubr.f32.gmra.mrb[0].mxu0 %v200
  %v408 = vpop.f32.mrb[0].mxu0
  %v409 = vadd.f32 %v339, %v408
  %v410 = vpop.f32.mrb[0].mxu0
  %411 = vdwg.mxu0
  %v412 = vld [vmem:[%s1] sm:$0xff]
  %v413 = vld [vmem:[%s1 + $0x8] sm:$0xff]
  %v414 = vld [vmem:[%s5] sm:$0xf]
  %v415 = vld [vmem:[%s7] sm:$0x1]
  %v417 = vlaneseq
  %v418 = vshrl.u32 %v417, 7
  %v419 = vsub.s32 0, %v418
  %v420 = vrot.slane %v415, %v419
  %vm422 = vcmask 31744
  %v424 = vsel %vm422, %v412, 0
  %v427 = vsel %vm422, %v413, 0
  %vm429 = vcmask 1043456
  %v431 = vsel %vm429, %v414, 0
  %433 = vmatprep.subr.mxu0 0.0
  %434 = vmatpush1.msra.mxu0 %v431
  %435 = vmatprep.subr.mxu0 0.0
  %436 = vmatpush1.msra.mxu0 0.0
  %437 = vmatprep.subr.mxu0 0.0
  %438 = vmatpush1.msra.mxu0 0.0
  %439 = vmatprep.subr.mxu0 0.0
  %440 = vmatpush1.msra.mxu0 0.0
  %441 = vmatprep.subr.mxu0 0.0
  %442 = vmatpush1.msra.mxu0 0.0
  %443 = vmatprep.subr.mxu0 0.0
  %444 = vmatpush1.msra.mxu0 0.0
  %445 = vmatprep.subr.mxu0 0.0
  %446 = vmatpush1.msra.mxu0 0.0
  %447 = vmatprep.subr.mxu0 0.0
  %448 = vmatpush1.msra.mxu0 0.0
  %449 = vmatprep.subr.mxu0 0.0
  %450 = vmatpush1.msra.mxu0 0.0
  %451 = vmatprep.subr.mxu0 0.0
  %452 = vmatpush1.msra.mxu0 0.0
  %453 = vmatprep.subr.mxu0 0.0
  %454 = vmatpush1.msra.mxu0 0.0
  %455 = vmatprep.subr.mxu0 0.0
  %456 = vmatpush1.msra.mxu0 0.0
  %457 = vmatprep.subr.mxu0 0.0
  %458 = vmatpush1.msra.mxu0 0.0
  %459 = vmatprep.subr.mxu0 0.0
  %460 = vmatpush1.msra.mxu0 0.0
  %461 = vmatprep.subr.mxu0 0.0
  %462 = vmatpush1.msra.mxu0 0.0
  %463 = vmatprep.subr.mxu0 0.0
  %464 = vmatpush1.msra.mxu0 0.0
  %465 = vmatprep.subr.mxu0 0.0
  %466 = vmatpush1.msra.mxu0 0.0
  %467 = vmatprep.subr.mxu0 0.0
  %468 = vmatpush1.msra.mxu0 0.0
  %469 = vmatprep.subr.mxu0 0.0
  %470 = vmatpush1.msra.mxu0 0.0
  %471 = vmatprep.subr.mxu0 0.0
  %472 = vmatpush1.msra.mxu0 0.0
  %473 = vmatprep.subr.mxu0 0.0
  %474 = vmatpush1.msra.mxu0 0.0
  %475 = vmatprep.subr.mxu0 0.0
  %476 = vmatpush1.msra.mxu0 0.0
  %477 = vmatprep.subr.mxu0 0.0
  %478 = vmatpush1.msra.mxu0 0.0
  %479 = vmatprep.subr.mxu0 0.0
  %480 = vmatpush1.msra.mxu0 0.0
  %481 = vmatprep.subr.mxu0 0.0
  %482 = vmatpush1.msra.mxu0 0.0
  %483 = vmatprep.subr.mxu0 0.0
  %484 = vmatpush1.msra.mxu0 0.0
  %485 = vmatprep.subr.mxu0 0.0
  %486 = vmatpush1.msra.mxu0 0.0
  %487 = vmatprep.subr.mxu0 0.0
  %488 = vmatpush1.msra.mxu0 0.0
  %489 = vmatprep.subr.mxu0 0.0
  %490 = vmatpush1.msra.mxu0 0.0
  %491 = vmatprep.subr.mxu0 0.0
  %492 = vmatpush1.msra.mxu0 0.0
  %493 = vmatprep.subr.mxu0 0.0
  %494 = vmatpush1.msra.mxu0 0.0
  %495 = vmatprep.subr.mxu0 0.0
  %496 = vmatpush1.msra.mxu0 0.0
  %497 = vmatprep.mubr.f32.mxu0 0.0
  %498 = vmatmul.mubr.f32.gmra.mrb[0].mxu0 %v424
  %v499 = vpop.f32.mrb[0].mxu0
  %v500 = vadd.f32 %v420, %v499
  %v501 = vpop.f32.mrb[0].mxu0
  %502 = vmatprep.mubr.f32.mxu0 0.0
  %503 = vmatmul.mubr.f32.gmra.mrb[0].mxu0 %v427
  %v504 = vpop.f32.mrb[0].mxu0
  %v505 = vadd.f32 %v420, %v504
  %v506 = vpop.f32.mrb[0].mxu0
  %507 = vdwg.mxu0
  %v508 = vld [vmem:[%s6] sm:$0xff]
  %v509 = vld [vmem:[%s6 + $0x8] sm:$0xff]
  %v510 = vld [vmem:[%s6 + $0x10] sm:$0xff]
  %v511 = vld [vmem:[%s6 + $0x18] sm:$0xff]
  %vm512 = vcmask 261120
  %v514 = vsel %vm512, 0.0, 0
  %516 = vmatprep.subr.mxu0 0.0
  %517 = vmatpush1.msra.mxu0 %v508
  %518 = vmatprep.subr.mxu0 0.0
  %519 = vmatpush1.msra.mxu0 %v509
  %520 = vmatprep.subr.mxu0 0.0
  %521 = vmatpush1.msra.mxu0 %v510
  %522 = vmatprep.subr.mxu0 0.0
  %523 = vmatpush1.msra.mxu0 %v511
  %524 = vmatprep.subr.mxu0 0.0
  %525 = vmatpush1.msra.mxu0 0.0
  %526 = vmatprep.subr.mxu0 0.0
  %527 = vmatpush1.msra.mxu0 0.0
  %528 = vmatprep.subr.mxu0 0.0
  %529 = vmatpush1.msra.mxu0 0.0
  %530 = vmatprep.subr.mxu0 0.0
  %531 = vmatpush1.msra.mxu0 0.0
  %532 = vmatprep.subr.mxu0 0.0
  %533 = vmatpush1.msra.mxu0 0.0
  %534 = vmatprep.subr.mxu0 0.0
  %535 = vmatpush1.msra.mxu0 0.0
  %536 = vmatprep.subr.mxu0 0.0
  %537 = vmatpush1.msra.mxu0 0.0
  %538 = vmatprep.subr.mxu0 0.0
  %539 = vmatpush1.msra.mxu0 0.0
  %540 = vmatprep.subr.mxu0 0.0
  %541 = vmatpush1.msra.mxu0 0.0
  %542 = vmatprep.subr.mxu0 0.0
  %543 = vmatpush1.msra.mxu0 0.0
  %544 = vmatprep.subr.mxu0 0.0
  %545 = vmatpush1.msra.mxu0 0.0
  %546 = vmatprep.subr.mxu0 0.0
  %547 = vmatpush1.msra.mxu0 0.0
  %548 = vmatprep.subr.mxu0 0.0
  %549 = vmatpush1.msra.mxu0 0.0
  %550 = vmatprep.subr.mxu0 0.0
  %551 = vmatpush1.msra.mxu0 0.0
  %552 = vmatprep.subr.mxu0 0.0
  %553 = vmatpush1.msra.mxu0 0.0
  %554 = vmatprep.subr.mxu0 0.0
  %555 = vmatpush1.msra.mxu0 0.0
  %556 = vmatprep.subr.mxu0 0.0
  %557 = vmatpush1.msra.mxu0 0.0
  %558 = vmatprep.subr.mxu0 0.0
  %559 = vmatpush1.msra.mxu0 0.0
  %560 = vmatprep.subr.mxu0 0.0
  %561 = vmatpush1.msra.mxu0 0.0
  %562 = vmatprep.subr.mxu0 0.0
  %563 = vmatpush1.msra.mxu0 0.0
  %564 = vmatprep.subr.mxu0 0.0
  %565 = vmatpush1.msra.mxu0 0.0
  %566 = vmatprep.subr.mxu0 0.0
  %567 = vmatpush1.msra.mxu0 0.0
  %568 = vmatprep.subr.mxu0 0.0
  %569 = vmatpush1.msra.mxu0 0.0
  %570 = vmatprep.subr.mxu0 0.0
  %571 = vmatpush1.msra.mxu0 0.0
  %572 = vmatprep.subr.mxu0 0.0
  %573 = vmatpush1.msra.mxu0 0.0
  %574 = vmatprep.subr.mxu0 0.0
  %575 = vmatpush1.msra.mxu0 0.0
  %576 = vmatprep.subr.mxu0 0.0
  %577 = vmatpush1.msra.mxu0 0.0
  %578 = vmatprep.subr.mxu0 0.0
  %579 = vmatpush1.msra.mxu0 0.0
  %580 = vmatprep.mubr.f32.mxu0 0.0
  %581 = vmatmul.mubr.f32.gmra.mrb[0].mxu0 %v514
  %v582 = vpop.f32.mrb[0].mxu0
  %v583 = vadd.f32 0.0, %v582
  %v584 = vpop.f32.mrb[0].mxu0
  %585 = vdwg.mxu0
  %v586 = vadd.f32 %v500, %v583
  %v587 = vxor.u32 %v586, 2147483648
  %v588 = vmul.f32 %v587, 1.442695
  %v589 = vpow.pop %v588
  %v590 = vadd.f32 %v589, 1.0
  %v591 = vrcp.pop %v590
  %v592 = vmul.f32 1.0, %v591
  %v593 = vtanh.pop %v586
  %v594 = vmul.f32 %v592, 0.0
  %596 = vrot.lane.b32.xlu0 %v593, 64
  %v597 = vpop.permute.xlu0 %596
  %v599 = vmul.f32 %v592, %v597
  %601 = vrot.lane.b32.xlu0 %v599, 32
  %v602 = vpop.permute.xlu0 %601
  %v604 = vadd.f32 %v594, %v602
  %v605 = vtanh.pop %v604
  %607 = vrot.lane.b32.xlu0 %v605, 64
  %v608 = vpop.permute.xlu0 %607
  %v610 = vmul.f32 %v592, %v608
  %612 = vrot.lane.b32.xlu0 %v610, 32
  %v613 = vpop.permute.xlu0 %612
  %v614 = vsel %vm512, %v613, 0
  %616 = vmatprep.subr.mxu0 0.0
  %617 = vmatpush1.msra.mxu0 %v508
  %618 = vmatprep.subr.mxu0 0.0
  %619 = vmatpush1.msra.mxu0 %v509
  %620 = vmatprep.subr.mxu0 0.0
  %621 = vmatpush1.msra.mxu0 %v510
  %622 = vmatprep.subr.mxu0 0.0
  %623 = vmatpush1.msra.mxu0 %v511
  %624 = vmatprep.subr.mxu0 0.0
  %625 = vmatpush1.msra.mxu0 0.0
  %626 = vmatprep.subr.mxu0 0.0
  %627 = vmatpush1.msra.mxu0 0.0
  %628 = vmatprep.subr.mxu0 0.0
  %629 = vmatpush1.msra.mxu0 0.0
  %630 = vmatprep.subr.mxu0 0.0
  %631 = vmatpush1.msra.mxu0 0.0
  %632 = vmatprep.subr.mxu0 0.0
  %633 = vmatpush1.msra.mxu0 0.0
  %634 = vmatprep.subr.mxu0 0.0
  %635 = vmatpush1.msra.mxu0 0.0
  %636 = vmatprep.subr.mxu0 0.0
  %637 = vmatpush1.msra.mxu0 0.0
  %638 = vmatprep.subr.mxu0 0.0
  %639 = vmatpush1.msra.mxu0 0.0
  %640 = vmatprep.subr.mxu0 0.0
  %641 = vmatpush1.msra.mxu0 0.0
  %642 = vmatprep.subr.mxu0 0.0
  %643 = vmatpush1.msra.mxu0 0.0
  %644 = vmatprep.subr.mxu0 0.0
  %645 = vmatpush1.msra.mxu0 0.0
  %646 = vmatprep.subr.mxu0 0.0
  %647 = vmatpush1.msra.mxu0 0.0
  %648 = vmatprep.subr.mxu0 0.0
  %649 = vmatpush1.msra.mxu0 0.0
  %650 = vmatprep.subr.mxu0 0.0
  %651 = vmatpush1.msra.mxu0 0.0
  %652 = vmatprep.subr.mxu0 0.0
  %653 = vmatpush1.msra.mxu0 0.0
  %654 = vmatprep.subr.mxu0 0.0
  %655 = vmatpush1.msra.mxu0 0.0
  %656 = vmatprep.subr.mxu0 0.0
  %657 = vmatpush1.msra.mxu0 0.0
  %658 = vmatprep.subr.mxu0 0.0
  %659 = vmatpush1.msra.mxu0 0.0
  %660 = vmatprep.subr.mxu0 0.0
  %661 = vmatpush1.msra.mxu0 0.0
  %662 = vmatprep.subr.mxu0 0.0
  %663 = vmatpush1.msra.mxu0 0.0
  %664 = vmatprep.subr.mxu0 0.0
  %665 = vmatpush1.msra.mxu0 0.0
  %666 = vmatprep.subr.mxu0 0.0
  %667 = vmatpush1.msra.mxu0 0.0
  %668 = vmatprep.subr.mxu0 0.0
  %669 = vmatpush1.msra.mxu0 0.0
  %670 = vmatprep.subr.mxu0 0.0
  %671 = vmatpush1.msra.mxu0 0.0
  %672 = vmatprep.subr.mxu0 0.0
  %673 = vmatpush1.msra.mxu0 0.0
  %674 = vmatprep.subr.mxu0 0.0
  %675 = vmatpush1.msra.mxu0 0.0
  %676 = vmatprep.subr.mxu0 0.0
  %677 = vmatpush1.msra.mxu0 0.0
  %678 = vmatprep.subr.mxu0 0.0
  %679 = vmatpush1.msra.mxu0 0.0
  %680 = vmatprep.mubr.f32.mxu0 0.0
  %681 = vmatmul.mubr.f32.gmra.mrb[0].mxu0 %v614
  %v682 = vpop.f32.mrb[0].mxu0
  %v683 = vadd.f32 0.0, %v682
  %v684 = vpop.f32.mrb[0].mxu0
  %685 = vdwg.mxu0
  %v687 = vrot.slane %v683, 6
  %v689 = vadd.f32 %v500, %v687
  %v690 = vxor.u32 %v689, 2147483648
  %v691 = vmul.f32 %v690, 1.442695
  %v692 = vpow.pop %v691
  %v693 = vadd.f32 %v692, 1.0
  %v694 = vrcp.pop %v693
  %v695 = vmul.f32 1.0, %v694
  %v696 = vtanh.pop %v689
  %v698 = vrot.slane %v604, 6
  %v700 = vmul.f32 %v695, %v698
  %702 = vrot.lane.b32.xlu0 %v696, 64
  %v703 = vpop.permute.xlu0 %702
  %v705 = vmul.f32 %v695, %v703
  %707 = vrot.lane.b32.xlu0 %v705, 32
  %v708 = vpop.permute.xlu0 %707
  %v710 = vadd.f32 %v700, %v708
  %v711 = vtanh.pop %v710
  %713 = vrot.lane.b32.xlu0 %v711, 64
  %v714 = vpop.permute.xlu0 %713
  %v716 = vmul.f32 %v695, %v714
  %v718 = vrot.slane %v716, 2
  %719 = vrot.lane.b32.xlu0 %v718, 32
  %v720 = vpop.permute.xlu0 %719
  %v721 = vsel %vm512, %v720, 0
  %723 = vmatprep.subr.mxu0 0.0
  %724 = vmatpush1.msra.mxu0 %v508
  %725 = vmatprep.subr.mxu0 0.0
  %726 = vmatpush1.msra.mxu0 %v509
  %727 = vmatprep.subr.mxu0 0.0
  %728 = vmatpush1.msra.mxu0 %v510
  %729 = vmatprep.subr.mxu0 0.0
  %730 = vmatpush1.msra.mxu0 %v511
  %731 = vmatprep.subr.mxu0 0.0
  %732 = vmatpush1.msra.mxu0 0.0
  %733 = vmatprep.subr.mxu0 0.0
  %734 = vmatpush1.msra.mxu0 0.0
  %735 = vmatprep.subr.mxu0 0.0
  %736 = vmatpush1.msra.mxu0 0.0
  %737 = vmatprep.subr.mxu0 0.0
  %738 = vmatpush1.msra.mxu0 0.0
  %739 = vmatprep.subr.mxu0 0.0
  %740 = vmatpush1.msra.mxu0 0.0
  %741 = vmatprep.subr.mxu0 0.0
  %742 = vmatpush1.msra.mxu0 0.0
  %743 = vmatprep.subr.mxu0 0.0
  %744 = vmatpush1.msra.mxu0 0.0
  %745 = vmatprep.subr.mxu0 0.0
  %746 = vmatpush1.msra.mxu0 0.0
  %747 = vmatprep.subr.mxu0 0.0
  %748 = vmatpush1.msra.mxu0 0.0
  %749 = vmatprep.subr.mxu0 0.0
  %750 = vmatpush1.msra.mxu0 0.0
  %751 = vmatprep.subr.mxu0 0.0
  %752 = vmatpush1.msra.mxu0 0.0
  %753 = vmatprep.subr.mxu0 0.0
  %754 = vmatpush1.msra.mxu0 0.0
  %755 = vmatprep.subr.mxu0 0.0
  %756 = vmatpush1.msra.mxu0 0.0
  %757 = vmatprep.subr.mxu0 0.0
  %758 = vmatpush1.msra.mxu0 0.0
  %759 = vmatprep.subr.mxu0 0.0
  %760 = vmatpush1.msra.mxu0 0.0
  %761 = vmatprep.subr.mxu0 0.0
  %762 = vmatpush1.msra.mxu0 0.0
  %763 = vmatprep.subr.mxu0 0.0
  %764 = vmatpush1.msra.mxu0 0.0
  %765 = vmatprep.subr.mxu0 0.0
  %766 = vmatpush1.msra.mxu0 0.0
  %767 = vmatprep.subr.mxu0 0.0
  %768 = vmatpush1.msra.mxu0 0.0
  %769 = vmatprep.subr.mxu0 0.0
  %770 = vmatpush1.msra.mxu0 0.0
  %771 = vmatprep.subr.mxu0 0.0
  %772 = vmatpush1.msra.mxu0 0.0
  %773 = vmatprep.subr.mxu0 0.0
  %774 = vmatpush1.msra.mxu0 0.0
  %775 = vmatprep.subr.mxu0 0.0
  %776 = vmatpush1.msra.mxu0 0.0
  %777 = vmatprep.subr.mxu0 0.0
  %778 = vmatpush1.msra.mxu0 0.0
  %779 = vmatprep.subr.mxu0 0.0
  %780 = vmatpush1.msra.mxu0 0.0
  %781 = vmatprep.subr.mxu0 0.0
  %782 = vmatpush1.msra.mxu0 0.0
  %783 = vmatprep.subr.mxu0 0.0
  %784 = vmatpush1.msra.mxu0 0.0
  %785 = vmatprep.subr.mxu0 0.0
  %786 = vmatpush1.msra.mxu0 0.0
  %787 = vmatprep.mubr.f32.mxu0 0.0
  %788 = vmatmul.mubr.f32.gmra.mrb[0].mxu0 %v721
  %v789 = vpop.f32.mrb[0].mxu0
  %v790 = vadd.f32 0.0, %v789
  %v791 = vpop.f32.mrb[0].mxu0
  %792 = vdwg.mxu0
  %v794 = vrot.slane %v790, 4
  %v796 = vadd.f32 %v500, %v794
  %v797 = vxor.u32 %v796, 2147483648
  %v798 = vmul.f32 %v797, 1.442695
  %v799 = vpow.pop %v798
  %v800 = vadd.f32 %v799, 1.0
  %v801 = vrcp.pop %v800
  %v802 = vmul.f32 1.0, %v801
  %v803 = vtanh.pop %v796
  %v805 = vrot.slane %v710, 6
  %v807 = vmul.f32 %v802, %v805
  %809 = vrot.lane.b32.xlu0 %v803, 64
  %v810 = vpop.permute.xlu0 %809
  %v812 = vmul.f32 %v802, %v810
  %814 = vrot.lane.b32.xlu0 %v812, 32
  %v815 = vpop.permute.xlu0 %814
  %v817 = vadd.f32 %v807, %v815
  %v818 = vtanh.pop %v817
  %820 = vrot.lane.b32.xlu0 %v818, 64
  %v821 = vpop.permute.xlu0 %820
  %v823 = vmul.f32 %v802, %v821
  %v825 = vrot.slane %v823, 4
  %826 = vrot.lane.b32.xlu0 %v825, 32
  %v827 = vpop.permute.xlu0 %826
  %v828 = vsel %vm512, %v827, 0
  %830 = vmatprep.subr.mxu0 0.0
  %831 = vmatpush1.msra.mxu0 %v508
  %832 = vmatprep.subr.mxu0 0.0
  %833 = vmatpush1.msra.mxu0 %v509
  %834 = vmatprep.subr.mxu0 0.0
  %835 = vmatpush1.msra.mxu0 %v510
  %836 = vmatprep.subr.mxu0 0.0
  %837 = vmatpush1.msra.mxu0 %v511
  %838 = vmatprep.subr.mxu0 0.0
  %839 = vmatpush1.msra.mxu0 0.0
  %840 = vmatprep.subr.mxu0 0.0
  %841 = vmatpush1.msra.mxu0 0.0
  %842 = vmatprep.subr.mxu0 0.0
  %843 = vmatpush1.msra.mxu0 0.0
  %844 = vmatprep.subr.mxu0 0.0
  %845 = vmatpush1.msra.mxu0 0.0
  %846 = vmatprep.subr.mxu0 0.0
  %847 = vmatpush1.msra.mxu0 0.0
  %848 = vmatprep.subr.mxu0 0.0
  %849 = vmatpush1.msra.mxu0 0.0
  %850 = vmatprep.subr.mxu0 0.0
  %851 = vmatpush1.msra.mxu0 0.0
  %852 = vmatprep.subr.mxu0 0.0
  %853 = vmatpush1.msra.mxu0 0.0
  %854 = vmatprep.subr.mxu0 0.0
  %855 = vmatpush1.msra.mxu0 0.0
  %856 = vmatprep.subr.mxu0 0.0
  %857 = vmatpush1.msra.mxu0 0.0
  %858 = vmatprep.subr.mxu0 0.0
  %859 = vmatpush1.msra.mxu0 0.0
  %860 = vmatprep.subr.mxu0 0.0
  %861 = vmatpush1.msra.mxu0 0.0
  %862 = vmatprep.subr.mxu0 0.0
  %863 = vmatpush1.msra.mxu0 0.0
  %864 = vmatprep.subr.mxu0 0.0
  %865 = vmatpush1.msra.mxu0 0.0
  %866 = vmatprep.subr.mxu0 0.0
  %867 = vmatpush1.msra.mxu0 0.0
  %868 = vmatprep.subr.mxu0 0.0
  %869 = vmatpush1.msra.mxu0 0.0
  %870 = vmatprep.subr.mxu0 0.0
  %871 = vmatpush1.msra.mxu0 0.0
  %872 = vmatprep.subr.mxu0 0.0
  %873 = vmatpush1.msra.mxu0 0.0
  %874 = vmatprep.subr.mxu0 0.0
  %875 = vmatpush1.msra.mxu0 0.0
  %876 = vmatprep.subr.mxu0 0.0
  %877 = vmatpush1.msra.mxu0 0.0
  %878 = vmatprep.subr.mxu0 0.0
  %879 = vmatpush1.msra.mxu0 0.0
  %880 = vmatprep.subr.mxu0 0.0
  %881 = vmatpush1.msra.mxu0 0.0
  %882 = vmatprep.subr.mxu0 0.0
  %883 = vmatpush1.msra.mxu0 0.0
  %884 = vmatprep.subr.mxu0 0.0
  %885 = vmatpush1.msra.mxu0 0.0
  %886 = vmatprep.subr.mxu0 0.0
  %887 = vmatpush1.msra.mxu0 0.0
  %888 = vmatprep.subr.mxu0 0.0
  %889 = vmatpush1.msra.mxu0 0.0
  %890 = vmatprep.subr.mxu0 0.0
  %891 = vmatpush1.msra.mxu0 0.0
  %892 = vmatprep.subr.mxu0 0.0
  %893 = vmatpush1.msra.mxu0 0.0
  %894 = vmatprep.mubr.f32.mxu0 0.0
  %895 = vmatmul.mubr.f32.gmra.mrb[0].mxu0 %v828
  %v896 = vpop.f32.mrb[0].mxu0
  %v897 = vadd.f32 0.0, %v896
  %v898 = vpop.f32.mrb[0].mxu0
  %899 = vdwg.mxu0
  %v901 = vrot.slane %v897, 2
  %v903 = vadd.f32 %v500, %v901
  %v904 = vxor.u32 %v903, 2147483648
  %v905 = vmul.f32 %v904, 1.442695
  %v906 = vpow.pop %v905
  %v907 = vadd.f32 %v906, 1.0
  %v908 = vrcp.pop %v907
  %v909 = vmul.f32 1.0, %v908
  %v910 = vtanh.pop %v903
  %v912 = vrot.slane %v817, 6
  %v914 = vmul.f32 %v909, %v912
  %916 = vrot.lane.b32.xlu0 %v910, 64
  %v917 = vpop.permute.xlu0 %916
  %v919 = vmul.f32 %v909, %v917
  %921 = vrot.lane.b32.xlu0 %v919, 32
  %v922 = vpop.permute.xlu0 %921
  %v924 = vadd.f32 %v914, %v922
  %v925 = vtanh.pop %v924
  %927 = vrot.lane.b32.xlu0 %v925, 64
  %v928 = vpop.permute.xlu0 %927
  %v930 = vmul.f32 %v909, %v928
  %v932 = vrot.slane %v930, 6
  %933 = vrot.lane.b32.xlu0 %v932, 32
  %v934 = vpop.permute.xlu0 %933
  %v935 = vsel %vm512, %v934, 0
  %937 = vmatprep.subr.mxu0 0.0
  %938 = vmatpush1.msra.mxu0 %v508
  %939 = vmatprep.subr.mxu0 0.0
  %940 = vmatpush1.msra.mxu0 %v509
  %941 = vmatprep.subr.mxu0 0.0
  %942 = vmatpush1.msra.mxu0 %v510
  %943 = vmatprep.subr.mxu0 0.0
  %944 = vmatpush1.msra.mxu0 %v511
  %945 = vmatprep.subr.mxu0 0.0
  %946 = vmatpush1.msra.mxu0 0.0
  %947 = vmatprep.subr.mxu0 0.0
  %948 = vmatpush1.msra.mxu0 0.0
  %949 = vmatprep.subr.mxu0 0.0
  %950 = vmatpush1.msra.mxu0 0.0
  %951 = vmatprep.subr.mxu0 0.0
  %952 = vmatpush1.msra.mxu0 0.0
  %953 = vmatprep.subr.mxu0 0.0
  %954 = vmatpush1.msra.mxu0 0.0
  %955 = vmatprep.subr.mxu0 0.0
  %956 = vmatpush1.msra.mxu0 0.0
  %957 = vmatprep.subr.mxu0 0.0
  %958 = vmatpush1.msra.mxu0 0.0
  %959 = vmatprep.subr.mxu0 0.0
  %960 = vmatpush1.msra.mxu0 0.0
  %961 = vmatprep.subr.mxu0 0.0
  %962 = vmatpush1.msra.mxu0 0.0
  %963 = vmatprep.subr.mxu0 0.0
  %964 = vmatpush1.msra.mxu0 0.0
  %965 = vmatprep.subr.mxu0 0.0
  %966 = vmatpush1.msra.mxu0 0.0
  %967 = vmatprep.subr.mxu0 0.0
  %968 = vmatpush1.msra.mxu0 0.0
  %969 = vmatprep.subr.mxu0 0.0
  %970 = vmatpush1.msra.mxu0 0.0
  %971 = vmatprep.subr.mxu0 0.0
  %972 = vmatpush1.msra.mxu0 0.0
  %973 = vmatprep.subr.mxu0 0.0
  %974 = vmatpush1.msra.mxu0 0.0
  %975 = vmatprep.subr.mxu0 0.0
  %976 = vmatpush1.msra.mxu0 0.0
  %977 = vmatprep.subr.mxu0 0.0
  %978 = vmatpush1.msra.mxu0 0.0
  %979 = vmatprep.subr.mxu0 0.0
  %980 = vmatpush1.msra.mxu0 0.0
  %981 = vmatprep.subr.mxu0 0.0
  %982 = vmatpush1.msra.mxu0 0.0
  %983 = vmatprep.subr.mxu0 0.0
  %984 = vmatpush1.msra.mxu0 0.0
  %985 = vmatprep.subr.mxu0 0.0
  %986 = vmatpush1.msra.mxu0 0.0
  %987 = vmatprep.subr.mxu0 0.0
  %988 = vmatpush1.msra.mxu0 0.0
  %989 = vmatprep.subr.mxu0 0.0
  %990 = vmatpush1.msra.mxu0 0.0
  %991 = vmatprep.subr.mxu0 0.0
  %992 = vmatpush1.msra.mxu0 0.0
  %993 = vmatprep.subr.mxu0 0.0
  %994 = vmatpush1.msra.mxu0 0.0
  %995 = vmatprep.subr.mxu0 0.0
  %996 = vmatpush1.msra.mxu0 0.0
  %997 = vmatprep.subr.mxu0 0.0
  %998 = vmatpush1.msra.mxu0 0.0
  %999 = vmatprep.subr.mxu0 0.0
  %1000 = vmatpush1.msra.mxu0 0.0
  %1001 = vmatprep.mubr.f32.mxu0 0.0
  %1002 = vmatmul.mubr.f32.gmra.mrb[0].mxu0 %v935
  %v1003 = vpop.f32.mrb[0].mxu0
  %v1004 = vadd.f32 0.0, %v1003
  %v1005 = vpop.f32.mrb[0].mxu0
  %1006 = vdwg.mxu0
  %v1007 = vadd.f32 %v505, %v1004
  %v1008 = vxor.u32 %v1007, 2147483648
  %v1009 = vmul.f32 %v1008, 1.442695
  %v1010 = vpow.pop %v1009
  %v1011 = vadd.f32 %v1010, 1.0
  %v1012 = vrcp.pop %v1011
  %v1013 = vmul.f32 1.0, %v1012
  %v1014 = vtanh.pop %v1007
  %v1016 = vrot.slane %v924, 6
  %v1018 = vmul.f32 %v1013, %v1016
  %1020 = vrot.lane.b32.xlu0 %v1014, 64
  %v1021 = vpop.permute.xlu0 %1020
  %v1023 = vmul.f32 %v1013, %v1021
  %1025 = vrot.lane.b32.xlu0 %v1023, 32
  %v1026 = vpop.permute.xlu0 %1025
  %v1028 = vadd.f32 %v1018, %v1026
  %v1029 = vtanh.pop %v1028
  %1031 = vrot.lane.b32.xlu0 %v1029, 64
  %v1032 = vpop.permute.xlu0 %1031
  %v1034 = vmul.f32 %v1013, %v1032
  %1036 = vrot.lane.b32.xlu0 %v1034, 32
  %v1037 = vpop.permute.xlu0 %1036
  %v1038 = vsel %vm512, %v1037, 0
  %1040 = vmatprep.subr.mxu0 0.0
  %1041 = vmatpush1.msra.mxu0 %v508
  %1042 = vmatprep.subr.mxu0 0.0
  %1043 = vmatpush1.msra.mxu0 %v509
  %1044 = vmatprep.subr.mxu0 0.0
  %1045 = vmatpush1.msra.mxu0 %v510
  %1046 = vmatprep.subr.mxu0 0.0
  %1047 = vmatpush1.msra.mxu0 %v511
  %1048 = vmatprep.subr.mxu0 0.0
  %1049 = vmatpush1.msra.mxu0 0.0
  %1050 = vmatprep.subr.mxu0 0.0
  %1051 = vmatpush1.msra.mxu0 0.0
  %1052 = vmatprep.subr.mxu0 0.0
  %1053 = vmatpush1.msra.mxu0 0.0
  %1054 = vmatprep.subr.mxu0 0.0
  %1055 = vmatpush1.msra.mxu0 0.0
  %1056 = vmatprep.subr.mxu0 0.0
  %1057 = vmatpush1.msra.mxu0 0.0
  %1058 = vmatprep.subr.mxu0 0.0
  %1059 = vmatpush1.msra.mxu0 0.0
  %1060 = vmatprep.subr.mxu0 0.0
  %1061 = vmatpush1.msra.mxu0 0.0
  %1062 = vmatprep.subr.mxu0 0.0
  %1063 = vmatpush1.msra.mxu0 0.0
  %1064 = vmatprep.subr.mxu0 0.0
  %1065 = vmatpush1.msra.mxu0 0.0
  %1066 = vmatprep.subr.mxu0 0.0
  %1067 = vmatpush1.msra.mxu0 0.0
  %1068 = vmatprep.subr.mxu0 0.0
  %1069 = vmatpush1.msra.mxu0 0.0
  %1070 = vmatprep.subr.mxu0 0.0
  %1071 = vmatpush1.msra.mxu0 0.0
  %1072 = vmatprep.subr.mxu0 0.0
  %1073 = vmatpush1.msra.mxu0 0.0
  %1074 = vmatprep.subr.mxu0 0.0
  %1075 = vmatpush1.msra.mxu0 0.0
  %1076 = vmatprep.subr.mxu0 0.0
  %1077 = vmatpush1.msra.mxu0 0.0
  %1078 = vmatprep.subr.mxu0 0.0
  %1079 = vmatpush1.msra.mxu0 0.0
  %1080 = vmatprep.subr.mxu0 0.0
  %1081 = vmatpush1.msra.mxu0 0.0
  %1082 = vmatprep.subr.mxu0 0.0
  %1083 = vmatpush1.msra.mxu0 0.0
  %1084 = vmatprep.subr.mxu0 0.0
  %1085 = vmatpush1.msra.mxu0 0.0
  %1086 = vmatprep.subr.mxu0 0.0
  %1087 = vmatpush1.msra.mxu0 0.0
  %1088 = vmatprep.subr.mxu0 0.0
  %1089 = vmatpush1.msra.mxu0 0.0
  %1090 = vmatprep.subr.mxu0 0.0
  %1091 = vmatpush1.msra.mxu0 0.0
  %1092 = vmatprep.subr.mxu0 0.0
  %1093 = vmatpush1.msra.mxu0 0.0
  %1094 = vmatprep.subr.mxu0 0.0
  %1095 = vmatpush1.msra.mxu0 0.0
  %1096 = vmatprep.subr.mxu0 0.0
  %1097 = vmatpush1.msra.mxu0 0.0
  %1098 = vmatprep.subr.mxu0 0.0
  %1099 = vmatpush1.msra.mxu0 0.0
  %1100 = vmatprep.subr.mxu0 0.0
  %1101 = vmatpush1.msra.mxu0 0.0
  %1102 = vmatprep.subr.mxu0 0.0
  %1103 = vmatpush1.msra.mxu0 0.0
  %1104 = vmatprep.mubr.f32.mxu0 0.0
  %1105 = vmatmul.mubr.f32.gmra.mrb[0].mxu0 %v1038
  %v1106 = vpop.f32.mrb[0].mxu0
  %v1107 = vadd.f32 0.0, %v1106
  %v1108 = vpop.f32.mrb[0].mxu0
  %1109 = vdwg.mxu0
  %v1111 = vrot.slane %v1107, 6
  %v1113 = vadd.f32 %v505, %v1111
  %v1114 = vxor.u32 %v1113, 2147483648
  %v1115 = vmul.f32 %v1114, 1.442695
  %v1116 = vpow.pop %v1115
  %v1117 = vadd.f32 %v1116, 1.0
  %v1118 = vrcp.pop %v1117
  %v1119 = vmul.f32 1.0, %v1118
  %v1120 = vtanh.pop %v1113
  %v1122 = vrot.slane %v1028, 6
  %v1124 = vmul.f32 %v1119, %v1122
  %1126 = vrot.lane.b32.xlu0 %v1120, 64
  %v1127 = vpop.permute.xlu0 %1126
  %v1129 = vmul.f32 %v1119, %v1127
  %1131 = vrot.lane.b32.xlu0 %v1129, 32
  %v1132 = vpop.permute.xlu0 %1131
  %v1134 = vadd.f32 %v1124, %v1132
  %v1135 = vtanh.pop %v1134
  %1137 = vrot.lane.b32.xlu0 %v1135, 64
  %v1138 = vpop.permute.xlu0 %1137
  %v1140 = vmul.f32 %v1119, %v1138
  %v1142 = vrot.slane %v1140, 2
  %1143 = vrot.lane.b32.xlu0 %v1142, 32
  %v1144 = vpop.permute.xlu0 %1143
  %v1145 = vsel %vm512, %v1144, 0
  %1147 = vmatprep.subr.mxu0 0.0
  %1148 = vmatpush1.msra.mxu0 %v508
  %1149 = vmatprep.subr.mxu0 0.0
  %1150 = vmatpush1.msra.mxu0 %v509
  %1151 = vmatprep.subr.mxu0 0.0
  %1152 = vmatpush1.msra.mxu0 %v510
  %1153 = vmatprep.subr.mxu0 0.0
  %1154 = vmatpush1.msra.mxu0 %v511
  %1155 = vmatprep.subr.mxu0 0.0
  %1156 = vmatpush1.msra.mxu0 0.0
  %1157 = vmatprep.subr.mxu0 0.0
  %1158 = vmatpush1.msra.mxu0 0.0
  %1159 = vmatprep.subr.mxu0 0.0
  %1160 = vmatpush1.msra.mxu0 0.0
  %1161 = vmatprep.subr.mxu0 0.0
  %1162 = vmatpush1.msra.mxu0 0.0
  %1163 = vmatprep.subr.mxu0 0.0
  %1164 = vmatpush1.msra.mxu0 0.0
  %1165 = vmatprep.subr.mxu0 0.0
  %1166 = vmatpush1.msra.mxu0 0.0
  %1167 = vmatprep.subr.mxu0 0.0
  %1168 = vmatpush1.msra.mxu0 0.0
  %1169 = vmatprep.subr.mxu0 0.0
  %1170 = vmatpush1.msra.mxu0 0.0
  %1171 = vmatprep.subr.mxu0 0.0
  %1172 = vmatpush1.msra.mxu0 0.0
  %1173 = vmatprep.subr.mxu0 0.0
  %1174 = vmatpush1.msra.mxu0 0.0
  %1175 = vmatprep.subr.mxu0 0.0
  %1176 = vmatpush1.msra.mxu0 0.0
  %1177 = vmatprep.subr.mxu0 0.0
  %1178 = vmatpush1.msra.mxu0 0.0
  %1179 = vmatprep.subr.mxu0 0.0
  %1180 = vmatpush1.msra.mxu0 0.0
  %1181 = vmatprep.subr.mxu0 0.0
  %1182 = vmatpush1.msra.mxu0 0.0
  %1183 = vmatprep.subr.mxu0 0.0
  %1184 = vmatpush1.msra.mxu0 0.0
  %1185 = vmatprep.subr.mxu0 0.0
  %1186 = vmatpush1.msra.mxu0 0.0
  %1187 = vmatprep.subr.mxu0 0.0
  %1188 = vmatpush1.msra.mxu0 0.0
  %1189 = vmatprep.subr.mxu0 0.0
  %1190 = vmatpush1.msra.mxu0 0.0
  %1191 = vmatprep.subr.mxu0 0.0
  %1192 = vmatpush1.msra.mxu0 0.0
  %1193 = vmatprep.subr.mxu0 0.0
  %1194 = vmatpush1.msra.mxu0 0.0
  %1195 = vmatprep.subr.mxu0 0.0
  %1196 = vmatpush1.msra.mxu0 0.0
  %1197 = vmatprep.subr.mxu0 0.0
  %1198 = vmatpush1.msra.mxu0 0.0
  %1199 = vmatprep.subr.mxu0 0.0
  %1200 = vmatpush1.msra.mxu0 0.0
  %1201 = vmatprep.subr.mxu0 0.0
  %1202 = vmatpush1.msra.mxu0 0.0
  %1203 = vmatprep.subr.mxu0 0.0
  %1204 = vmatpush1.msra.mxu0 0.0
  %1205 = vmatprep.subr.mxu0 0.0
  %1206 = vmatpush1.msra.mxu0 0.0
  %1207 = vmatprep.subr.mxu0 0.0
  %1208 = vmatpush1.msra.mxu0 0.0
  %1209 = vmatprep.subr.mxu0 0.0
  %1210 = vmatpush1.msra.mxu0 0.0
  %1211 = vmatprep.mubr.f32.mxu0 0.0
  %1212 = vmatmul.mubr.f32.gmra.mrb[0].mxu0 %v1145
  %v1213 = vpop.f32.mrb[0].mxu0
  %v1214 = vadd.f32 0.0, %v1213
  %v1215 = vpop.f32.mrb[0].mxu0
  %1216 = vdwg.mxu0
  %v1218 = vrot.slane %v1214, 4
  %v1220 = vadd.f32 %v505, %v1218
  %v1221 = vxor.u32 %v1220, 2147483648
  %v1222 = vmul.f32 %v1221, 1.442695
  %v1223 = vpow.pop %v1222
  %v1224 = vadd.f32 %v1223, 1.0
  %v1225 = vrcp.pop %v1224
  %v1226 = vmul.f32 1.0, %v1225
  %v1227 = vtanh.pop %v1220
  %v1229 = vrot.slane %v1134, 6
  %v1231 = vmul.f32 %v1226, %v1229
  %1233 = vrot.lane.b32.xlu0 %v1227, 64
  %v1234 = vpop.permute.xlu0 %1233
  %v1236 = vmul.f32 %v1226, %v1234
  %1238 = vrot.lane.b32.xlu0 %v1236, 32
  %v1239 = vpop.permute.xlu0 %1238
  %v1241 = vadd.f32 %v1231, %v1239
  %v1242 = vtanh.pop %v1241
  %1244 = vrot.lane.b32.xlu0 %v1242, 64
  %v1245 = vpop.permute.xlu0 %1244
  %v1247 = vmul.f32 %v1226, %v1245
  %v1249 = vrot.slane %v1247, 4
  %1250 = vrot.lane.b32.xlu0 %v1249, 32
  %v1251 = vpop.permute.xlu0 %1250
  %v1252 = vsel %vm512, %v1251, 0
  %1254 = vmatprep.subr.mxu0 0.0
  %1255 = vmatpush1.msra.mxu0 %v508
  %1256 = vmatprep.subr.mxu0 0.0
  %1257 = vmatpush1.msra.mxu0 %v509
  %1258 = vmatprep.subr.mxu0 0.0
  %1259 = vmatpush1.msra.mxu0 %v510
  %1260 = vmatprep.subr.mxu0 0.0
  %1261 = vmatpush1.msra.mxu0 %v511
  %1262 = vmatprep.subr.mxu0 0.0
  %1263 = vmatpush1.msra.mxu0 0.0
  %1264 = vmatprep.subr.mxu0 0.0
  %1265 = vmatpush1.msra.mxu0 0.0
  %1266 = vmatprep.subr.mxu0 0.0
  %1267 = vmatpush1.msra.mxu0 0.0
  %1268 = vmatprep.subr.mxu0 0.0
  %1269 = vmatpush1.msra.mxu0 0.0
  %1270 = vmatprep.subr.mxu0 0.0
  %1271 = vmatpush1.msra.mxu0 0.0
  %1272 = vmatprep.subr.mxu0 0.0
  %1273 = vmatpush1.msra.mxu0 0.0
  %1274 = vmatprep.subr.mxu0 0.0
  %1275 = vmatpush1.msra.mxu0 0.0
  %1276 = vmatprep.subr.mxu0 0.0
  %1277 = vmatpush1.msra.mxu0 0.0
  %1278 = vmatprep.subr.mxu0 0.0
  %1279 = vmatpush1.msra.mxu0 0.0
  %1280 = vmatprep.subr.mxu0 0.0
  %1281 = vmatpush1.msra.mxu0 0.0
  %1282 = vmatprep.subr.mxu0 0.0
  %1283 = vmatpush1.msra.mxu0 0.0
  %1284 = vmatprep.subr.mxu0 0.0
  %1285 = vmatpush1.msra.mxu0 0.0
  %1286 = vmatprep.subr.mxu0 0.0
  %1287 = vmatpush1.msra.mxu0 0.0
  %1288 = vmatprep.subr.mxu0 0.0
  %1289 = vmatpush1.msra.mxu0 0.0
  %1290 = vmatprep.subr.mxu0 0.0
  %1291 = vmatpush1.msra.mxu0 0.0
  %1292 = vmatprep.subr.mxu0 0.0
  %1293 = vmatpush1.msra.mxu0 0.0
  %1294 = vmatprep.subr.mxu0 0.0
  %1295 = vmatpush1.msra.mxu0 0.0
  %1296 = vmatprep.subr.mxu0 0.0
  %1297 = vmatpush1.msra.mxu0 0.0
  %1298 = vmatprep.subr.mxu0 0.0
  %1299 = vmatpush1.msra.mxu0 0.0
  %1300 = vmatprep.subr.mxu0 0.0
  %1301 = vmatpush1.msra.mxu0 0.0
  %1302 = vmatprep.subr.mxu0 0.0
  %1303 = vmatpush1.msra.mxu0 0.0
  %1304 = vmatprep.subr.mxu0 0.0
  %1305 = vmatpush1.msra.mxu0 0.0
  %1306 = vmatprep.subr.mxu0 0.0
  %1307 = vmatpush1.msra.mxu0 0.0
  %1308 = vmatprep.subr.mxu0 0.0
  %1309 = vmatpush1.msra.mxu0 0.0
  %1310 = vmatprep.subr.mxu0 0.0
  %1311 = vmatpush1.msra.mxu0 0.0
  %1312 = vmatprep.subr.mxu0 0.0
  %1313 = vmatpush1.msra.mxu0 0.0
  %1314 = vmatprep.subr.mxu0 0.0
  %1315 = vmatpush1.msra.mxu0 0.0
  %1316 = vmatprep.subr.mxu0 0.0
  %1317 = vmatpush1.msra.mxu0 0.0
  %1318 = vmatprep.mubr.f32.mxu0 0.0
  %1319 = vmatmul.mubr.f32.gmra.mrb[0].mxu0 %v1252
  %v1320 = vpop.f32.mrb[0].mxu0
  %v1321 = vadd.f32 0.0, %v1320
  %v1322 = vpop.f32.mrb[0].mxu0
  %1323 = vdwg.mxu0
  %v1325 = vrot.slane %v1321, 2
  %v1327 = vadd.f32 %v505, %v1325
  %v1328 = vxor.u32 %v1327, 2147483648
  %v1329 = vmul.f32 %v1328, 1.442695
  %v1330 = vpow.pop %v1329
  %v1331 = vadd.f32 %v1330, 1.0
  %v1332 = vrcp.pop %v1331
  %v1333 = vmul.f32 1.0, %v1332
  %v1334 = vtanh.pop %v1327
  %v1336 = vrot.slane %v1241, 6
  %v1338 = vmul.f32 %v1333, %v1336
  %1340 = vrot.lane.b32.xlu0 %v1334, 64
  %v1341 = vpop.permute.xlu0 %1340
  %v1343 = vmul.f32 %v1333, %v1341
  %1345 = vrot.lane.b32.xlu0 %v1343, 32
  %v1346 = vpop.permute.xlu0 %1345
  %v1348 = vadd.f32 %v1338, %v1346
  %v1349 = vtanh.pop %v1348
  %1351 = vrot.lane.b32.xlu0 %v1349, 64
  %v1352 = vpop.permute.xlu0 %1351
  %v1354 = vmul.f32 %v1333, %v1352
  %v1355 = vld [vmem:[%s8] sm:$0xff]
  %v1356 = vld [vmem:[%s8 + $0x8] sm:$0xff]
  %v1357 = vld [vmem:[%s8 + $0x10] sm:$0xff]
  %v1358 = vld [vmem:[%s8 + $0x18] sm:$0xff]
  %v1360 = vsel %vm512, %v409, 0
  %1362 = vmatprep.subr.mxu0 0.0
  %1363 = vmatpush1.msra.mxu0 %v1355
  %1364 = vmatprep.subr.mxu0 0.0
  %1365 = vmatpush1.msra.mxu0 %v1356
  %1366 = vmatprep.subr.mxu0 0.0
  %1367 = vmatpush1.msra.mxu0 %v1357
  %1368 = vmatprep.subr.mxu0 0.0
  %1369 = vmatpush1.msra.mxu0 %v1358
  %1370 = vmatprep.subr.mxu0 0.0
  %1371 = vmatpush1.msra.mxu0 0.0
  %1372 = vmatprep.subr.mxu0 0.0
  %1373 = vmatpush1.msra.mxu0 0.0
  %1374 = vmatprep.subr.mxu0 0.0
  %1375 = vmatpush1.msra.mxu0 0.0
  %1376 = vmatprep.subr.mxu0 0.0
  %1377 = vmatpush1.msra.mxu0 0.0
  %1378 = vmatprep.subr.mxu0 0.0
  %1379 = vmatpush1.msra.mxu0 0.0
  %1380 = vmatprep.subr.mxu0 0.0
  %1381 = vmatpush1.msra.mxu0 0.0
  %1382 = vmatprep.subr.mxu0 0.0
  %1383 = vmatpush1.msra.mxu0 0.0
  %1384 = vmatprep.subr.mxu0 0.0
  %1385 = vmatpush1.msra.mxu0 0.0
  %1386 = vmatprep.subr.mxu0 0.0
  %1387 = vmatpush1.msra.mxu0 0.0
  %1388 = vmatprep.subr.mxu0 0.0
  %1389 = vmatpush1.msra.mxu0 0.0
  %1390 = vmatprep.subr.mxu0 0.0
  %1391 = vmatpush1.msra.mxu0 0.0
  %1392 = vmatprep.subr.mxu0 0.0
  %1393 = vmatpush1.msra.mxu0 0.0
  %1394 = vmatprep.subr.mxu0 0.0
  %1395 = vmatpush1.msra.mxu0 0.0
  %1396 = vmatprep.subr.mxu0 0.0
  %1397 = vmatpush1.msra.mxu0 0.0
  %1398 = vmatprep.subr.mxu0 0.0
  %1399 = vmatpush1.msra.mxu0 0.0
  %1400 = vmatprep.subr.mxu0 0.0
  %1401 = vmatpush1.msra.mxu0 0.0
  %1402 = vmatprep.subr.mxu0 0.0
  %1403 = vmatpush1.msra.mxu0 0.0
  %1404 = vmatprep.subr.mxu0 0.0
  %1405 = vmatpush1.msra.mxu0 0.0
  %1406 = vmatprep.subr.mxu0 0.0
  %1407 = vmatpush1.msra.mxu0 0.0
  %1408 = vmatprep.subr.mxu0 0.0
  %1409 = vmatpush1.msra.mxu0 0.0
  %1410 = vmatprep.subr.mxu0 0.0
  %1411 = vmatpush1.msra.mxu0 0.0
  %1412 = vmatprep.subr.mxu0 0.0
  %1413 = vmatpush1.msra.mxu0 0.0
  %1414 = vmatprep.subr.mxu0 0.0
  %1415 = vmatpush1.msra.mxu0 0.0
  %1416 = vmatprep.subr.mxu0 0.0
  %1417 = vmatpush1.msra.mxu0 0.0
  %1418 = vmatprep.subr.mxu0 0.0
  %1419 = vmatpush1.msra.mxu0 0.0
  %1420 = vmatprep.subr.mxu0 0.0
  %1421 = vmatpush1.msra.mxu0 0.0
  %1422 = vmatprep.subr.mxu0 0.0
  %1423 = vmatpush1.msra.mxu0 0.0
  %1424 = vmatprep.subr.mxu0 0.0
  %1425 = vmatpush1.msra.mxu0 0.0
  %1426 = vmatprep.mubr.f32.mxu0 0.0
  %1427 = vmatmul.mubr.f32.gmra.mrb[0].mxu0 %v1360
  %v1428 = vpop.f32.mrb[0].mxu0
  %v1429 = vadd.f32 0.0, %v1428
  %v1430 = vpop.f32.mrb[0].mxu0
  %1431 = vdwg.mxu0
  %v1432 = vld [vmem:[%s11] sm:$0xff]
  %v1433 = vld [vmem:[%s11 + $0x8] sm:$0xff]
  %v1434 = vld [vmem:[%s11 + $0x10] sm:$0xff]
  %v1435 = vld [vmem:[%s11 + $0x18] sm:$0xff]
  %v1436 = vld [vmem:[%s12] sm:$0x1]
  %v1438 = vlaneseq
  %v1439 = vshrl.u32 %v1438, 7
  %v1440 = vsub.s32 0, %v1439
  %v1441 = vrot.slane %v1436, %v1440
  %v1444 = vsel %vm512, %v1429, 0
  %1446 = vmatprep.subr.mxu0 0.0
  %1447 = vmatpush1.msra.mxu0 %v1432
  %1448 = vmatprep.subr.mxu0 0.0
  %1449 = vmatpush1.msra.mxu0 %v1433
  %1450 = vmatprep.subr.mxu0 0.0
  %1451 = vmatpush1.msra.mxu0 %v1434
  %1452 = vmatprep.subr.mxu0 0.0
  %1453 = vmatpush1.msra.mxu0 %v1435
  %1454 = vmatprep.subr.mxu0 0.0
  %1455 = vmatpush1.msra.mxu0 0.0
  %1456 = vmatprep.subr.mxu0 0.0
  %1457 = vmatpush1.msra.mxu0 0.0
  %1458 = vmatprep.subr.mxu0 0.0
  %1459 = vmatpush1.msra.mxu0 0.0
  %1460 = vmatprep.subr.mxu0 0.0
  %1461 = vmatpush1.msra.mxu0 0.0
  %1462 = vmatprep.subr.mxu0 0.0
  %1463 = vmatpush1.msra.mxu0 0.0
  %1464 = vmatprep.subr.mxu0 0.0
  %1465 = vmatpush1.msra.mxu0 0.0
  %1466 = vmatprep.subr.mxu0 0.0
  %1467 = vmatpush1.msra.mxu0 0.0
  %1468 = vmatprep.subr.mxu0 0.0
  %1469 = vmatpush1.msra.mxu0 0.0
  %1470 = vmatprep.subr.mxu0 0.0
  %1471 = vmatpush1.msra.mxu0 0.0
  %1472 = vmatprep.subr.mxu0 0.0
  %1473 = vmatpush1.msra.mxu0 0.0
  %1474 = vmatprep.subr.mxu0 0.0
  %1475 = vmatpush1.msra.mxu0 0.0
  %1476 = vmatprep.subr.mxu0 0.0
  %1477 = vmatpush1.msra.mxu0 0.0
  %1478 = vmatprep.subr.mxu0 0.0
  %1479 = vmatpush1.msra.mxu0 0.0
  %1480 = vmatprep.subr.mxu0 0.0
  %1481 = vmatpush1.msra.mxu0 0.0
  %1482 = vmatprep.subr.mxu0 0.0
  %1483 = vmatpush1.msra.mxu0 0.0
  %1484 = vmatprep.subr.mxu0 0.0
  %1485 = vmatpush1.msra.mxu0 0.0
  %1486 = vmatprep.subr.mxu0 0.0
  %1487 = vmatpush1.msra.mxu0 0.0
  %1488 = vmatprep.subr.mxu0 0.0
  %1489 = vmatpush1.msra.mxu0 0.0
  %1490 = vmatprep.subr.mxu0 0.0
  %1491 = vmatpush1.msra.mxu0 0.0
  %1492 = vmatprep.subr.mxu0 0.0
  %1493 = vmatpush1.msra.mxu0 0.0
  %1494 = vmatprep.subr.mxu0 0.0
  %1495 = vmatpush1.msra.mxu0 0.0
  %1496 = vmatprep.subr.mxu0 0.0
  %1497 = vmatpush1.msra.mxu0 0.0
  %1498 = vmatprep.subr.mxu0 0.0
  %1499 = vmatpush1.msra.mxu0 0.0
  %1500 = vmatprep.subr.mxu0 0.0
  %1501 = vmatpush1.msra.mxu0 0.0
  %1502 = vmatprep.subr.mxu0 0.0
  %1503 = vmatpush1.msra.mxu0 0.0
  %1504 = vmatprep.subr.mxu0 0.0
  %1505 = vmatpush1.msra.mxu0 0.0
  %1506 = vmatprep.subr.mxu0 0.0
  %1507 = vmatpush1.msra.mxu0 0.0
  %1508 = vmatprep.subr.mxu0 0.0
  %1509 = vmatpush1.msra.mxu0 0.0
  %1510 = vmatprep.mubr.f32.mxu0 0.0
  %1511 = vmatmul.mubr.f32.gmra.mrb[0].mxu0 %v1444
  %v1512 = vpop.f32.mrb[0].mxu0
  %v1513 = vadd.f32 %v1441, %v1512
  %v1514 = vpop.f32.mrb[0].mxu0
  %1515 = vdwg.mxu0
  %v1517 = vrot.slane %v1354, 6
  %1518 = vrot.lane.b32.xlu0 %v1517, 32
  %v1519 = vpop.permute.xlu0 %1518
  %v1520 = vsel %vm512, %v1519, 0
  %1522 = vmatprep.subr.mxu0 0.0
  %1523 = vmatpush1.msra.mxu0 %v1355
  %1524 = vmatprep.subr.mxu0 0.0
  %1525 = vmatpush1.msra.mxu0 %v1356
  %1526 = vmatprep.subr.mxu0 0.0
  %1527 = vmatpush1.msra.mxu0 %v1357
  %1528 = vmatprep.subr.mxu0 0.0
  %1529 = vmatpush1.msra.mxu0 %v1358
  %1530 = vmatprep.subr.mxu0 0.0
  %1531 = vmatpush1.msra.mxu0 0.0
  %1532 = vmatprep.subr.mxu0 0.0
  %1533 = vmatpush1.msra.mxu0 0.0
  %1534 = vmatprep.subr.mxu0 0.0
  %1535 = vmatpush1.msra.mxu0 0.0
  %1536 = vmatprep.subr.mxu0 0.0
  %1537 = vmatpush1.msra.mxu0 0.0
  %1538 = vmatprep.subr.mxu0 0.0
  %1539 = vmatpush1.msra.mxu0 0.0
  %1540 = vmatprep.subr.mxu0 0.0
  %1541 = vmatpush1.msra.mxu0 0.0
  %1542 = vmatprep.subr.mxu0 0.0
  %1543 = vmatpush1.msra.mxu0 0.0
  %1544 = vmatprep.subr.mxu0 0.0
  %1545 = vmatpush1.msra.mxu0 0.0
  %1546 = vmatprep.subr.mxu0 0.0
  %1547 = vmatpush1.msra.mxu0 0.0
  %1548 = vmatprep.subr.mxu0 0.0
  %1549 = vmatpush1.msra.mxu0 0.0
  %1550 = vmatprep.subr.mxu0 0.0
  %1551 = vmatpush1.msra.mxu0 0.0
  %1552 = vmatprep.subr.mxu0 0.0
  %1553 = vmatpush1.msra.mxu0 0.0
  %1554 = vmatprep.subr.mxu0 0.0
  %1555 = vmatpush1.msra.mxu0 0.0
  %1556 = vmatprep.subr.mxu0 0.0
  %1557 = vmatpush1.msra.mxu0 0.0
  %1558 = vmatprep.subr.mxu0 0.0
  %1559 = vmatpush1.msra.mxu0 0.0
  %1560 = vmatprep.subr.mxu0 0.0
  %1561 = vmatpush1.msra.mxu0 0.0
  %1562 = vmatprep.subr.mxu0 0.0
  %1563 = vmatpush1.msra.mxu0 0.0
  %1564 = vmatprep.subr.mxu0 0.0
  %1565 = vmatpush1.msra.mxu0 0.0
  %1566 = vmatprep.subr.mxu0 0.0
  %1567 = vmatpush1.msra.mxu0 0.0
  %1568 = vmatprep.subr.mxu0 0.0
  %1569 = vmatpush1.msra.mxu0 0.0
  %1570 = vmatprep.subr.mxu0 0.0
  %1571 = vmatpush1.msra.mxu0 0.0
  %1572 = vmatprep.subr.mxu0 0.0
  %1573 = vmatpush1.msra.mxu0 0.0
  %1574 = vmatprep.subr.mxu0 0.0
  %1575 = vmatpush1.msra.mxu0 0.0
  %1576 = vmatprep.subr.mxu0 0.0
  %1577 = vmatpush1.msra.mxu0 0.0
  %1578 = vmatprep.subr.mxu0 0.0
  %1579 = vmatpush1.msra.mxu0 0.0
  %1580 = vmatprep.subr.mxu0 0.0
  %1581 = vmatpush1.msra.mxu0 0.0
  %1582 = vmatprep.subr.mxu0 0.0
  %1583 = vmatpush1.msra.mxu0 0.0
  %1584 = vmatprep.subr.mxu0 0.0
  %1585 = vmatpush1.msra.mxu0 0.0
  %1586 = vmatprep.mubr.f32.mxu0 0.0
  %1587 = vmatmul.mubr.f32.gmra.mrb[0].mxu0 %v1520
  %v1588 = vpop.f32.mrb[0].mxu0
  %v1589 = vadd.f32 0.0, %v1588
  %v1590 = vpop.f32.mrb[0].mxu0
  %1591 = vdwg.mxu0
  %v1593 = vsel %vm512, %v1589, 0
  %1595 = vmatprep.subr.mxu0 0.0
  %1596 = vmatpush1.msra.mxu0 %v1432
  %1597 = vmatprep.subr.mxu0 0.0
  %1598 = vmatpush1.msra.mxu0 %v1433
  %1599 = vmatprep.subr.mxu0 0.0
  %1600 = vmatpush1.msra.mxu0 %v1434
  %1601 = vmatprep.subr.mxu0 0.0
  %1602 = vmatpush1.msra.mxu0 %v1435
  %1603 = vmatprep.subr.mxu0 0.0
  %1604 = vmatpush1.msra.mxu0 0.0
  %1605 = vmatprep.subr.mxu0 0.0
  %1606 = vmatpush1.msra.mxu0 0.0
  %1607 = vmatprep.subr.mxu0 0.0
  %1608 = vmatpush1.msra.mxu0 0.0
  %1609 = vmatprep.subr.mxu0 0.0
  %1610 = vmatpush1.msra.mxu0 0.0
  %1611 = vmatprep.subr.mxu0 0.0
  %1612 = vmatpush1.msra.mxu0 0.0
  %1613 = vmatprep.subr.mxu0 0.0
  %1614 = vmatpush1.msra.mxu0 0.0
  %1615 = vmatprep.subr.mxu0 0.0
  %1616 = vmatpush1.msra.mxu0 0.0
  %1617 = vmatprep.subr.mxu0 0.0
  %1618 = vmatpush1.msra.mxu0 0.0
  %1619 = vmatprep.subr.mxu0 0.0
  %1620 = vmatpush1.msra.mxu0 0.0
  %1621 = vmatprep.subr.mxu0 0.0
  %1622 = vmatpush1.msra.mxu0 0.0
  %1623 = vmatprep.subr.mxu0 0.0
  %1624 = vmatpush1.msra.mxu0 0.0
  %1625 = vmatprep.subr.mxu0 0.0
  %1626 = vmatpush1.msra.mxu0 0.0
  %1627 = vmatprep.subr.mxu0 0.0
  %1628 = vmatpush1.msra.mxu0 0.0
  %1629 = vmatprep.subr.mxu0 0.0
  %1630 = vmatpush1.msra.mxu0 0.0
  %1631 = vmatprep.subr.mxu0 0.0
  %1632 = vmatpush1.msra.mxu0 0.0
  %1633 = vmatprep.subr.mxu0 0.0
  %1634 = vmatpush1.msra.mxu0 0.0
  %1635 = vmatprep.subr.mxu0 0.0
  %1636 = vmatpush1.msra.mxu0 0.0
  %1637 = vmatprep.subr.mxu0 0.0
  %1638 = vmatpush1.msra.mxu0 0.0
  %1639 = vmatprep.subr.mxu0 0.0
  %1640 = vmatpush1.msra.mxu0 0.0
  %1641 = vmatprep.subr.mxu0 0.0
  %1642 = vmatpush1.msra.mxu0 0.0
  %1643 = vmatprep.subr.mxu0 0.0
  %1644 = vmatpush1.msra.mxu0 0.0
  %1645 = vmatprep.subr.mxu0 0.0
  %1646 = vmatpush1.msra.mxu0 0.0
  %1647 = vmatprep.subr.mxu0 0.0
  %1648 = vmatpush1.msra.mxu0 0.0
  %1649 = vmatprep.subr.mxu0 0.0
  %1650 = vmatpush1.msra.mxu0 0.0
  %1651 = vmatprep.subr.mxu0 0.0
  %1652 = vmatpush1.msra.mxu0 0.0
  %1653 = vmatprep.subr.mxu0 0.0
  %1654 = vmatpush1.msra.mxu0 0.0
  %1655 = vmatprep.subr.mxu0 0.0
  %1656 = vmatpush1.msra.mxu0 0.0
  %1657 = vmatprep.subr.mxu0 0.0
  %1658 = vmatpush1.msra.mxu0 0.0
  %1659 = vmatprep.mubr.f32.mxu0 0.0
  %1660 = vmatmul.mubr.f32.gmra.mrb[0].mxu0 %v1593
  %v1661 = vpop.f32.mrb[0].mxu0
  %v1662 = vadd.f32 %v1441, %v1661
  %v1663 = vpop.f32.mrb[0].mxu0
  %1664 = vdwg.mxu0
  %v1665 = vld [vmem:[%s9] sm:$0xff]
  %v1666 = vld [vmem:[%s9 + $0x8] sm:$0xff]
  %v1667 = vld [vmem:[%s9 + $0x10] sm:$0xff]
  %v1668 = vld [vmem:[%s9 + $0x18] sm:$0xff]
  %1669 = vmatprep.subr.mxu0 0.0
  %1670 = vmatpush1.msra.mxu0 %v1665
  %1671 = vmatprep.subr.mxu0 0.0
  %1672 = vmatpush1.msra.mxu0 %v1666
  %1673 = vmatprep.subr.mxu0 0.0
  %1674 = vmatpush1.msra.mxu0 %v1667
  %1675 = vmatprep.subr.mxu0 0.0
  %1676 = vmatpush1.msra.mxu0 %v1668
  %1677 = vmatprep.subr.mxu0 0.0
  %1678 = vmatpush1.msra.mxu0 0.0
  %1679 = vmatprep.subr.mxu0 0.0
  %1680 = vmatpush1.msra.mxu0 0.0
  %1681 = vmatprep.subr.mxu0 0.0
  %1682 = vmatpush1.msra.mxu0 0.0
  %1683 = vmatprep.subr.mxu0 0.0
  %1684 = vmatpush1.msra.mxu0 0.0
  %1685 = vmatprep.subr.mxu0 0.0
  %1686 = vmatpush1.msra.mxu0 0.0
  %1687 = vmatprep.subr.mxu0 0.0
  %1688 = vmatpush1.msra.mxu0 0.0
  %1689 = vmatprep.subr.mxu0 0.0
  %1690 = vmatpush1.msra.mxu0 0.0
  %1691 = vmatprep.subr.mxu0 0.0
  %1692 = vmatpush1.msra.mxu0 0.0
  %1693 = vmatprep.subr.mxu0 0.0
  %1694 = vmatpush1.msra.mxu0 0.0
  %1695 = vmatprep.subr.mxu0 0.0
  %1696 = vmatpush1.msra.mxu0 0.0
  %1697 = vmatprep.subr.mxu0 0.0
  %1698 = vmatpush1.msra.mxu0 0.0
  %1699 = vmatprep.subr.mxu0 0.0
  %1700 = vmatpush1.msra.mxu0 0.0
  %1701 = vmatprep.subr.mxu0 0.0
  %1702 = vmatpush1.msra.mxu0 0.0
  %1703 = vmatprep.subr.mxu0 0.0
  %1704 = vmatpush1.msra.mxu0 0.0
  %1705 = vmatprep.subr.mxu0 0.0
  %1706 = vmatpush1.msra.mxu0 0.0
  %1707 = vmatprep.subr.mxu0 0.0
  %1708 = vmatpush1.msra.mxu0 0.0
  %1709 = vmatprep.subr.mxu0 0.0
  %1710 = vmatpush1.msra.mxu0 0.0
  %1711 = vmatprep.subr.mxu0 0.0
  %1712 = vmatpush1.msra.mxu0 0.0
  %1713 = vmatprep.subr.mxu0 0.0
  %1714 = vmatpush1.msra.mxu0 0.0
  %1715 = vmatprep.subr.mxu0 0.0
  %1716 = vmatpush1.msra.mxu0 0.0
  %1717 = vmatprep.subr.mxu0 0.0
  %1718 = vmatpush1.msra.mxu0 0.0
  %1719 = vmatprep.subr.mxu0 0.0
  %1720 = vmatpush1.msra.mxu0 0.0
  %1721 = vmatprep.subr.mxu0 0.0
  %1722 = vmatpush1.msra.mxu0 0.0
  %1723 = vmatprep.subr.mxu0 0.0
  %1724 = vmatpush1.msra.mxu0 0.0
  %1725 = vmatprep.subr.mxu0 0.0
  %1726 = vmatpush1.msra.mxu0 0.0
  %1727 = vmatprep.subr.mxu0 0.0
  %1728 = vmatpush1.msra.mxu0 0.0
  %1729 = vmatprep.subr.mxu0 0.0
  %1730 = vmatpush1.msra.mxu0 0.0
  %1731 = vmatprep.subr.mxu0 0.0
  %1732 = vmatpush1.msra.mxu0 0.0
  %1733 = vmatprep.mubr.f32.mxu0 0.0
  %1734 = vmatmul.mubr.f32.gmra.mrb[0].mxu0 %v1360
  %v1735 = vpop.f32.mrb[0].mxu0
  %v1736 = vadd.f32 0.0, %v1735
  %v1737 = vpop.f32.mrb[0].mxu0
  %1738 = vdwg.mxu0
  %v1739 = vld [vmem:[%s13] sm:$0xff]
  %v1740 = vld [vmem:[%s13 + $0x8] sm:$0xff]
  %v1741 = vld [vmem:[%s13 + $0x10] sm:$0xff]
  %v1742 = vld [vmem:[%s13 + $0x18] sm:$0xff]
  %v1743 = vld [vmem:[%s14] sm:$0x1]
  %v1745 = vlaneseq
  %v1746 = vshrl.u32 %v1745, 7
  %v1747 = vsub.s32 0, %v1746
  %v1748 = vrot.slane %v1743, %v1747
  %v1751 = vsel %vm512, %v1736, 0
  %1753 = vmatprep.subr.mxu0 0.0
  %1754 = vmatpush1.msra.mxu0 %v1739
  %1755 = vmatprep.subr.mxu0 0.0
  %1756 = vmatpush1.msra.mxu0 %v1740
  %1757 = vmatprep.subr.mxu0 0.0
  %1758 = vmatpush1.msra.mxu0 %v1741
  %1759 = vmatprep.subr.mxu0 0.0
  %1760 = vmatpush1.msra.mxu0 %v1742
  %1761 = vmatprep.subr.mxu0 0.0
  %1762 = vmatpush1.msra.mxu0 0.0
  %1763 = vmatprep.subr.mxu0 0.0
  %1764 = vmatpush1.msra.mxu0 0.0
  %1765 = vmatprep.subr.mxu0 0.0
  %1766 = vmatpush1.msra.mxu0 0.0
  %1767 = vmatprep.subr.mxu0 0.0
  %1768 = vmatpush1.msra.mxu0 0.0
  %1769 = vmatprep.subr.mxu0 0.0
  %1770 = vmatpush1.msra.mxu0 0.0
  %1771 = vmatprep.subr.mxu0 0.0
  %1772 = vmatpush1.msra.mxu0 0.0
  %1773 = vmatprep.subr.mxu0 0.0
  %1774 = vmatpush1.msra.mxu0 0.0
  %1775 = vmatprep.subr.mxu0 0.0
  %1776 = vmatpush1.msra.mxu0 0.0
  %1777 = vmatprep.subr.mxu0 0.0
  %1778 = vmatpush1.msra.mxu0 0.0
  %1779 = vmatprep.subr.mxu0 0.0
  %1780 = vmatpush1.msra.mxu0 0.0
  %1781 = vmatprep.subr.mxu0 0.0
  %1782 = vmatpush1.msra.mxu0 0.0
  %1783 = vmatprep.subr.mxu0 0.0
  %1784 = vmatpush1.msra.mxu0 0.0
  %1785 = vmatprep.subr.mxu0 0.0
  %1786 = vmatpush1.msra.mxu0 0.0
  %1787 = vmatprep.subr.mxu0 0.0
  %1788 = vmatpush1.msra.mxu0 0.0
  %1789 = vmatprep.subr.mxu0 0.0
  %1790 = vmatpush1.msra.mxu0 0.0
  %1791 = vmatprep.subr.mxu0 0.0
  %1792 = vmatpush1.msra.mxu0 0.0
  %1793 = vmatprep.subr.mxu0 0.0
  %1794 = vmatpush1.msra.mxu0 0.0
  %1795 = vmatprep.subr.mxu0 0.0
  %1796 = vmatpush1.msra.mxu0 0.0
  %1797 = vmatprep.subr.mxu0 0.0
  %1798 = vmatpush1.msra.mxu0 0.0
  %1799 = vmatprep.subr.mxu0 0.0
  %1800 = vmatpush1.msra.mxu0 0.0
  %1801 = vmatprep.subr.mxu0 0.0
  %1802 = vmatpush1.msra.mxu0 0.0
  %1803 = vmatprep.subr.mxu0 0.0
  %1804 = vmatpush1.msra.mxu0 0.0
  %1805 = vmatprep.subr.mxu0 0.0
  %1806 = vmatpush1.msra.mxu0 0.0
  %1807 = vmatprep.subr.mxu0 0.0
  %1808 = vmatpush1.msra.mxu0 0.0
  %1809 = vmatprep.subr.mxu0 0.0
  %1810 = vmatpush1.msra.mxu0 0.0
  %1811 = vmatprep.subr.mxu0 0.0
  %1812 = vmatpush1.msra.mxu0 0.0
  %1813 = vmatprep.subr.mxu0 0.0
  %1814 = vmatpush1.msra.mxu0 0.0
  %1815 = vmatprep.subr.mxu0 0.0
  %1816 = vmatpush1.msra.mxu0 0.0
  %1817 = vmatprep.mubr.f32.mxu0 0.0
  %1818 = vmatmul.mubr.f32.gmra.mrb[0].mxu0 %v1751
  %v1819 = vpop.f32.mrb[0].mxu0
  %v1820 = vadd.f32 %v1748, %v1819
  %v1821 = vpop.f32.mrb[0].mxu0
  %1822 = vdwg.mxu0
  %1823 = vmatprep.subr.mxu0 0.0
  %1824 = vmatpush1.msra.mxu0 %v1665
  %1825 = vmatprep.subr.mxu0 0.0
  %1826 = vmatpush1.msra.mxu0 %v1666
  %1827 = vmatprep.subr.mxu0 0.0
  %1828 = vmatpush1.msra.mxu0 %v1667
  %1829 = vmatprep.subr.mxu0 0.0
  %1830 = vmatpush1.msra.mxu0 %v1668
  %1831 = vmatprep.subr.mxu0 0.0
  %1832 = vmatpush1.msra.mxu0 0.0
  %1833 = vmatprep.subr.mxu0 0.0
  %1834 = vmatpush1.msra.mxu0 0.0
  %1835 = vmatprep.subr.mxu0 0.0
  %1836 = vmatpush1.msra.mxu0 0.0
  %1837 = vmatprep.subr.mxu0 0.0
  %1838 = vmatpush1.msra.mxu0 0.0
  %1839 = vmatprep.subr.mxu0 0.0
  %1840 = vmatpush1.msra.mxu0 0.0
  %1841 = vmatprep.subr.mxu0 0.0
  %1842 = vmatpush1.msra.mxu0 0.0
  %1843 = vmatprep.subr.mxu0 0.0
  %1844 = vmatpush1.msra.mxu0 0.0
  %1845 = vmatprep.subr.mxu0 0.0
  %1846 = vmatpush1.msra.mxu0 0.0
  %1847 = vmatprep.subr.mxu0 0.0
  %1848 = vmatpush1.msra.mxu0 0.0
  %1849 = vmatprep.subr.mxu0 0.0
  %1850 = vmatpush1.msra.mxu0 0.0
  %1851 = vmatprep.subr.mxu0 0.0
  %1852 = vmatpush1.msra.mxu0 0.0
  %1853 = vmatprep.subr.mxu0 0.0
  %1854 = vmatpush1.msra.mxu0 0.0
  %1855 = vmatprep.subr.mxu0 0.0
  %1856 = vmatpush1.msra.mxu0 0.0
  %1857 = vmatprep.subr.mxu0 0.0
  %1858 = vmatpush1.msra.mxu0 0.0
  %1859 = vmatprep.subr.mxu0 0.0
  %1860 = vmatpush1.msra.mxu0 0.0
  %1861 = vmatprep.subr.mxu0 0.0
  %1862 = vmatpush1.msra.mxu0 0.0
  %1863 = vmatprep.subr.mxu0 0.0
  %1864 = vmatpush1.msra.mxu0 0.0
  %1865 = vmatprep.subr.mxu0 0.0
  %1866 = vmatpush1.msra.mxu0 0.0
  %1867 = vmatprep.subr.mxu0 0.0
  %1868 = vmatpush1.msra.mxu0 0.0
  %1869 = vmatprep.subr.mxu0 0.0
  %1870 = vmatpush1.msra.mxu0 0.0
  %1871 = vmatprep.subr.mxu0 0.0
  %1872 = vmatpush1.msra.mxu0 0.0
  %1873 = vmatprep.subr.mxu0 0.0
  %1874 = vmatpush1.msra.mxu0 0.0
  %1875 = vmatprep.subr.mxu0 0.0
  %1876 = vmatpush1.msra.mxu0 0.0
  %1877 = vmatprep.subr.mxu0 0.0
  %1878 = vmatpush1.msra.mxu0 0.0
  %1879 = vmatprep.subr.mxu0 0.0
  %1880 = vmatpush1.msra.mxu0 0.0
  %1881 = vmatprep.subr.mxu0 0.0
  %1882 = vmatpush1.msra.mxu0 0.0
  %1883 = vmatprep.subr.mxu0 0.0
  %1884 = vmatpush1.msra.mxu0 0.0
  %1885 = vmatprep.subr.mxu0 0.0
  %1886 = vmatpush1.msra.mxu0 0.0
  %1887 = vmatprep.mubr.f32.mxu0 0.0
  %1888 = vmatmul.mubr.f32.gmra.mrb[0].mxu0 %v1520
  %v1889 = vpop.f32.mrb[0].mxu0
  %v1890 = vadd.f32 0.0, %v1889
  %v1891 = vpop.f32.mrb[0].mxu0
  %1892 = vdwg.mxu0
  %v1894 = vsel %vm512, %v1890, 0
  %1896 = vmatprep.subr.mxu0 0.0
  %1897 = vmatpush1.msra.mxu0 %v1739
  %1898 = vmatprep.subr.mxu0 0.0
  %1899 = vmatpush1.msra.mxu0 %v1740
  %1900 = vmatprep.subr.mxu0 0.0
  %1901 = vmatpush1.msra.mxu0 %v1741
  %1902 = vmatprep.subr.mxu0 0.0
  %1903 = vmatpush1.msra.mxu0 %v1742
  %1904 = vmatprep.subr.mxu0 0.0
  %1905 = vmatpush1.msra.mxu0 0.0
  %1906 = vmatprep.subr.mxu0 0.0
  %1907 = vmatpush1.msra.mxu0 0.0
  %1908 = vmatprep.subr.mxu0 0.0
  %1909 = vmatpush1.msra.mxu0 0.0
  %1910 = vmatprep.subr.mxu0 0.0
  %1911 = vmatpush1.msra.mxu0 0.0
  %1912 = vmatprep.subr.mxu0 0.0
  %1913 = vmatpush1.msra.mxu0 0.0
  %1914 = vmatprep.subr.mxu0 0.0
  %1915 = vmatpush1.msra.mxu0 0.0
  %1916 = vmatprep.subr.mxu0 0.0
  %1917 = vmatpush1.msra.mxu0 0.0
  %1918 = vmatprep.subr.mxu0 0.0
  %1919 = vmatpush1.msra.mxu0 0.0
  %1920 = vmatprep.subr.mxu0 0.0
  %1921 = vmatpush1.msra.mxu0 0.0
  %1922 = vmatprep.subr.mxu0 0.0
  %1923 = vmatpush1.msra.mxu0 0.0
  %1924 = vmatprep.subr.mxu0 0.0
  %1925 = vmatpush1.msra.mxu0 0.0
  %1926 = vmatprep.subr.mxu0 0.0
  %1927 = vmatpush1.msra.mxu0 0.0
  %1928 = vmatprep.subr.mxu0 0.0
  %1929 = vmatpush1.msra.mxu0 0.0
  %1930 = vmatprep.subr.mxu0 0.0
  %1931 = vmatpush1.msra.mxu0 0.0
  %1932 = vmatprep.subr.mxu0 0.0
  %1933 = vmatpush1.msra.mxu0 0.0
  %1934 = vmatprep.subr.mxu0 0.0
  %1935 = vmatpush1.msra.mxu0 0.0
  %1936 = vmatprep.subr.mxu0 0.0
  %1937 = vmatpush1.msra.mxu0 0.0
  %1938 = vmatprep.subr.mxu0 0.0
  %1939 = vmatpush1.msra.mxu0 0.0
  %1940 = vmatprep.subr.mxu0 0.0
  %1941 = vmatpush1.msra.mxu0 0.0
  %1942 = vmatprep.subr.mxu0 0.0
  %1943 = vmatpush1.msra.mxu0 0.0
  %1944 = vmatprep.subr.mxu0 0.0
  %1945 = vmatpush1.msra.mxu0 0.0
  %1946 = vmatprep.subr.mxu0 0.0
  %1947 = vmatpush1.msra.mxu0 0.0
  %1948 = vmatprep.subr.mxu0 0.0
  %1949 = vmatpush1.msra.mxu0 0.0
  %1950 = vmatprep.subr.mxu0 0.0
  %1951 = vmatpush1.msra.mxu0 0.0
  %1952 = vmatprep.subr.mxu0 0.0
  %1953 = vmatpush1.msra.mxu0 0.0
  %1954 = vmatprep.subr.mxu0 0.0
  %1955 = vmatpush1.msra.mxu0 0.0
  %1956 = vmatprep.subr.mxu0 0.0
  %1957 = vmatpush1.msra.mxu0 0.0
  %1958 = vmatprep.subr.mxu0 0.0
  %1959 = vmatpush1.msra.mxu0 0.0
  %1960 = vmatprep.mubr.f32.mxu0 0.0
  %1961 = vmatmul.mubr.f32.gmra.mrb[0].mxu0 %v1894
  %v1962 = vpop.f32.mrb[0].mxu0
  %v1963 = vadd.f32 %v1748, %v1962
  %v1964 = vpop.f32.mrb[0].mxu0
  %1965 = vdwg.mxu0
  %v1966 = vld [vmem:[%s10] sm:$0xff]
  %v1967 = vld [vmem:[%s10 + $0x8] sm:$0xff]
  %v1968 = vld [vmem:[%s10 + $0x10] sm:$0xff]
  %v1969 = vld [vmem:[%s10 + $0x18] sm:$0xff]
  %1970 = vmatprep.subr.mxu0 0.0
  %1971 = vmatpush1.msra.mxu0 %v1966
  %1972 = vmatprep.subr.mxu0 0.0
  %1973 = vmatpush1.msra.mxu0 %v1967
  %1974 = vmatprep.subr.mxu0 0.0
  %1975 = vmatpush1.msra.mxu0 %v1968
  %1976 = vmatprep.subr.mxu0 0.0
  %1977 = vmatpush1.msra.mxu0 %v1969
  %1978 = vmatprep.subr.mxu0 0.0
  %1979 = vmatpush1.msra.mxu0 0.0
  %1980 = vmatprep.subr.mxu0 0.0
  %1981 = vmatpush1.msra.mxu0 0.0
  %1982 = vmatprep.subr.mxu0 0.0
  %1983 = vmatpush1.msra.mxu0 0.0
  %1984 = vmatprep.subr.mxu0 0.0
  %1985 = vmatpush1.msra.mxu0 0.0
  %1986 = vmatprep.subr.mxu0 0.0
  %1987 = vmatpush1.msra.mxu0 0.0
  %1988 = vmatprep.subr.mxu0 0.0
  %1989 = vmatpush1.msra.mxu0 0.0
  %1990 = vmatprep.subr.mxu0 0.0
  %1991 = vmatpush1.msra.mxu0 0.0
  %1992 = vmatprep.subr.mxu0 0.0
  %1993 = vmatpush1.msra.mxu0 0.0
  %1994 = vmatprep.subr.mxu0 0.0
  %1995 = vmatpush1.msra.mxu0 0.0
  %1996 = vmatprep.subr.mxu0 0.0
  %1997 = vmatpush1.msra.mxu0 0.0
  %1998 = vmatprep.subr.mxu0 0.0
  %1999 = vmatpush1.msra.mxu0 0.0
  %2000 = vmatprep.subr.mxu0 0.0
  %2001 = vmatpush1.msra.mxu0 0.0
  %2002 = vmatprep.subr.mxu0 0.0
  %2003 = vmatpush1.msra.mxu0 0.0
  %2004 = vmatprep.subr.mxu0 0.0
  %2005 = vmatpush1.msra.mxu0 0.0
  %2006 = vmatprep.subr.mxu0 0.0
  %2007 = vmatpush1.msra.mxu0 0.0
  %2008 = vmatprep.subr.mxu0 0.0
  %2009 = vmatpush1.msra.mxu0 0.0
  %2010 = vmatprep.subr.mxu0 0.0
  %2011 = vmatpush1.msra.mxu0 0.0
  %2012 = vmatprep.subr.mxu0 0.0
  %2013 = vmatpush1.msra.mxu0 0.0
  %2014 = vmatprep.subr.mxu0 0.0
  %2015 = vmatpush1.msra.mxu0 0.0
  %2016 = vmatprep.subr.mxu0 0.0
  %2017 = vmatpush1.msra.mxu0 0.0
  %2018 = vmatprep.subr.mxu0 0.0
  %2019 = vmatpush1.msra.mxu0 0.0
  %2020 = vmatprep.subr.mxu0 0.0
  %2021 = vmatpush1.msra.mxu0 0.0
  %2022 = vmatprep.subr.mxu0 0.0
  %2023 = vmatpush1.msra.mxu0 0.0
  %2024 = vmatprep.subr.mxu0 0.0
  %2025 = vmatpush1.msra.mxu0 0.0
  %2026 = vmatprep.subr.mxu0 0.0
  %2027 = vmatpush1.msra.mxu0 0.0
  %2028 = vmatprep.subr.mxu0 0.0
  %2029 = vmatpush1.msra.mxu0 0.0
  %2030 = vmatprep.subr.mxu0 0.0
  %2031 = vmatpush1.msra.mxu0 0.0
  %2032 = vmatprep.subr.mxu0 0.0
  %2033 = vmatpush1.msra.mxu0 0.0
  %2034 = vmatprep.mubr.f32.mxu0 0.0
  %2035 = vmatmul.mubr.f32.gmra.mrb[0].mxu0 %v1360
  %v2036 = vpop.f32.mrb[0].mxu0
  %v2037 = vadd.f32 0.0, %v2036
  %v2038 = vpop.f32.mrb[0].mxu0
  %2039 = vdwg.mxu0
  %v2040 = vld [vmem:[%s15] sm:$0xff]
  %v2041 = vld [vmem:[%s15 + $0x8] sm:$0xff]
  %v2042 = vld [vmem:[%s16] sm:$0x1]
  %v2044 = vlaneseq
  %v2045 = vshrl.u32 %v2044, 7
  %v2046 = vsub.s32 0, %v2045
  %v2047 = vrot.slane %v2042, %v2046
  %vm2049 = vcmask 130048
  %v2051 = vsel %vm2049, %v2037, 0
  %2053 = vmatprep.subr.mxu0 0.0
  %2054 = vmatpush1.msra.mxu0 %v2040
  %2055 = vmatprep.subr.mxu0 0.0
  %2056 = vmatpush1.msra.mxu0 %v2041
  %2057 = vmatprep.subr.mxu0 0.0
  %2058 = vmatpush1.msra.mxu0 0.0
  %2059 = vmatprep.subr.mxu0 0.0
  %2060 = vmatpush1.msra.mxu0 0.0
  %2061 = vmatprep.subr.mxu0 0.0
  %2062 = vmatpush1.msra.mxu0 0.0
  %2063 = vmatprep.subr.mxu0 0.0
  %2064 = vmatpush1.msra.mxu0 0.0
  %2065 = vmatprep.subr.mxu0 0.0
  %2066 = vmatpush1.msra.mxu0 0.0
  %2067 = vmatprep.subr.mxu0 0.0
  %2068 = vmatpush1.msra.mxu0 0.0
  %2069 = vmatprep.subr.mxu0 0.0
  %2070 = vmatpush1.msra.mxu0 0.0
  %2071 = vmatprep.subr.mxu0 0.0
  %2072 = vmatpush1.msra.mxu0 0.0
  %2073 = vmatprep.subr.mxu0 0.0
  %2074 = vmatpush1.msra.mxu0 0.0
  %2075 = vmatprep.subr.mxu0 0.0
  %2076 = vmatpush1.msra.mxu0 0.0
  %2077 = vmatprep.subr.mxu0 0.0
  %2078 = vmatpush1.msra.mxu0 0.0
  %2079 = vmatprep.subr.mxu0 0.0
  %2080 = vmatpush1.msra.mxu0 0.0
  %2081 = vmatprep.subr.mxu0 0.0
  %2082 = vmatpush1.msra.mxu0 0.0
  %2083 = vmatprep.subr.mxu0 0.0
  %2084 = vmatpush1.msra.mxu0 0.0
  %2085 = vmatprep.subr.mxu0 0.0
  %2086 = vmatpush1.msra.mxu0 0.0
  %2087 = vmatprep.subr.mxu0 0.0
  %2088 = vmatpush1.msra.mxu0 0.0
  %2089 = vmatprep.subr.mxu0 0.0
  %2090 = vmatpush1.msra.mxu0 0.0
  %2091 = vmatprep.subr.mxu0 0.0
  %2092 = vmatpush1.msra.mxu0 0.0
  %2093 = vmatprep.subr.mxu0 0.0
  %2094 = vmatpush1.msra.mxu0 0.0
  %2095 = vmatprep.subr.mxu0 0.0
  %2096 = vmatpush1.msra.mxu0 0.0
  %2097 = vmatprep.subr.mxu0 0.0
  %2098 = vmatpush1.msra.mxu0 0.0
  %2099 = vmatprep.subr.mxu0 0.0
  %2100 = vmatpush1.msra.mxu0 0.0
  %2101 = vmatprep.subr.mxu0 0.0
  %2102 = vmatpush1.msra.mxu0 0.0
  %2103 = vmatprep.subr.mxu0 0.0
  %2104 = vmatpush1.msra.mxu0 0.0
  %2105 = vmatprep.subr.mxu0 0.0
  %2106 = vmatpush1.msra.mxu0 0.0
  %2107 = vmatprep.subr.mxu0 0.0
  %2108 = vmatpush1.msra.mxu0 0.0
  %2109 = vmatprep.subr.mxu0 0.0
  %2110 = vmatpush1.msra.mxu0 0.0
  %2111 = vmatprep.subr.mxu0 0.0
  %2112 = vmatpush1.msra.mxu0 0.0
  %2113 = vmatprep.subr.mxu0 0.0
  %2114 = vmatpush1.msra.mxu0 0.0
  %2115 = vmatprep.subr.mxu0 0.0
  %2116 = vmatpush1.msra.mxu0 0.0
  %2117 = vmatprep.mubr.f32.mxu0 0.0
  %2118 = vmatmul.mubr.f32.gmra.mrb[0].mxu0 %v2051
  %v2119 = vpop.f32.mrb[0].mxu0
  %v2120 = vadd.f32 %v2047, %v2119
  %v2121 = vpop.f32.mrb[0].mxu0
  %2122 = vdwg.mxu0
  %2123 = vmatprep.subr.mxu0 0.0
  %2124 = vmatpush1.msra.mxu0 %v1966
  %2125 = vmatprep.subr.mxu0 0.0
  %2126 = vmatpush1.msra.mxu0 %v1967
  %2127 = vmatprep.subr.mxu0 0.0
  %2128 = vmatpush1.msra.mxu0 %v1968
  %2129 = vmatprep.subr.mxu0 0.0
  %2130 = vmatpush1.msra.mxu0 %v1969
  %2131 = vmatprep.subr.mxu0 0.0
  %2132 = vmatpush1.msra.mxu0 0.0
  %2133 = vmatprep.subr.mxu0 0.0
  %2134 = vmatpush1.msra.mxu0 0.0
  %2135 = vmatprep.subr.mxu0 0.0
  %2136 = vmatpush1.msra.mxu0 0.0
  %2137 = vmatprep.subr.mxu0 0.0
  %2138 = vmatpush1.msra.mxu0 0.0
  %2139 = vmatprep.subr.mxu0 0.0
  %2140 = vmatpush1.msra.mxu0 0.0
  %2141 = vmatprep.subr.mxu0 0.0
  %2142 = vmatpush1.msra.mxu0 0.0
  %2143 = vmatprep.subr.mxu0 0.0
  %2144 = vmatpush1.msra.mxu0 0.0
  %2145 = vmatprep.subr.mxu0 0.0
  %2146 = vmatpush1.msra.mxu0 0.0
  %2147 = vmatprep.subr.mxu0 0.0
  %2148 = vmatpush1.msra.mxu0 0.0
  %2149 = vmatprep.subr.mxu0 0.0
  %2150 = vmatpush1.msra.mxu0 0.0
  %2151 = vmatprep.subr.mxu0 0.0
  %2152 = vmatpush1.msra.mxu0 0.0
  %2153 = vmatprep.subr.mxu0 0.0
  %2154 = vmatpush1.msra.mxu0 0.0
  %2155 = vmatprep.subr.mxu0 0.0
  %2156 = vmatpush1.msra.mxu0 0.0
  %2157 = vmatprep.subr.mxu0 0.0
  %2158 = vmatpush1.msra.mxu0 0.0
  %2159 = vmatprep.subr.mxu0 0.0
  %2160 = vmatpush1.msra.mxu0 0.0
  %2161 = vmatprep.subr.mxu0 0.0
  %2162 = vmatpush1.msra.mxu0 0.0
  %2163 = vmatprep.subr.mxu0 0.0
  %2164 = vmatpush1.msra.mxu0 0.0
  %2165 = vmatprep.subr.mxu0 0.0
  %2166 = vmatpush1.msra.mxu0 0.0
  %2167 = vmatprep.subr.mxu0 0.0
  %2168 = vmatpush1.msra.mxu0 0.0
  %2169 = vmatprep.subr.mxu0 0.0
  %2170 = vmatpush1.msra.mxu0 0.0
  %2171 = vmatprep.subr.mxu0 0.0
  %2172 = vmatpush1.msra.mxu0 0.0
  %2173 = vmatprep.subr.mxu0 0.0
  %2174 = vmatpush1.msra.mxu0 0.0
  %2175 = vmatprep.subr.mxu0 0.0
  %2176 = vmatpush1.msra.mxu0 0.0
  %2177 = vmatprep.subr.mxu0 0.0
  %2178 = vmatpush1.msra.mxu0 0.0
  %2179 = vmatprep.subr.mxu0 0.0
  %2180 = vmatpush1.msra.mxu0 0.0
  %2181 = vmatprep.subr.mxu0 0.0
  %2182 = vmatpush1.msra.mxu0 0.0
  %2183 = vmatprep.subr.mxu0 0.0
  %2184 = vmatpush1.msra.mxu0 0.0
  %2185 = vmatprep.subr.mxu0 0.0
  %2186 = vmatpush1.msra.mxu0 0.0
  %2187 = vmatprep.mubr.f32.mxu0 0.0
  %2188 = vmatmul.mubr.f32.gmra.mrb[0].mxu0 %v1520
  %v2189 = vpop.f32.mrb[0].mxu0
  %v2190 = vadd.f32 0.0, %v2189
  %v2191 = vpop.f32.mrb[0].mxu0
  %2192 = vdwg.mxu0
  %v2194 = vsel %vm2049, %v2190, 0
  %2196 = vmatprep.subr.mxu0 0.0
  %2197 = vmatpush1.msra.mxu0 %v2040
  %2198 = vmatprep.subr.mxu0 0.0
  %2199 = vmatpush1.msra.mxu0 %v2041
  %2200 = vmatprep.subr.mxu0 0.0
  %2201 = vmatpush1.msra.mxu0 0.0
  %2202 = vmatprep.subr.mxu0 0.0
  %2203 = vmatpush1.msra.mxu0 0.0
  %2204 = vmatprep.subr.mxu0 0.0
  %2205 = vmatpush1.msra.mxu0 0.0
  %2206 = vmatprep.subr.mxu0 0.0
  %2207 = vmatpush1.msra.mxu0 0.0
  %2208 = vmatprep.subr.mxu0 0.0
  %2209 = vmatpush1.msra.mxu0 0.0
  %2210 = vmatprep.subr.mxu0 0.0
  %2211 = vmatpush1.msra.mxu0 0.0
  %2212 = vmatprep.subr.mxu0 0.0
  %2213 = vmatpush1.msra.mxu0 0.0
  %2214 = vmatprep.subr.mxu0 0.0
  %2215 = vmatpush1.msra.mxu0 0.0
  %2216 = vmatprep.subr.mxu0 0.0
  %2217 = vmatpush1.msra.mxu0 0.0
  %2218 = vmatprep.subr.mxu0 0.0
  %2219 = vmatpush1.msra.mxu0 0.0
  %2220 = vmatprep.subr.mxu0 0.0
  %2221 = vmatpush1.msra.mxu0 0.0
  %2222 = vmatprep.subr.mxu0 0.0
  %2223 = vmatpush1.msra.mxu0 0.0
  %2224 = vmatprep.subr.mxu0 0.0
  %2225 = vmatpush1.msra.mxu0 0.0
  %2226 = vmatprep.subr.mxu0 0.0
  %2227 = vmatpush1.msra.mxu0 0.0
  %2228 = vmatprep.subr.mxu0 0.0
  %2229 = vmatpush1.msra.mxu0 0.0
  %2230 = vmatprep.subr.mxu0 0.0
  %2231 = vmatpush1.msra.mxu0 0.0
  %2232 = vmatprep.subr.mxu0 0.0
  %2233 = vmatpush1.msra.mxu0 0.0
  %2234 = vmatprep.subr.mxu0 0.0
  %2235 = vmatpush1.msra.mxu0 0.0
  %2236 = vmatprep.subr.mxu0 0.0
  %2237 = vmatpush1.msra.mxu0 0.0
  %2238 = vmatprep.subr.mxu0 0.0
  %2239 = vmatpush1.msra.mxu0 0.0
  %2240 = vmatprep.subr.mxu0 0.0
  %2241 = vmatpush1.msra.mxu0 0.0
  %2242 = vmatprep.subr.mxu0 0.0
  %2243 = vmatpush1.msra.mxu0 0.0
  %2244 = vmatprep.subr.mxu0 0.0
  %2245 = vmatpush1.msra.mxu0 0.0
  %2246 = vmatprep.subr.mxu0 0.0
  %2247 = vmatpush1.msra.mxu0 0.0
  %2248 = vmatprep.subr.mxu0 0.0
  %2249 = vmatpush1.msra.mxu0 0.0
  %2250 = vmatprep.subr.mxu0 0.0
  %2251 = vmatpush1.msra.mxu0 0.0
  %2252 = vmatprep.subr.mxu0 0.0
  %2253 = vmatpush1.msra.mxu0 0.0
  %2254 = vmatprep.subr.mxu0 0.0
  %2255 = vmatpush1.msra.mxu0 0.0
  %2256 = vmatprep.subr.mxu0 0.0
  %2257 = vmatpush1.msra.mxu0 0.0
  %2258 = vmatprep.subr.mxu0 0.0
  %2259 = vmatpush1.msra.mxu0 0.0
  %2260 = vmatprep.mubr.f32.mxu0 0.0
  %2261 = vmatmul.mubr.f32.gmra.mrb[0].mxu0 %v2194
  %v2262 = vpop.f32.mrb[0].mxu0
  %v2263 = vadd.f32 %v2047, %v2262
  %v2264 = vpop.f32.mrb[0].mxu0
  %2265 = vdwg.mxu0
  %v2266 = vmul.f32 %v1513, %v1820
  %vm2267 = vcmask 254976
  %v2268 = vsel %vm2267, %v2266, 0.0
  %2269 = vadd.xlane.f32.xlu0 %v2268
  %v2270 = vpop.xlane.xlu0 %2269
  %v2271 = vmul.f32 %v2270, 0.17677669
  %v2272 = vmul.f32 %v1513, %v1963
  %v2273 = vsel %vm2267, %v2272, 0.0
  %2274 = vadd.xlane.f32.xlu0 %v2273
  %v2275 = vpop.xlane.xlu0 %2274
  %v2276 = vmul.f32 %v2275, 0.17677669
  %v2277 = vmul.f32 %v1662, %v1820
  %v2278 = vsel %vm2267, %v2277, 0.0
  %2279 = vadd.xlane.f32.xlu0 %v2278
  %v2280 = vpop.xlane.xlu0 %2279
  %v2281 = vmul.f32 %v2280, 0.17677669
  %v2282 = vmul.f32 %v1662, %v1963
  %v2283 = vsel %vm2267, %v2282, 0.0
  %2284 = vadd.xlane.f32.xlu0 %v2283
  %v2285 = vpop.xlane.xlu0 %2284
  %v2286 = vmul.f32 %v2285, 0.17677669
  %v2287 = vmax.f32 %v2271, %v2276
  %v2288 = vsub.f32 %v2271, %v2287
  %v2289 = vmul.f32 %v2288, 1.442695
  %v2290 = vpow.pop %v2289
  %v2291 = vsub.f32 %v2276, %v2287
  %v2292 = vmul.f32 %v2291, 1.442695
  %v2293 = vpow.pop %v2292
  %v2294 = vadd.f32 %v2290, %v2293
  %v2295 = vrcp.pop %v2294
  %v2296 = vmul.f32 1.0, %v2295
  %v2297 = vmul.f32 %v2290, %v2296
  %v2298 = vmul.f32 %v2293, %v2296
  %v2299 = vmax.f32 %v2281, %v2286
  %v2300 = vsub.f32 %v2281, %v2299
  %v2301 = vmul.f32 %v2300, 1.442695
  %v2302 = vpow.pop %v2301
  %v2303 = vsub.f32 %v2286, %v2299
  %v2304 = vmul.f32 %v2303, 1.442695
  %v2305 = vpow.pop %v2304
  %v2306 = vadd.f32 %v2302, %v2305
  %v2307 = vrcp.pop %v2306
  %v2308 = vmul.f32 1.0, %v2307
  %v2309 = vmul.f32 %v2302, %v2308
  %v2310 = vmul.f32 %v2305, %v2308
  %v2311 = vmul.f32 %v2297, %v2120
  %v2312 = vmul.f32 %v2298, %v2263
  %v2313 = vadd.f32 %v2311, %v2312
  %v2314 = vld [vmem:[%s17] sm:$0xff]
  %v2315 = vld [vmem:[%s17 + $0x8] sm:$0xff]
  %v2316 = vld [vmem:[%s18] sm:$0x1]
  %v2318 = vlaneseq
  %v2319 = vshrl.u32 %v2318, 7
  %v2320 = vsub.s32 0, %v2319
  %v2321 = vrot.slane %v2316, %v2320
  %v2324 = vsel %vm2049, %v2313, 0
  %2326 = vmatprep.subr.mxu0 0.0
  %2327 = vmatpush1.msra.mxu0 %v2314
  %2328 = vmatprep.subr.mxu0 0.0
  %2329 = vmatpush1.msra.mxu0 %v2315
  %2330 = vmatprep.subr.mxu0 0.0
  %2331 = vmatpush1.msra.mxu0 0.0
  %2332 = vmatprep.subr.mxu0 0.0
  %2333 = vmatpush1.msra.mxu0 0.0
  %2334 = vmatprep.subr.mxu0 0.0
  %2335 = vmatpush1.msra.mxu0 0.0
  %2336 = vmatprep.subr.mxu0 0.0
  %2337 = vmatpush1.msra.mxu0 0.0
  %2338 = vmatprep.subr.mxu0 0.0
  %2339 = vmatpush1.msra.mxu0 0.0
  %2340 = vmatprep.subr.mxu0 0.0
  %2341 = vmatpush1.msra.mxu0 0.0
  %2342 = vmatprep.subr.mxu0 0.0
  %2343 = vmatpush1.msra.mxu0 0.0
  %2344 = vmatprep.subr.mxu0 0.0
  %2345 = vmatpush1.msra.mxu0 0.0
  %2346 = vmatprep.subr.mxu0 0.0
  %2347 = vmatpush1.msra.mxu0 0.0
  %2348 = vmatprep.subr.mxu0 0.0
  %2349 = vmatpush1.msra.mxu0 0.0
  %2350 = vmatprep.subr.mxu0 0.0
  %2351 = vmatpush1.msra.mxu0 0.0
  %2352 = vmatprep.subr.mxu0 0.0
  %2353 = vmatpush1.msra.mxu0 0.0
  %2354 = vmatprep.subr.mxu0 0.0
  %2355 = vmatpush1.msra.mxu0 0.0
  %2356 = vmatprep.subr.mxu0 0.0
  %2357 = vmatpush1.msra.mxu0 0.0
  %2358 = vmatprep.subr.mxu0 0.0
  %2359 = vmatpush1.msra.mxu0 0.0
  %2360 = vmatprep.subr.mxu0 0.0
  %2361 = vmatpush1.msra.mxu0 0.0
  %2362 = vmatprep.subr.mxu0 0.0
  %2363 = vmatpush1.msra.mxu0 0.0
  %2364 = vmatprep.subr.mxu0 0.0
  %2365 = vmatpush1.msra.mxu0 0.0
  %2366 = vmatprep.subr.mxu0 0.0
  %2367 = vmatpush1.msra.mxu0 0.0
  %2368 = vmatprep.subr.mxu0 0.0
  %2369 = vmatpush1.msra.mxu0 0.0
  %2370 = vmatprep.subr.mxu0 0.0
  %2371 = vmatpush1.msra.mxu0 0.0
  %2372 = vmatprep.subr.mxu0 0.0
  %2373 = vmatpush1.msra.mxu0 0.0
  %2374 = vmatprep.subr.mxu0 0.0
  %2375 = vmatpush1.msra.mxu0 0.0
  %2376 = vmatprep.subr.mxu0 0.0
  %2377 = vmatpush1.msra.mxu0 0.0
  %2378 = vmatprep.subr.mxu0 0.0
  %2379 = vmatpush1.msra.mxu0 0.0
  %2380 = vmatprep.subr.mxu0 0.0
  %2381 = vmatpush1.msra.mxu0 0.0
  %2382 = vmatprep.subr.mxu0 0.0
  %2383 = vmatpush1.msra.mxu0 0.0
  %2384 = vmatprep.subr.mxu0 0.0
  %2385 = vmatpush1.msra.mxu0 0.0
  %2386 = vmatprep.subr.mxu0 0.0
  %2387 = vmatpush1.msra.mxu0 0.0
  %2388 = vmatprep.subr.mxu0 0.0
  %2389 = vmatpush1.msra.mxu0 0.0
  %2390 = vmatprep.mubr.f32.mxu0 0.0
  %2391 = vmatmul.mubr.f32.gmra.mrb[0].mxu0 %v2324
  %v2392 = vpop.f32.mrb[0].mxu0
  %v2393 = vadd.f32 %v2321, %v2392
  %v2394 = vpop.f32.mrb[0].mxu0
  %2395 = vdwg.mxu0
  %v2396 = vmul.f32 %v2309, %v2120
  %v2397 = vmul.f32 %v2310, %v2263
  %v2398 = vadd.f32 %v2396, %v2397
  %v2400 = vsel %vm2049, %v2398, 0
  %2402 = vmatprep.subr.mxu0 0.0
  %2403 = vmatpush1.msra.mxu0 %v2314
  %2404 = vmatprep.subr.mxu0 0.0
  %2405 = vmatpush1.msra.mxu0 %v2315
  %2406 = vmatprep.subr.mxu0 0.0
  %2407 = vmatpush1.msra.mxu0 0.0
  %2408 = vmatprep.subr.mxu0 0.0
  %2409 = vmatpush1.msra.mxu0 0.0
  %2410 = vmatprep.subr.mxu0 0.0
  %2411 = vmatpush1.msra.mxu0 0.0
  %2412 = vmatprep.subr.mxu0 0.0
  %2413 = vmatpush1.msra.mxu0 0.0
  %2414 = vmatprep.subr.mxu0 0.0
  %2415 = vmatpush1.msra.mxu0 0.0
  %2416 = vmatprep.subr.mxu0 0.0
  %2417 = vmatpush1.msra.mxu0 0.0
  %2418 = vmatprep.subr.mxu0 0.0
  %2419 = vmatpush1.msra.mxu0 0.0
  %2420 = vmatprep.subr.mxu0 0.0
  %2421 = vmatpush1.msra.mxu0 0.0
  %2422 = vmatprep.subr.mxu0 0.0
  %2423 = vmatpush1.msra.mxu0 0.0
  %2424 = vmatprep.subr.mxu0 0.0
  %2425 = vmatpush1.msra.mxu0 0.0
  %2426 = vmatprep.subr.mxu0 0.0
  %2427 = vmatpush1.msra.mxu0 0.0
  %2428 = vmatprep.subr.mxu0 0.0
  %2429 = vmatpush1.msra.mxu0 0.0
  %2430 = vmatprep.subr.mxu0 0.0
  %2431 = vmatpush1.msra.mxu0 0.0
  %2432 = vmatprep.subr.mxu0 0.0
  %2433 = vmatpush1.msra.mxu0 0.0
  %2434 = vmatprep.subr.mxu0 0.0
  %2435 = vmatpush1.msra.mxu0 0.0
  %2436 = vmatprep.subr.mxu0 0.0
  %2437 = vmatpush1.msra.mxu0 0.0
  %2438 = vmatprep.subr.mxu0 0.0
  %2439 = vmatpush1.msra.mxu0 0.0
  %2440 = vmatprep.subr.mxu0 0.0
  %2441 = vmatpush1.msra.mxu0 0.0
  %2442 = vmatprep.subr.mxu0 0.0
  %2443 = vmatpush1.msra.mxu0 0.0
  %2444 = vmatprep.subr.mxu0 0.0
  %2445 = vmatpush1.msra.mxu0 0.0
  %2446 = vmatprep.subr.mxu0 0.0
  %2447 = vmatpush1.msra.mxu0 0.0
  %2448 = vmatprep.subr.mxu0 0.0
  %2449 = vmatpush1.msra.mxu0 0.0
  %2450 = vmatprep.subr.mxu0 0.0
  %2451 = vmatpush1.msra.mxu0 0.0
  %2452 = vmatprep.subr.mxu0 0.0
  %2453 = vmatpush1.msra.mxu0 0.0
  %2454 = vmatprep.subr.mxu0 0.0
  %2455 = vmatpush1.msra.mxu0 0.0
  %2456 = vmatprep.subr.mxu0 0.0
  %2457 = vmatpush1.msra.mxu0 0.0
  %2458 = vmatprep.subr.mxu0 0.0
  %2459 = vmatpush1.msra.mxu0 0.0
  %2460 = vmatprep.subr.mxu0 0.0
  %2461 = vmatpush1.msra.mxu0 0.0
  %2462 = vmatprep.subr.mxu0 0.0
  %2463 = vmatpush1.msra.mxu0 0.0
  %2464 = vmatprep.subr.mxu0 0.0
  %2465 = vmatpush1.msra.mxu0 0.0
  %2466 = vmatprep.mubr.f32.mxu0 0.0
  %2467 = vmatmul.mubr.f32.gmra.mrb[0].mxu0 %v2400
  %v2468 = vpop.f32.mrb[0].mxu0
  %v2469 = vadd.f32 %v2321, %v2468
  %v2470 = vpop.f32.mrb[0].mxu0
  %2471 = vdwg.mxu0
  %2473 = vrot.lane.b32.xlu0 %v2469, 32
  %v2474 = vpop.permute.xlu0 %2473
  %v2476 = vsel %vm512, %v2393, %v2474
  %v2477 = vld [vmem:[%s19] sm:$0xff]
  %v2478 = vld [vmem:[%s19 + $0x8] sm:$0xff]
  %v2479 = vld [vmem:[%s19 + $0x10] sm:$0xff]
  %v2480 = vld [vmem:[%s19 + $0x18] sm:$0xff]
  %v2481 = vld [vmem:[%s19 + $0x20] sm:$0xff]
  %v2482 = vld [vmem:[%s19 + $0x28] sm:$0xff]
  %v2483 = vld [vmem:[%s19 + $0x30] sm:$0xff]
  %v2484 = vld [vmem:[%s19 + $0x38] sm:$0xff]
  %v2486 = vsel %vm199, %v2476, 0
  %2488 = vmatprep.subr.mxu0 0.0
  %2489 = vmatpush1.msra.mxu0 %v2477
  %2490 = vmatprep.subr.mxu0 0.0
  %2491 = vmatpush1.msra.mxu0 %v2478
  %2492 = vmatprep.subr.mxu0 0.0
  %2493 = vmatpush1.msra.mxu0 %v2479
  %2494 = vmatprep.subr.mxu0 0.0
  %2495 = vmatpush1.msra.mxu0 %v2480
  %2496 = vmatprep.subr.mxu0 0.0
  %2497 = vmatpush1.msra.mxu0 %v2481
  %2498 = vmatprep.subr.mxu0 0.0
  %2499 = vmatpush1.msra.mxu0 %v2482
  %2500 = vmatprep.subr.mxu0 0.0
  %2501 = vmatpush1.msra.mxu0 %v2483
  %2502 = vmatprep.subr.mxu0 0.0
  %2503 = vmatpush1.msra.mxu0 %v2484
  %2504 = vmatprep.subr.mxu0 0.0
  %2505 = vmatpush1.msra.mxu0 0.0
  %2506 = vmatprep.subr.mxu0 0.0
  %2507 = vmatpush1.msra.mxu0 0.0
  %2508 = vmatprep.subr.mxu0 0.0
  %2509 = vmatpush1.msra.mxu0 0.0
  %2510 = vmatprep.subr.mxu0 0.0
  %2511 = vmatpush1.msra.mxu0 0.0
  %2512 = vmatprep.subr.mxu0 0.0
  %2513 = vmatpush1.msra.mxu0 0.0
  %2514 = vmatprep.subr.mxu0 0.0
  %2515 = vmatpush1.msra.mxu0 0.0
  %2516 = vmatprep.subr.mxu0 0.0
  %2517 = vmatpush1.msra.mxu0 0.0
  %2518 = vmatprep.subr.mxu0 0.0
  %2519 = vmatpush1.msra.mxu0 0.0
  %2520 = vmatprep.subr.mxu0 0.0
  %2521 = vmatpush1.msra.mxu0 0.0
  %2522 = vmatprep.subr.mxu0 0.0
  %2523 = vmatpush1.msra.mxu0 0.0
  %2524 = vmatprep.subr.mxu0 0.0
  %2525 = vmatpush1.msra.mxu0 0.0
  %2526 = vmatprep.subr.mxu0 0.0
  %2527 = vmatpush1.msra.mxu0 0.0
  %2528 = vmatprep.subr.mxu0 0.0
  %2529 = vmatpush1.msra.mxu0 0.0
  %2530 = vmatprep.subr.mxu0 0.0
  %2531 = vmatpush1.msra.mxu0 0.0
  %2532 = vmatprep.subr.mxu0 0.0
  %2533 = vmatpush1.msra.mxu0 0.0
  %2534 = vmatprep.subr.mxu0 0.0
  %2535 = vmatpush1.msra.mxu0 0.0
  %2536 = vmatprep.subr.mxu0 0.0
  %2537 = vmatpush1.msra.mxu0 0.0
  %2538 = vmatprep.subr.mxu0 0.0
  %2539 = vmatpush1.msra.mxu0 0.0
  %2540 = vmatprep.subr.mxu0 0.0
  %2541 = vmatpush1.msra.mxu0 0.0
  %2542 = vmatprep.subr.mxu0 0.0
  %2543 = vmatpush1.msra.mxu0 0.0
  %2544 = vmatprep.subr.mxu0 0.0
  %2545 = vmatpush1.msra.mxu0 0.0
  %2546 = vmatprep.subr.mxu0 0.0
  %2547 = vmatpush1.msra.mxu0 0.0
  %2548 = vmatprep.subr.mxu0 0.0
  %2549 = vmatpush1.msra.mxu0 0.0
  %2550 = vmatprep.subr.mxu0 0.0
  %2551 = vmatpush1.msra.mxu0 0.0
  %2552 = vmatprep.mubr.f32.mxu0 0.0
  %2553 = vmatmul.mubr.f32.gmra.mrb[0].mxu0 %v2486
  %v2554 = vpop.f32.mrb[0].mxu0
  %v2555 = vadd.f32 0.0, %v2554
  %v2556 = vpop.f32.mrb[0].mxu0
  %2557 = vdwg.mxu0
  %v2558 = vld [vmem:[%s2] sm:$0x3]
  %v2559 = vld [vmem:[%s20] sm:$0x1]
  %v2561 = vlaneseq
  %v2562 = vshrl.u32 %v2561, 7
  %v2563 = vsub.s32 0, %v2562
  %v2564 = vrot.slane %v2559, %v2563
  %vm2566 = vcmask 15360
  %v2568 = vsel %vm2566, %v2558, 0
  %vm2570 = vcmask 1041408
  %v2572 = vsel %vm2570, %v2555, 0
  %2574 = vmatprep.subr.mxu0 0.0
  %2575 = vmatpush1.msra.mxu0 %v2572
  %2576 = vmatprep.subr.mxu0 0.0
  %2577 = vmatpush1.msra.mxu0 0.0
  %2578 = vmatprep.subr.mxu0 0.0
  %2579 = vmatpush1.msra.mxu0 0.0
  %2580 = vmatprep.subr.mxu0 0.0
  %2581 = vmatpush1.msra.mxu0 0.0
  %2582 = vmatprep.subr.mxu0 0.0
  %2583 = vmatpush1.msra.mxu0 0.0
  %2584 = vmatprep.subr.mxu0 0.0
  %2585 = vmatpush1.msra.mxu0 0.0
  %2586 = vmatprep.subr.mxu0 0.0
  %2587 = vmatpush1.msra.mxu0 0.0
  %2588 = vmatprep.subr.mxu0 0.0
  %2589 = vmatpush1.msra.mxu0 0.0
  %2590 = vmatprep.subr.mxu0 0.0
  %2591 = vmatpush1.msra.mxu0 0.0
  %2592 = vmatprep.subr.mxu0 0.0
  %2593 = vmatpush1.msra.mxu0 0.0
  %2594 = vmatprep.subr.mxu0 0.0
  %2595 = vmatpush1.msra.mxu0 0.0
  %2596 = vmatprep.subr.mxu0 0.0
  %2597 = vmatpush1.msra.mxu0 0.0
  %2598 = vmatprep.subr.mxu0 0.0
  %2599 = vmatpush1.msra.mxu0 0.0
  %2600 = vmatprep.subr.mxu0 0.0
  %2601 = vmatpush1.msra.mxu0 0.0
  %2602 = vmatprep.subr.mxu0 0.0
  %2603 = vmatpush1.msra.mxu0 0.0
  %2604 = vmatprep.subr.mxu0 0.0
  %2605 = vmatpush1.msra.mxu0 0.0
  %2606 = vmatprep.subr.mxu0 0.0
  %2607 = vmatpush1.msra.mxu0 0.0
  %2608 = vmatprep.subr.mxu0 0.0
  %2609 = vmatpush1.msra.mxu0 0.0
  %2610 = vmatprep.subr.mxu0 0.0
  %2611 = vmatpush1.msra.mxu0 0.0
  %2612 = vmatprep.subr.mxu0 0.0
  %2613 = vmatpush1.msra.mxu0 0.0
  %2614 = vmatprep.subr.mxu0 0.0
  %2615 = vmatpush1.msra.mxu0 0.0
  %2616 = vmatprep.subr.mxu0 0.0
  %2617 = vmatpush1.msra.mxu0 0.0
  %2618 = vmatprep.subr.mxu0 0.0
  %2619 = vmatpush1.msra.mxu0 0.0
  %2620 = vmatprep.subr.mxu0 0.0
  %2621 = vmatpush1.msra.mxu0 0.0
  %2622 = vmatprep.subr.mxu0 0.0
  %2623 = vmatpush1.msra.mxu0 0.0
  %2624 = vmatprep.subr.mxu0 0.0
  %2625 = vmatpush1.msra.mxu0 0.0
  %2626 = vmatprep.subr.mxu0 0.0
  %2627 = vmatpush1.msra.mxu0 0.0
  %2628 = vmatprep.subr.mxu0 0.0
  %2629 = vmatpush1.msra.mxu0 0.0
  %2630 = vmatprep.subr.mxu0 0.0
  %2631 = vmatpush1.msra.mxu0 0.0
  %2632 = vmatprep.subr.mxu0 0.0
  %2633 = vmatpush1.msra.mxu0 0.0
  %2634 = vmatprep.subr.mxu0 0.0
  %2635 = vmatpush1.msra.mxu0 0.0
  %2636 = vmatprep.subr.mxu0 0.0
  %2637 = vmatpush1.msra.mxu0 0.0
  %2638 = vmatprep.mubr.f32.mxu0 0.0
  %2639 = vmatmul.mubr.f32.gmra.mrb[0].mxu0 %v2568
  %v2640 = vpop.f32.mrb[0].mxu0
  %v2641 = vadd.f32 %v2564, %v2640
  %v2642 = vpop.f32.mrb[0].mxu0
  %2643 = vdwg.mxu0
  %v2644 = vld [vmem:[%s21] sm:$0xff]
  %v2645 = vld [vmem:[%s21 + $0x8] sm:$0xff]
  %v2646 = vld [vmem:[%s21 + $0x10] sm:$0xff]
  %v2647 = vld [vmem:[%s21 + $0x18] sm:$0xff]
  %v2648 = vld [vmem:[%s21 + $0x20] sm:$0xff]
  %v2649 = vld [vmem:[%s21 + $0x28] sm:$0xff]
  %v2650 = vld [vmem:[%s21 + $0x30] sm:$0xff]
  %v2651 = vld [vmem:[%s21 + $0x38] sm:$0xff]
  %v2652 = vld [vmem:[%s21 + $0x40] sm:$0xff]
  %v2653 = vld [vmem:[%s21 + $0x48] sm:$0xff]
  %v2654 = vld [vmem:[%s21 + $0x50] sm:$0xff]
  %v2655 = vld [vmem:[%s21 + $0x58] sm:$0xff]
  %v2656 = vld [vmem:[%s21 + $0x60] sm:$0xff]
  %v2657 = vld [vmem:[%s21 + $0x68] sm:$0xff]
  %v2658 = vld [vmem:[%s21 + $0x70] sm:$0xff]
  %v2659 = vld [vmem:[%s21 + $0x78] sm:$0xff]
  %v2660 = vld [vmem:[%s22] sm:$0x1]
  %v2662 = vlaneseq
  %v2663 = vshrl.u32 %v2662, 7
  %v2664 = vsub.s32 0, %v2663
  %v2665 = vrot.slane %v2660, %v2664
  %2667 = vmatprep.subr.mxu0 0.0
  %2668 = vmatpush1.msra.mxu0 %v2644
  %2669 = vmatprep.subr.mxu0 0.0
  %2670 = vmatpush1.msra.mxu0 %v2645
  %2671 = vmatprep.subr.mxu0 0.0
  %2672 = vmatpush1.msra.mxu0 %v2646
  %2673 = vmatprep.subr.mxu0 0.0
  %2674 = vmatpush1.msra.mxu0 %v2647
  %2675 = vmatprep.subr.mxu0 0.0
  %2676 = vmatpush1.msra.mxu0 %v2648
  %2677 = vmatprep.subr.mxu0 0.0
  %2678 = vmatpush1.msra.mxu0 %v2649
  %2679 = vmatprep.subr.mxu0 0.0
  %2680 = vmatpush1.msra.mxu0 %v2650
  %2681 = vmatprep.subr.mxu0 0.0
  %2682 = vmatpush1.msra.mxu0 %v2651
  %2683 = vmatprep.subr.mxu0 0.0
  %2684 = vmatpush1.msra.mxu0 %v2652
  %2685 = vmatprep.subr.mxu0 0.0
  %2686 = vmatpush1.msra.mxu0 %v2653
  %2687 = vmatprep.subr.mxu0 0.0
  %2688 = vmatpush1.msra.mxu0 %v2654
  %2689 = vmatprep.subr.mxu0 0.0
  %2690 = vmatpush1.msra.mxu0 %v2655
  %2691 = vmatprep.subr.mxu0 0.0
  %2692 = vmatpush1.msra.mxu0 %v2656
  %2693 = vmatprep.subr.mxu0 0.0
  %2694 = vmatpush1.msra.mxu0 %v2657
  %2695 = vmatprep.subr.mxu0 0.0
  %2696 = vmatpush1.msra.mxu0 %v2658
  %2697 = vmatprep.subr.mxu0 0.0
  %2698 = vmatpush1.msra.mxu0 %v2659
  %2699 = vmatprep.subr.mxu0 0.0
  %2700 = vmatpush1.msra.mxu0 0.0
  %2701 = vmatprep.subr.mxu0 0.0
  %2702 = vmatpush1.msra.mxu0 0.0
  %2703 = vmatprep.subr.mxu0 0.0
  %2704 = vmatpush1.msra.mxu0 0.0
  %2705 = vmatprep.subr.mxu0 0.0
  %2706 = vmatpush1.msra.mxu0 0.0
  %2707 = vmatprep.subr.mxu0 0.0
  %2708 = vmatpush1.msra.mxu0 0.0
  %2709 = vmatprep.subr.mxu0 0.0
  %2710 = vmatpush1.msra.mxu0 0.0
  %2711 = vmatprep.subr.mxu0 0.0
  %2712 = vmatpush1.msra.mxu0 0.0
  %2713 = vmatprep.subr.mxu0 0.0
  %2714 = vmatpush1.msra.mxu0 0.0
  %2715 = vmatprep.subr.mxu0 0.0
  %2716 = vmatpush1.msra.mxu0 0.0
  %2717 = vmatprep.subr.mxu0 0.0
  %2718 = vmatpush1.msra.mxu0 0.0
  %2719 = vmatprep.subr.mxu0 0.0
  %2720 = vmatpush1.msra.mxu0 0.0
  %2721 = vmatprep.subr.mxu0 0.0
  %2722 = vmatpush1.msra.mxu0 0.0
  %2723 = vmatprep.subr.mxu0 0.0
  %2724 = vmatpush1.msra.mxu0 0.0
  %2725 = vmatprep.subr.mxu0 0.0
  %2726 = vmatpush1.msra.mxu0 0.0
  %2727 = vmatprep.subr.mxu0 0.0
  %2728 = vmatpush1.msra.mxu0 0.0
  %2729 = vmatprep.subr.mxu0 0.0
  %2730 = vmatpush1.msra.mxu0 0.0
  %2731 = vmatprep.mubr.f32.mxu0 0.0
  %2732 = vmatmul.mubr.f32.gmra.mrb[0].mxu0 %v2641
  %v2733 = vpop.f32.mrb[0].mxu0
  %v2734 = vadd.f32 %v2665, %v2733
  %v2735 = vpop.f32.mrb[0].mxu0
  %2736 = vdwg.mxu0
  %v2737 = vmax.f32 %v2734, 0.0
  %v2738 = vld [vmem:[%s23] sm:$0xff]
  %v2739 = vld [vmem:[%s23 + $0x8] sm:$0xff]
  %v2740 = vld [vmem:[%s23 + $0x10] sm:$0xff]
  %v2741 = vld [vmem:[%s23 + $0x18] sm:$0xff]
  %v2742 = vld [vmem:[%s23 + $0x20] sm:$0xff]
  %v2743 = vld [vmem:[%s23 + $0x28] sm:$0xff]
  %v2744 = vld [vmem:[%s23 + $0x30] sm:$0xff]
  %v2745 = vld [vmem:[%s23 + $0x38] sm:$0xff]
  %v2746 = vld [vmem:[%s24] sm:$0x1]
  %v2748 = vlaneseq
  %v2749 = vshrl.u32 %v2748, 7
  %v2750 = vsub.s32 0, %v2749
  %v2751 = vrot.slane %v2746, %v2750
  %v2754 = vsel %vm199, %v2737, 0
  %2756 = vmatprep.subr.mxu0 0.0
  %2757 = vmatpush1.msra.mxu0 %v2738
  %2758 = vmatprep.subr.mxu0 0.0
  %2759 = vmatpush1.msra.mxu0 %v2739
  %2760 = vmatprep.subr.mxu0 0.0
  %2761 = vmatpush1.msra.mxu0 %v2740
  %2762 = vmatprep.subr.mxu0 0.0
  %2763 = vmatpush1.msra.mxu0 %v2741
  %2764 = vmatprep.subr.mxu0 0.0
  %2765 = vmatpush1.msra.mxu0 %v2742
  %2766 = vmatprep.subr.mxu0 0.0
  %2767 = vmatpush1.msra.mxu0 %v2743
  %2768 = vmatprep.subr.mxu0 0.0
  %2769 = vmatpush1.msra.mxu0 %v2744
  %2770 = vmatprep.subr.mxu0 0.0
  %2771 = vmatpush1.msra.mxu0 %v2745
  %2772 = vmatprep.subr.mxu0 0.0
  %2773 = vmatpush1.msra.mxu0 0.0
  %2774 = vmatprep.subr.mxu0 0.0
  %2775 = vmatpush1.msra.mxu0 0.0
  %2776 = vmatprep.subr.mxu0 0.0
  %2777 = vmatpush1.msra.mxu0 0.0
  %2778 = vmatprep.subr.mxu0 0.0
  %2779 = vmatpush1.msra.mxu0 0.0
  %2780 = vmatprep.subr.mxu0 0.0
  %2781 = vmatpush1.msra.mxu0 0.0
  %2782 = vmatprep.subr.mxu0 0.0
  %2783 = vmatpush1.msra.mxu0 0.0
  %2784 = vmatprep.subr.mxu0 0.0
  %2785 = vmatpush1.msra.mxu0 0.0
  %2786 = vmatprep.subr.mxu0 0.0
  %2787 = vmatpush1.msra.mxu0 0.0
  %2788 = vmatprep.subr.mxu0 0.0
  %2789 = vmatpush1.msra.mxu0 0.0
  %2790 = vmatprep.subr.mxu0 0.0
  %2791 = vmatpush1.msra.mxu0 0.0
  %2792 = vmatprep.subr.mxu0 0.0
  %2793 = vmatpush1.msra.mxu0 0.0
  %2794 = vmatprep.subr.mxu0 0.0
  %2795 = vmatpush1.msra.mxu0 0.0
  %2796 = vmatprep.subr.mxu0 0.0
  %2797 = vmatpush1.msra.mxu0 0.0
  %2798 = vmatprep.subr.mxu0 0.0
  %2799 = vmatpush1.msra.mxu0 0.0
  %2800 = vmatprep.subr.mxu0 0.0
  %2801 = vmatpush1.msra.mxu0 0.0
  %2802 = vmatprep.subr.mxu0 0.0
  %2803 = vmatpush1.msra.mxu0 0.0
  %2804 = vmatprep.subr.mxu0 0.0
  %2805 = vmatpush1.msra.mxu0 0.0
  %2806 = vmatprep.subr.mxu0 0.0
  %2807 = vmatpush1.msra.mxu0 0.0
  %2808 = vmatprep.subr.mxu0 0.0
  %2809 = vmatpush1.msra.mxu0 0.0
  %2810 = vmatprep.subr.mxu0 0.0
  %2811 = vmatpush1.msra.mxu0 0.0
  %2812 = vmatprep.subr.mxu0 0.0
  %2813 = vmatpush1.msra.mxu0 0.0
  %2814 = vmatprep.subr.mxu0 0.0
  %2815 = vmatpush1.msra.mxu0 0.0
  %2816 = vmatprep.subr.mxu0 0.0
  %2817 = vmatpush1.msra.mxu0 0.0
  %2818 = vmatprep.subr.mxu0 0.0
  %2819 = vmatpush1.msra.mxu0 0.0
  %2820 = vmatprep.mubr.f32.mxu0 0.0
  %2821 = vmatmul.mubr.f32.gmra.mrb[0].mxu0 %v2754
  %v2822 = vpop.f32.mrb[0].mxu0
  %v2823 = vadd.f32 %v2751, %v2822
  %v2824 = vpop.f32.mrb[0].mxu0
  %2825 = vdwg.mxu0
  %v2826 = vmax.f32 %v2823, 0.0
  %v2827 = vld [vmem:[%s25] sm:$0xff]
  %v2828 = vld [vmem:[%s25 + $0x8] sm:$0xff]
  %v2829 = vld [vmem:[%s25 + $0x10] sm:$0xff]
  %v2830 = vld [vmem:[%s25 + $0x18] sm:$0xff]
  %v2831 = vld [vmem:[#allocation2] sm:$0x1]
  %v2833 = vlaneseq
  %v2834 = vshrl.u32 %v2833, 7
  %v2835 = vsub.s32 0, %v2834
  %v2836 = vrot.slane %v2831, %v2835
  %v2839 = vsel %vm512, %v2826, 0
  %2841 = vmatprep.subr.mxu0 0.0
  %2842 = vmatpush1.msra.mxu0 %v2827
  %2843 = vmatprep.subr.mxu0 0.0
  %2844 = vmatpush1.msra.mxu0 %v2828
  %2845 = vmatprep.subr.mxu0 0.0
  %2846 = vmatpush1.msra.mxu0 %v2829
  %2847 = vmatprep.subr.mxu0 0.0
  %2848 = vmatpush1.msra.mxu0 %v2830
  %2849 = vmatprep.subr.mxu0 0.0
  %2850 = vmatpush1.msra.mxu0 0.0
  %2851 = vmatprep.subr.mxu0 0.0
  %2852 = vmatpush1.msra.mxu0 0.0
  %2853 = vmatprep.subr.mxu0 0.0
  %2854 = vmatpush1.msra.mxu0 0.0
  %2855 = vmatprep.subr.mxu0 0.0
  %2856 = vmatpush1.msra.mxu0 0.0
  %2857 = vmatprep.subr.mxu0 0.0
  %2858 = vmatpush1.msra.mxu0 0.0
  %2859 = vmatprep.subr.mxu0 0.0
  %2860 = vmatpush1.msra.mxu0 0.0
  %2861 = vmatprep.subr.mxu0 0.0
  %2862 = vmatpush1.msra.mxu0 0.0
  %2863 = vmatprep.subr.mxu0 0.0
  %2864 = vmatpush1.msra.mxu0 0.0
  %2865 = vmatprep.subr.mxu0 0.0
  %2866 = vmatpush1.msra.mxu0 0.0
  %2867 = vmatprep.subr.mxu0 0.0
  %2868 = vmatpush1.msra.mxu0 0.0
  %2869 = vmatprep.subr.mxu0 0.0
  %2870 = vmatpush1.msra.mxu0 0.0
  %2871 = vmatprep.subr.mxu0 0.0
  %2872 = vmatpush1.msra.mxu0 0.0
  %2873 = vmatprep.subr.mxu0 0.0
  %2874 = vmatpush1.msra.mxu0 0.0
  %2875 = vmatprep.subr.mxu0 0.0
  %2876 = vmatpush1.msra.mxu0 0.0
  %2877 = vmatprep.subr.mxu0 0.0
  %2878 = vmatpush1.msra.mxu0 0.0
  %2879 = vmatprep.subr.mxu0 0.0
  %2880 = vmatpush1.msra.mxu0 0.0
  %2881 = vmatprep.subr.mxu0 0.0
  %2882 = vmatpush1.msra.mxu0 0.0
  %2883 = vmatprep.subr.mxu0 0.0
  %2884 = vmatpush1.msra.mxu0 0.0
  %2885 = vmatprep.subr.mxu0 0.0
  %2886 = vmatpush1.msra.mxu0 0.0
  %2887 = vmatprep.subr.mxu0 0.0
  %2888 = vmatpush1.msra.mxu0 0.0
  %2889 = vmatprep.subr.mxu0 0.0
  %2890 = vmatpush1.msra.mxu0 0.0
  %2891 = vmatprep.subr.mxu0 0.0
  %2892 = vmatpush1.msra.mxu0 0.0
  %2893 = vmatprep.subr.mxu0 0.0
  %2894 = vmatpush1.msra.mxu0 0.0
  %2895 = vmatprep.subr.mxu0 0.0
  %2896 = vmatpush1.msra.mxu0 0.0
  %2897 = vmatprep.subr.mxu0 0.0
  %2898 = vmatpush1.msra.mxu0 0.0
  %2899 = vmatprep.subr.mxu0 0.0
  %2900 = vmatpush1.msra.mxu0 0.0
  %2901 = vmatprep.subr.mxu0 0.0
  %2902 = vmatpush1.msra.mxu0 0.0
  %2903 = vmatprep.subr.mxu0 0.0
  %2904 = vmatpush1.msra.mxu0 0.0
  %2905 = vmatprep.mubr.f32.mxu0 0.0
  %2906 = vmatmul.mubr.f32.gmra.mrb[0].mxu0 %v2839
  %v2907 = vpop.f32.mrb[0].mxu0
  %v2908 = vadd.f32 %v2836, %v2907
  %v2909 = vpop.f32.mrb[0].mxu0
  %2910 = vdwg.mxu0
  %v2911 = vmax.f32 %v2908, 0.0
  %vm2912 = vcmask 1024
  %2913 = vst.msk [vmem:[%s27] sm:$0x3] %vm2912, %v2911
  // Predicated region
  $region110: #{forward.7} parent=0 // pred_check
    _
  $region111: #{forward.7} parent=0 // pred_check_branch
    %2915 = sbr.rel (0) target = $region113
  $region112: #{forward.7} parent=0 // pred_region
    _
  $region113: #{forward.7} parent=0 // pred_fallthru
    _
  // Predicated region
  $region114: #{forward.7} parent=0 // pred_check
    _
  $region115: #{forward.7} parent=0 // pred_check_branch
    %2917 = sbr.rel (0) target = $region117
  $region116: #{forward.7} parent=0 // pred_region
    _
  $region117: #{forward.7} parent=0 // pred_fallthru
    _

</llo_original>
